<compile_context>
chip_gen: v7x
topology: tpu7x:2x2x1
jax: 0.10.0
libtpu: 0.0.40
codegen_flags: <defaults>
</compile_context>

<pallas_src>
import jax
import jax.numpy as jnp
from jax.experimental import pallas as pl
from jax.experimental.pallas import tpu as pltpu

_ROW_TILE = 8  # batch rows per grid step (sublane granularity)


# ----------------------------------------------------------------------------
# Weight-only preprocessing: dense operators for conv / conv-transpose
# ----------------------------------------------------------------------------
def _conv_dense_T(w, stride, padding, h, w_sp):
    """Dense operator D (C_in*H*W, C_out*OH*OW) with y_flat = x_flat @ D.

    w: (C_out, C_in, kh, kw)  (PyTorch Conv2d layout).  Features flattened in
    (C, H, W) row-major order on both sides.
    """
    c_out, c_in, kh, kw = w.shape
    oh = (h + 2 * padding - kh) // stride + 1
    ow = (w_sp + 2 * padding - kw) // stride + 1
    oy = jnp.arange(oh)[:, None, None]
    dy = jnp.arange(kh)[None, :, None]
    iy = jnp.arange(h)[None, None, :]
    py = (oy * stride - padding + dy == iy).astype(jnp.float32)   # (OH, kh, H)
    ox = jnp.arange(ow)[:, None, None]
    dx = jnp.arange(kw)[None, :, None]
    ix = jnp.arange(w_sp)[None, None, :]
    px = (ox * stride - padding + dx == ix).astype(jnp.float32)   # (OW, kw, W)
    # D[(ci,iy,ix),(co,oy,ox)] = sum_{dy,dx} w[co,ci,dy,dx]·[iy=oy*s-p+dy]·[ix=ox*s-p+dx]
    d = jnp.einsum("oiyx,pyq,rxs->iqsopr", w.astype(jnp.float32), py, px)
    return d.reshape(c_in * h * w_sp, c_out * oh * ow), (oh, ow)


def _convT_dense_T(w, stride, padding, h, w_sp):
    """Dense operator for ConvTranspose2d.  w: (C_in, C_out, kh, kw)."""
    c_in, c_out, kh, kw = w.shape
    oh = (h - 1) * stride - 2 * padding + kh
    ow = (w_sp - 1) * stride - 2 * padding + kw
    iy = jnp.arange(h)[:, None, None]
    dy = jnp.arange(kh)[None, :, None]
    oy = jnp.arange(oh)[None, None, :]
    py = (iy * stride - padding + dy == oy).astype(jnp.float32)   # (H, kh, OH)
    ix = jnp.arange(w_sp)[:, None, None]
    dx = jnp.arange(kw)[None, :, None]
    ox = jnp.arange(ow)[None, None, :]
    px = (ix * stride - padding + dx == ox).astype(jnp.float32)   # (W, kw, OW)
    d = jnp.einsum("ioyx,qyp,sxr->iqsopr", w.astype(jnp.float32), py, px)
    return d.reshape(c_in * h * w_sp, c_out * oh * ow), (oh, ow)


def _complex_block(dr, di, br, bi, ohw):
    """Fuse the 4 real matmuls of a complex conv into one block operator.

    [xr | xi] @ [[Dr, Di], [-Di, Dr]] = [xr·Dr - xi·Di | xr·Di + xi·Dr]
    Bias convention (ComplexConv2d = two biased real convs):
      real += br - bi,  imag += br + bi.
    """
    blk = jnp.concatenate(
        [jnp.concatenate([dr, di], axis=1),
         jnp.concatenate([-di, dr], axis=1)], axis=0)
    bias = jnp.concatenate([jnp.repeat(br - bi, ohw), jnp.repeat(br + bi, ohw)])
    return blk.astype(jnp.bfloat16), bias.reshape(1, -1).astype(jnp.float32)


# ----------------------------------------------------------------------------
# Pallas kernel: the whole CCNN2 forward on one 8-row batch tile
# ----------------------------------------------------------------------------
def _ccnn2_kernel(x_ref,
                  w1, b1, w2, b2, w3, b3, w4, b4, w5, b5, w6, b6,
                  out_ref):
    def cmm(a, w_ref, b_ref):  # complex block matmul + folded bias, f32 acc
        return jnp.dot(a.astype(jnp.bfloat16), w_ref[...],
                       preferred_element_type=jnp.float32) + b_ref[...]

    h0 = x_ref[...]                                   # (8, 2*C0*H*W) bf16
    a1 = jnp.maximum(cmm(h0, w1, b1), 0.0)            # down1 + complex_relu
    a2 = jnp.maximum(cmm(a1, w2, b2), 0.0)            # down2
    a3 = jnp.maximum(cmm(a2, w3, b3), 0.0)            # down3
    u3 = jnp.maximum(cmm(a3, w4, b4), 0.0) + a2       # up3  (+ skip, fused)
    u2 = jnp.maximum(cmm(u3, w5, b5), 0.0) + a1       # up2  (+ skip, fused)
    u1 = cmm(u2, w6, b6)                              # up1  (no relu)
    half = u1.shape[-1] // 2
    # holophase = atan2(imag, real), lane-dense store
    out_ref[...] = jnp.arctan2(u1[:, half:], u1[:, :half])


# ----------------------------------------------------------------------------
# Parameters + forward
# ----------------------------------------------------------------------------
def init_params(key):
    params = {}

    def make(key, shape):
        fan_in = 1.0
        for d in shape[1:]:
            fan_in *= d
        return jax.random.normal(key, shape, jnp.float32) / jnp.sqrt(fan_in)

    layer_specs = {
        # name: (weight_shape, c_out)
        "down1": ((4, 1, 3, 3), 4),
        "down2": ((8, 4, 3, 3), 8),
        "down3": ((16, 8, 3, 3), 16),
        "up3":   ((16, 8, 4, 4), 8),   # ConvTranspose2d: (C_in, C_out, 4, 4)
        "up2":   ((8, 4, 4, 4), 4),
        "up1":   ((4, 1, 4, 4), 1),
    }
    for name, (wshape, c_out) in layer_specs.items():
        key, k1, k2, k3, k4 = jax.random.split(key, 5)
        params[name] = (
            make(k1, wshape),                                      # wr
            make(k2, wshape),                                      # wi
            0.01 * jax.random.normal(k3, (c_out,), jnp.float32),   # br
            0.01 * jax.random.normal(k4, (c_out,), jnp.float32),   # bi
        )
    return params


def ccnn2_forward(params, xr, xi):
    n, c0, h0, w0 = xr.shape

    # --- weight-only preprocessing (tiny XLA glue; no activation data) ---
    def make_conv(name, sh, sw):
        wr, wi, br, bi = params[name]
        dr, (oh, ow) = _conv_dense_T(wr, 2, 1, sh, sw)
        di, _ = _conv_dense_T(wi, 2, 1, sh, sw)
        blk, bias = _complex_block(dr, di, br, bi, oh * ow)
        return blk, bias, oh, ow

    def make_convT(name, sh, sw):
        wr, wi, br, bi = params[name]
        dr, (oh, ow) = _convT_dense_T(wr, 2, 1, sh, sw)
        di, _ = _convT_dense_T(wi, 2, 1, sh, sw)
        blk, bias = _complex_block(dr, di, br, bi, oh * ow)
        return blk, bias, oh, ow

    wb1, bb1, h1, w1 = make_conv("down1", h0, w0)
    wb2, bb2, h2, w2 = make_conv("down2", h1, w1)
    wb3, bb3, h3, w3 = make_conv("down3", h2, w2)
    wb4, bb4, h4, w4 = make_convT("up3", h3, w3)
    wb5, bb5, h5, w5 = make_convT("up2", h4, w4)
    wb6, bb6, h6, w6 = make_convT("up1", h5, w5)

    # skip-connection feature widths must line up (up3+down2, up2+down1)
    assert bb4.shape == bb2.shape and bb5.shape == bb1.shape

    # --- pack the complex input as [real_feats | imag_feats] rows (bf16) ---
    feat_in = 2 * c0 * h0 * w0
    x_blk = jnp.concatenate(
        [xr.reshape(n, -1), xi.reshape(n, -1)], axis=1).astype(jnp.bfloat16)
    # >= 2 row tiles so the grid can shard across both v7x TensorCores;
    # pad rows are zeros -> finite bias-only garbage, sliced off afterwards.
    row_tiles = max(2, pl.cdiv(n, _ROW_TILE))
    rows = row_tiles * _ROW_TILE
    if rows != n:
        x_blk = jnp.pad(x_blk, ((0, rows - n), (0, 0)))

    out_feat = bb6.shape[1] // 2   # final real-part width (= 1*H*W)

    weight_args = (wb1, bb1, wb2, bb2, wb3, bb3, wb4, bb4, wb5, bb5, wb6, bb6)
    in_specs = [pl.BlockSpec((_ROW_TILE, feat_in), lambda i: (i, 0))]
    in_specs += [pl.BlockSpec(a.shape, lambda i: (0, 0)) for a in weight_args]

    phase = pl.pallas_call(
        _ccnn2_kernel,
        out_shape=jax.ShapeDtypeStruct((rows, out_feat), jnp.float32),
        grid=(row_tiles,),
        in_specs=in_specs,
        out_specs=pl.BlockSpec((_ROW_TILE, out_feat), lambda i: (i, 0)),
        compiler_params=pltpu.CompilerParams(
            dimension_semantics=("parallel",),
            vmem_limit_bytes=16 * 1024 * 1024,
        ),
    )(x_blk, *weight_args)

    # (rows, 1*H*W) -> (N, 1, H, W)
    return phase[:n].reshape(n, 1, h6, w6)


if __name__ == "__main__":
    key = jax.random.PRNGKey(0)
    kp, kr, ki = jax.random.split(key, 3)

    params = init_params(kp)
    # complex input x: [N=2, C=1, H=16, W=16]
    xr = jax.random.normal(kr, (2, 1, 16, 16), jnp.float32)
    xi = jax.random.normal(ki, (2, 1, 16, 16), jnp.float32)

    fwd = jax.jit(ccnn2_forward)
    out = jax.block_until_ready(fwd(params, xr, xi))

    assert out.shape == (2, 1, 16, 16), out.shape
    assert out.dtype == jnp.float32
    assert bool(jnp.all(jnp.isfinite(out)))
    print("KERNEL_OK")
</pallas_src>

<mosaic_0001>
module attributes {stable_mosaic.version = 11 : i64} {
  func.func @_ccnn2_kernel(%arg0: i32, %arg1: memref<8x512xbf16, #tpu.memory_space<vmem>>, %arg2: memref<512x512xbf16, #tpu.memory_space<vmem>>, %arg3: memref<1x512xf32, #tpu.memory_space<vmem>>, %arg4: memref<512x256xbf16, #tpu.memory_space<vmem>>, %arg5: memref<1x256xf32, #tpu.memory_space<vmem>>, %arg6: memref<256x128xbf16, #tpu.memory_space<vmem>>, %arg7: memref<1x128xf32, #tpu.memory_space<vmem>>, %arg8: memref<128x256xbf16, #tpu.memory_space<vmem>>, %arg9: memref<1x256xf32, #tpu.memory_space<vmem>>, %arg10: memref<256x512xbf16, #tpu.memory_space<vmem>>, %arg11: memref<1x512xf32, #tpu.memory_space<vmem>>, %arg12: memref<512x512xbf16, #tpu.memory_space<vmem>>, %arg13: memref<1x512xf32, #tpu.memory_space<vmem>>, %arg14: memref<8x256xf32, #tpu.memory_space<vmem>>) attributes {dimension_semantics = [#tpu.dimension_semantics<parallel>], iteration_bounds = array<i64: 2>, scalar_prefetch = 0 : i64, scratch_operands = 0 : i64, tpu.core_type = #tpu.core_type<tc>, window_params = [{transform_indices = @transform_0, window_bounds = array<i64: 8, 512>}, {pipeline_mode = #tpu.pipeline_mode<synchronous>, transform_indices = @transform_1, window_bounds = array<i64: 512, 512>}, {pipeline_mode = #tpu.pipeline_mode<synchronous>, transform_indices = @transform_2, window_bounds = array<i64: 1, 512>}, {pipeline_mode = #tpu.pipeline_mode<synchronous>, transform_indices = @transform_3, window_bounds = array<i64: 512, 256>}, {pipeline_mode = #tpu.pipeline_mode<synchronous>, transform_indices = @transform_4, window_bounds = array<i64: 1, 256>}, {pipeline_mode = #tpu.pipeline_mode<synchronous>, transform_indices = @transform_5, window_bounds = array<i64: 256, 128>}, {pipeline_mode = #tpu.pipeline_mode<synchronous>, transform_indices = @transform_6, window_bounds = array<i64: 1, 128>}, {pipeline_mode = #tpu.pipeline_mode<synchronous>, transform_indices = @transform_7, window_bounds = array<i64: 128, 256>}, {pipeline_mode = #tpu.pipeline_mode<synchronous>, transform_indices = @transform_8, window_bounds = array<i64: 1, 256>}, {pipeline_mode = #tpu.pipeline_mode<synchronous>, transform_indices = @transform_9, window_bounds = array<i64: 256, 512>}, {pipeline_mode = #tpu.pipeline_mode<synchronous>, transform_indices = @transform_10, window_bounds = array<i64: 1, 512>}, {pipeline_mode = #tpu.pipeline_mode<synchronous>, transform_indices = @transform_11, window_bounds = array<i64: 512, 512>}, {pipeline_mode = #tpu.pipeline_mode<synchronous>, transform_indices = @transform_12, window_bounds = array<i64: 1, 512>}, {transform_indices = @transform_13, window_bounds = array<i64: 8, 256>}]} {
    %c0 = arith.constant 0 : index
    %c0_0 = arith.constant 0 : index
    %0 = vector.load %arg1[%c0, %c0_0] : memref<8x512xbf16, #tpu.memory_space<vmem>>, vector<8x512xbf16>
    %c0_1 = arith.constant 0 : index
    %c0_2 = arith.constant 0 : index
    %1 = vector.load %arg2[%c0_1, %c0_2] : memref<512x512xbf16, #tpu.memory_space<vmem>>, vector<512x512xbf16>
    %cst = arith.constant dense<0.000000e+00> : vector<8x512xf32>
    %2 = tpu.matmul %0, %1, %cst {dimension_numbers = #tpu.dot_dimension_numbers<[1], [0], [0], [1], [0, 0, 1, 1], [], []>} : vector<8x512xbf16>, vector<512x512xbf16>, vector<8x512xf32> -> vector<8x512xf32>
    %c0_3 = arith.constant 0 : index
    %c0_4 = arith.constant 0 : index
    %3 = vector.load %arg3[%c0_3, %c0_4] : memref<1x512xf32, #tpu.memory_space<vmem>>, vector<1x512xf32>
    %4 = vector.broadcast %3 : vector<1x512xf32> to vector<8x512xf32>
    %5 = arith.addf %2, %4 : vector<8x512xf32>
    %cst_5 = arith.constant 0.000000e+00 : f32
    %6 = vector.broadcast %cst_5 : f32 to vector<8x512xf32>
    %7 = arith.maximumf %5, %6 : vector<8x512xf32>
    %8 = arith.truncf %7 : vector<8x512xf32> to vector<8x512xbf16>
    %c0_6 = arith.constant 0 : index
    %c0_7 = arith.constant 0 : index
    %9 = vector.load %arg4[%c0_6, %c0_7] : memref<512x256xbf16, #tpu.memory_space<vmem>>, vector<512x256xbf16>
    %cst_8 = arith.constant dense<0.000000e+00> : vector<8x256xf32>
    %10 = tpu.matmul %8, %9, %cst_8 {dimension_numbers = #tpu.dot_dimension_numbers<[1], [0], [0], [1], [0, 0, 1, 1], [], []>} : vector<8x512xbf16>, vector<512x256xbf16>, vector<8x256xf32> -> vector<8x256xf32>
    %c0_9 = arith.constant 0 : index
    %c0_10 = arith.constant 0 : index
    %11 = vector.load %arg5[%c0_9, %c0_10] : memref<1x256xf32, #tpu.memory_space<vmem>>, vector<1x256xf32>
    %12 = vector.broadcast %11 : vector<1x256xf32> to vector<8x256xf32>
    %13 = arith.addf %10, %12 : vector<8x256xf32>
    %cst_11 = arith.constant 0.000000e+00 : f32
    %14 = vector.broadcast %cst_11 : f32 to vector<8x256xf32>
    %15 = arith.maximumf %13, %14 : vector<8x256xf32>
    %16 = arith.truncf %15 : vector<8x256xf32> to vector<8x256xbf16>
    %c0_12 = arith.constant 0 : index
    %c0_13 = arith.constant 0 : index
    %17 = vector.load %arg6[%c0_12, %c0_13] : memref<256x128xbf16, #tpu.memory_space<vmem>>, vector<256x128xbf16>
    %cst_14 = arith.constant dense<0.000000e+00> : vector<8x128xf32>
    %18 = tpu.matmul %16, %17, %cst_14 {dimension_numbers = #tpu.dot_dimension_numbers<[1], [0], [0], [1], [0, 0, 1, 1], [], []>} : vector<8x256xbf16>, vector<256x128xbf16>, vector<8x128xf32> -> vector<8x128xf32>
    %c0_15 = arith.constant 0 : index
    %c0_16 = arith.constant 0 : index
    %19 = vector.load %arg7[%c0_15, %c0_16] : memref<1x128xf32, #tpu.memory_space<vmem>>, vector<1x128xf32>
    %20 = vector.broadcast %19 : vector<1x128xf32> to vector<8x128xf32>
    %21 = arith.addf %18, %20 : vector<8x128xf32>
    %cst_17 = arith.constant 0.000000e+00 : f32
    %22 = vector.broadcast %cst_17 : f32 to vector<8x128xf32>
    %23 = arith.maximumf %21, %22 : vector<8x128xf32>
    %24 = arith.truncf %23 : vector<8x128xf32> to vector<8x128xbf16>
    %c0_18 = arith.constant 0 : index
    %c0_19 = arith.constant 0 : index
    %25 = vector.load %arg8[%c0_18, %c0_19] : memref<128x256xbf16, #tpu.memory_space<vmem>>, vector<128x256xbf16>
    %cst_20 = arith.constant dense<0.000000e+00> : vector<8x256xf32>
    %26 = tpu.matmul %24, %25, %cst_20 {dimension_numbers = #tpu.dot_dimension_numbers<[1], [0], [0], [1], [0, 0, 1, 1], [], []>} : vector<8x128xbf16>, vector<128x256xbf16>, vector<8x256xf32> -> vector<8x256xf32>
    %c0_21 = arith.constant 0 : index
    %c0_22 = arith.constant 0 : index
    %27 = vector.load %arg9[%c0_21, %c0_22] : memref<1x256xf32, #tpu.memory_space<vmem>>, vector<1x256xf32>
    %28 = vector.broadcast %27 : vector<1x256xf32> to vector<8x256xf32>
    %29 = arith.addf %26, %28 : vector<8x256xf32>
    %cst_23 = arith.constant 0.000000e+00 : f32
    %30 = vector.broadcast %cst_23 : f32 to vector<8x256xf32>
    %31 = arith.maximumf %29, %30 : vector<8x256xf32>
    %32 = arith.addf %31, %15 : vector<8x256xf32>
    %33 = arith.truncf %32 : vector<8x256xf32> to vector<8x256xbf16>
    %c0_24 = arith.constant 0 : index
    %c0_25 = arith.constant 0 : index
    %34 = vector.load %arg10[%c0_24, %c0_25] : memref<256x512xbf16, #tpu.memory_space<vmem>>, vector<256x512xbf16>
    %cst_26 = arith.constant dense<0.000000e+00> : vector<8x512xf32>
    %35 = tpu.matmul %33, %34, %cst_26 {dimension_numbers = #tpu.dot_dimension_numbers<[1], [0], [0], [1], [0, 0, 1, 1], [], []>} : vector<8x256xbf16>, vector<256x512xbf16>, vector<8x512xf32> -> vector<8x512xf32>
    %c0_27 = arith.constant 0 : index
    %c0_28 = arith.constant 0 : index
    %36 = vector.load %arg11[%c0_27, %c0_28] : memref<1x512xf32, #tpu.memory_space<vmem>>, vector<1x512xf32>
    %37 = vector.broadcast %36 : vector<1x512xf32> to vector<8x512xf32>
    %38 = arith.addf %35, %37 : vector<8x512xf32>
    %cst_29 = arith.constant 0.000000e+00 : f32
    %39 = vector.broadcast %cst_29 : f32 to vector<8x512xf32>
    %40 = arith.maximumf %38, %39 : vector<8x512xf32>
    %41 = arith.addf %40, %7 : vector<8x512xf32>
    %42 = arith.truncf %41 : vector<8x512xf32> to vector<8x512xbf16>
    %c0_30 = arith.constant 0 : index
    %c0_31 = arith.constant 0 : index
    %43 = vector.load %arg12[%c0_30, %c0_31] : memref<512x512xbf16, #tpu.memory_space<vmem>>, vector<512x512xbf16>
    %cst_32 = arith.constant dense<0.000000e+00> : vector<8x512xf32>
    %44 = tpu.matmul %42, %43, %cst_32 {dimension_numbers = #tpu.dot_dimension_numbers<[1], [0], [0], [1], [0, 0, 1, 1], [], []>} : vector<8x512xbf16>, vector<512x512xbf16>, vector<8x512xf32> -> vector<8x512xf32>
    %c0_33 = arith.constant 0 : index
    %c0_34 = arith.constant 0 : index
    %45 = vector.load %arg13[%c0_33, %c0_34] : memref<1x512xf32, #tpu.memory_space<vmem>>, vector<1x512xf32>
    %46 = vector.broadcast %45 : vector<1x512xf32> to vector<8x512xf32>
    %47 = arith.addf %44, %46 : vector<8x512xf32>
    %48 = vector.extract_strided_slice %47 {offsets = [0, 256], sizes = [8, 256], strides = [1, 1]} : vector<8x512xf32> to vector<8x256xf32>
    %49 = vector.extract_strided_slice %47 {offsets = [0, 0], sizes = [8, 256], strides = [1, 1]} : vector<8x512xf32> to vector<8x256xf32>
    %50 = math.atan2 %48, %49 : vector<8x256xf32>
    %c0_35 = arith.constant 0 : index
    %c0_36 = arith.constant 0 : index
    %51 = vector.load %arg14[%c0_35, %c0_36] : memref<8x256xf32, #tpu.memory_space<vmem>>, vector<8x256xf32>
    tpu.vector_store %arg14[%c0_35, %c0_36], %50 {strides = array<i32>} : memref<8x256xf32, #tpu.memory_space<vmem>>, vector<8x256xf32>,
    return
  }
  func.func @transform_0(%arg0: i32) -> (i32, i32) {
    %c0_i32 = arith.constant 0 : i32
    %c0_i32_0 = arith.constant 0 : i32
    return %arg0, %c0_i32 : i32, i32
  }
  func.func @transform_1(%arg0: i32) -> (i32, i32) {
    %c0_i32 = arith.constant 0 : i32
    %c0_i32_0 = arith.constant 0 : i32
    %c0_i32_1 = arith.constant 0 : i32
    return %c0_i32, %c0_i32_0 : i32, i32
  }
  func.func @transform_2(%arg0: i32) -> (i32, i32) {
    %c0_i32 = arith.constant 0 : i32
    %c0_i32_0 = arith.constant 0 : i32
    %c0_i32_1 = arith.constant 0 : i32
    return %c0_i32, %c0_i32_0 : i32, i32
  }
  func.func @transform_3(%arg0: i32) -> (i32, i32) {
    %c0_i32 = arith.constant 0 : i32
    %c0_i32_0 = arith.constant 0 : i32
    %c0_i32_1 = arith.constant 0 : i32
    return %c0_i32, %c0_i32_0 : i32, i32
  }
  func.func @transform_4(%arg0: i32) -> (i32, i32) {
    %c0_i32 = arith.constant 0 : i32
    %c0_i32_0 = arith.constant 0 : i32
    %c0_i32_1 = arith.constant 0 : i32
    return %c0_i32, %c0_i32_0 : i32, i32
  }
  func.func @transform_5(%arg0: i32) -> (i32, i32) {
    %c0_i32 = arith.constant 0 : i32
    %c0_i32_0 = arith.constant 0 : i32
    %c0_i32_1 = arith.constant 0 : i32
    return %c0_i32, %c0_i32_0 : i32, i32
  }
  func.func @transform_6(%arg0: i32) -> (i32, i32) {
    %c0_i32 = arith.constant 0 : i32
    %c0_i32_0 = arith.constant 0 : i32
    %c0_i32_1 = arith.constant 0 : i32
    return %c0_i32, %c0_i32_0 : i32, i32
  }
  func.func @transform_7(%arg0: i32) -> (i32, i32) {
    %c0_i32 = arith.constant 0 : i32
    %c0_i32_0 = arith.constant 0 : i32
    %c0_i32_1 = arith.constant 0 : i32
    return %c0_i32, %c0_i32_0 : i32, i32
  }
  func.func @transform_8(%arg0: i32) -> (i32, i32) {
    %c0_i32 = arith.constant 0 : i32
    %c0_i32_0 = arith.constant 0 : i32
    %c0_i32_1 = arith.constant 0 : i32
    return %c0_i32, %c0_i32_0 : i32, i32
  }
  func.func @transform_9(%arg0: i32) -> (i32, i32) {
    %c0_i32 = arith.constant 0 : i32
    %c0_i32_0 = arith.constant 0 : i32
    %c0_i32_1 = arith.constant 0 : i32
    return %c0_i32, %c0_i32_0 : i32, i32
  }
  func.func @transform_10(%arg0: i32) -> (i32, i32) {
    %c0_i32 = arith.constant 0 : i32
    %c0_i32_0 = arith.constant 0 : i32
    %c0_i32_1 = arith.constant 0 : i32
    return %c0_i32, %c0_i32_0 : i32, i32
  }
  func.func @transform_11(%arg0: i32) -> (i32, i32) {
    %c0_i32 = arith.constant 0 : i32
    %c0_i32_0 = arith.constant 0 : i32
    %c0_i32_1 = arith.constant 0 : i32
    return %c0_i32, %c0_i32_0 : i32, i32
  }
  func.func @transform_12(%arg0: i32) -> (i32, i32) {
    %c0_i32 = arith.constant 0 : i32
    %c0_i32_0 = arith.constant 0 : i32
    %c0_i32_1 = arith.constant 0 : i32
    return %c0_i32, %c0_i32_0 : i32, i32
  }
  func.func @transform_13(%arg0: i32) -> (i32, i32) {
    %c0_i32 = arith.constant 0 : i32
    %c0_i32_0 = arith.constant 0 : i32
    return %arg0, %c0_i32 : i32, i32
  }
}

</mosaic_0001>

<llo_original>
// kernel: ccnn2_forward.1
$region0: #{ccnn2_forward.1}
  #allocation0 [shape = 'u32[]', space=smem, size = 0x4, offset = 0x4, fixed_abs, tag = 'smem constant byte address 0x4 - core index']
  #allocation1 [shape = 'u32[144,128]{1,0:T(1,128)}', space=vmem, size = 0x12000, scoped, tag = 'internal scratch']
  %s0 = inlined_call_operand.vmem [shape: bf16[16,512], index: 0, kind: input, shape index: {}]
  %s1 = inlined_call_operand.vmem [shape: bf16[512,512], index: 1, kind: input, shape index: {}]
  %s2 = inlined_call_operand.vmem [shape: f32[1,512], index: 2, kind: input, shape index: {}]
  %s3 = inlined_call_operand.vmem [shape: bf16[512,256], index: 3, kind: input, shape index: {}]
  %s4 = inlined_call_operand.vmem [shape: f32[1,256], index: 4, kind: input, shape index: {}]
  %s5 = inlined_call_operand.vmem [shape: bf16[256,128], index: 5, kind: input, shape index: {}]
  %s6 = inlined_call_operand.vmem [shape: f32[1,128], index: 6, kind: input, shape index: {}]
  %s7 = inlined_call_operand.vmem [shape: bf16[128,256], index: 7, kind: input, shape index: {}]
  %s8 = inlined_call_operand.vmem [shape: f32[1,256], index: 8, kind: input, shape index: {}]
  %s9 = inlined_call_operand.vmem [shape: bf16[256,512], index: 9, kind: input, shape index: {}]
  %s10 = inlined_call_operand.vmem [shape: f32[1,512], index: 10, kind: input, shape index: {}]
  %s11 = inlined_call_operand.vmem [shape: bf16[512,512], index: 11, kind: input, shape index: {}]
  %s12 = inlined_call_operand.vmem [shape: f32[1,512], index: 12, kind: input, shape index: {}]
  %s13 = inlined_call_operand.vmem [shape: f32[16,256], index: 13, kind: output, shape index: {}]
  %s14 = sld [smem:[#allocation0]]
  $region85: #{ccnn2_forward.1} parent=0
    _
  %s16 = ssub.s32 1, %s14
  %s17 = scalar_select 0, %s16, %s14
  loop: start=0, step=1, limit=4
  $region2: #{ccnn2_forward.1} parent=0 // loop_pre_header
    _
  $region3: #{ccnn2_forward.1} parent=0 // loop_header
    %s19 = sphi 0, %s23
    %p20 = scmp.ge.s32.totalorder %s19, 4
    %s29 = sphi 0, %s31
    %s32 = sphi 0, %s29
    %s33 = sphi 0, %s32
    %s49 = sphi 0, %s33
    %s53 = sphi 0, %s53
    %s55 = sphi 0, %s53
    %s56 = sphi 0, %s55
    %s70 = sphi 0, %s56
    %s74 = sphi 0, %s74
    %s76 = sphi 0, %s74
    %s77 = sphi 0, %s76
    %s91 = sphi 0, %s77
    %s95 = sphi 0, %s95
    %s97 = sphi 0, %s95
    %s98 = sphi 0, %s97
    %s112 = sphi 0, %s98
    %s116 = sphi 0, %s116
    %s118 = sphi 0, %s116
    %s119 = sphi 0, %s118
    %s133 = sphi 0, %s119
    %s137 = sphi 0, %s137
    %s139 = sphi 0, %s137
    %s140 = sphi 0, %s139
    %s154 = sphi 0, %s140
    %s158 = sphi 0, %s158
    %s160 = sphi 0, %s158
    %s161 = sphi 0, %s160
    %s175 = sphi 0, %s161
    %s179 = sphi 0, %s179
    %s181 = sphi 0, %s179
    %s182 = sphi 0, %s181
    %s196 = sphi 0, %s182
    %s200 = sphi 0, %s200
    %s202 = sphi 0, %s200
    %s203 = sphi 0, %s202
    %s217 = sphi 0, %s203
    %s221 = sphi 0, %s221
    %s223 = sphi 0, %s221
    %s224 = sphi 0, %s223
    %s238 = sphi 0, %s224
    %s242 = sphi 0, %s242
    %s244 = sphi 0, %s242
    %s245 = sphi 0, %s244
    %s259 = sphi 0, %s245
    %s263 = sphi 0, %s263
    %s265 = sphi 0, %s263
    %s266 = sphi 0, %s265
    %s280 = sphi 0, %s266
    %s284 = sphi 0, %s284
    %s286 = sphi 0, %s284
    %s287 = sphi 0, %s286
    %s301 = sphi 0, %s287
    %s307 = sphi 0, %s309
    %s310 = sphi 0, %s307
    %s311 = sphi 0, %s310
    %s327 = sphi 0, %s311
  $region4: #{ccnn2_forward.1} parent=0 // loop_header_branch
    %22 = sbr.rel (%p20) target = $region8
  $region5: #{ccnn2_forward.1} parent=0 // loop_body
    %s24 = ssub.s32 %s19, 1
    %s25 = ssub.s32 %s19, 2
    %s26 = sadd.s32 %s19, 1
    %s27 = ssub.s32 %s19, %s26
    %p28 = scmp.eq.s32.totalorder %s27, 0
    %s30 = sadd.s32 %s29, 1
    %s31 = scalar_select %p28, %s29, %s30
    %p34 = pneg %p28
    %p35 = scmp.eq.s32.totalorder %s19, 1
    %p36 = por %p34, %p35
    %p37 = scmp.ne.s32.totalorder %s29, %s32
    %p38 = scmp.eq.s32.totalorder %s19, 0
    %p39 = por %p37, %p38
    %p40 = scmp.ne.s32.totalorder %s29, %s32
    %p41 = scmp.eq.s32.totalorder %s24, 1
    %p42 = por %p40, %p41
    %p43 = scmp.ne.s32.totalorder %s32, %s33
    %p44 = scmp.eq.s32.totalorder %s24, 0
    %p45 = por %p43, %p44
    %p46 = scmp.ne.s32.totalorder %s32, %s33
    %p47 = scmp.eq.s32.totalorder %s25, 1
    %p48 = por %p46, %p47
    %p50 = scmp.ne.s32.totalorder %s33, %s49
    %p51 = scmp.eq.s32.totalorder %s25, 0
    %p52 = por %p50, %p51
    %s54 = sadd.s32 %s53, 1
    %p57 = scmp.eq.s32.totalorder %s19, 1
    %p58 = scmp.ne.s32.totalorder %s53, %s55
    %p59 = scmp.eq.s32.totalorder %s19, 0
    %p60 = por %p58, %p59
    %p61 = scmp.ne.s32.totalorder %s53, %s55
    %p62 = scmp.eq.s32.totalorder %s24, 1
    %p63 = por %p61, %p62
    %p64 = scmp.ne.s32.totalorder %s55, %s56
    %p65 = scmp.eq.s32.totalorder %s24, 0
    %p66 = por %p64, %p65
    %p67 = scmp.ne.s32.totalorder %s55, %s56
    %p68 = scmp.eq.s32.totalorder %s25, 1
    %p69 = por %p67, %p68
    %p71 = scmp.ne.s32.totalorder %s56, %s70
    %p72 = scmp.eq.s32.totalorder %s25, 0
    %p73 = por %p71, %p72
    %s75 = sadd.s32 %s74, 1
    %p78 = scmp.eq.s32.totalorder %s19, 1
    %p79 = scmp.ne.s32.totalorder %s74, %s76
    %p80 = scmp.eq.s32.totalorder %s19, 0
    %p81 = por %p79, %p80
    %p82 = scmp.ne.s32.totalorder %s74, %s76
    %p83 = scmp.eq.s32.totalorder %s24, 1
    %p84 = por %p82, %p83
    %p85 = scmp.ne.s32.totalorder %s76, %s77
    %p86 = scmp.eq.s32.totalorder %s24, 0
    %p87 = por %p85, %p86
    %p88 = scmp.ne.s32.totalorder %s76, %s77
    %p89 = scmp.eq.s32.totalorder %s25, 1
    %p90 = por %p88, %p89
    %p92 = scmp.ne.s32.totalorder %s77, %s91
    %p93 = scmp.eq.s32.totalorder %s25, 0
    %p94 = por %p92, %p93
    %s96 = sadd.s32 %s95, 1
    %p99 = scmp.eq.s32.totalorder %s19, 1
    %p100 = scmp.ne.s32.totalorder %s95, %s97
    %p101 = scmp.eq.s32.totalorder %s19, 0
    %p102 = por %p100, %p101
    %p103 = scmp.ne.s32.totalorder %s95, %s97
    %p104 = scmp.eq.s32.totalorder %s24, 1
    %p105 = por %p103, %p104
    %p106 = scmp.ne.s32.totalorder %s97, %s98
    %p107 = scmp.eq.s32.totalorder %s24, 0
    %p108 = por %p106, %p107
    %p109 = scmp.ne.s32.totalorder %s97, %s98
    %p110 = scmp.eq.s32.totalorder %s25, 1
    %p111 = por %p109, %p110
    %p113 = scmp.ne.s32.totalorder %s98, %s112
    %p114 = scmp.eq.s32.totalorder %s25, 0
    %p115 = por %p113, %p114
    %s117 = sadd.s32 %s116, 1
    %p120 = scmp.eq.s32.totalorder %s19, 1
    %p121 = scmp.ne.s32.totalorder %s116, %s118
    %p122 = scmp.eq.s32.totalorder %s19, 0
    %p123 = por %p121, %p122
    %p124 = scmp.ne.s32.totalorder %s116, %s118
    %p125 = scmp.eq.s32.totalorder %s24, 1
    %p126 = por %p124, %p125
    %p127 = scmp.ne.s32.totalorder %s118, %s119
    %p128 = scmp.eq.s32.totalorder %s24, 0
    %p129 = por %p127, %p128
    %p130 = scmp.ne.s32.totalorder %s118, %s119
    %p131 = scmp.eq.s32.totalorder %s25, 1
    %p132 = por %p130, %p131
    %p134 = scmp.ne.s32.totalorder %s119, %s133
    %p135 = scmp.eq.s32.totalorder %s25, 0
    %p136 = por %p134, %p135
    %s138 = sadd.s32 %s137, 1
    %p141 = scmp.eq.s32.totalorder %s19, 1
    %p142 = scmp.ne.s32.totalorder %s137, %s139
    %p143 = scmp.eq.s32.totalorder %s19, 0
    %p144 = por %p142, %p143
    %p145 = scmp.ne.s32.totalorder %s137, %s139
    %p146 = scmp.eq.s32.totalorder %s24, 1
    %p147 = por %p145, %p146
    %p148 = scmp.ne.s32.totalorder %s139, %s140
    %p149 = scmp.eq.s32.totalorder %s24, 0
    %p150 = por %p148, %p149
    %p151 = scmp.ne.s32.totalorder %s139, %s140
    %p152 = scmp.eq.s32.totalorder %s25, 1
    %p153 = por %p151, %p152
    %p155 = scmp.ne.s32.totalorder %s140, %s154
    %p156 = scmp.eq.s32.totalorder %s25, 0
    %p157 = por %p155, %p156
    %s159 = sadd.s32 %s158, 1
    %p162 = scmp.eq.s32.totalorder %s19, 1
    %p163 = scmp.ne.s32.totalorder %s158, %s160
    %p164 = scmp.eq.s32.totalorder %s19, 0
    %p165 = por %p163, %p164
    %p166 = scmp.ne.s32.totalorder %s158, %s160
    %p167 = scmp.eq.s32.totalorder %s24, 1
    %p168 = por %p166, %p167
    %p169 = scmp.ne.s32.totalorder %s160, %s161
    %p170 = scmp.eq.s32.totalorder %s24, 0
    %p171 = por %p169, %p170
    %p172 = scmp.ne.s32.totalorder %s160, %s161
    %p173 = scmp.eq.s32.totalorder %s25, 1
    %p174 = por %p172, %p173
    %p176 = scmp.ne.s32.totalorder %s161, %s175
    %p177 = scmp.eq.s32.totalorder %s25, 0
    %p178 = por %p176, %p177
    %s180 = sadd.s32 %s179, 1
    %p183 = scmp.eq.s32.totalorder %s19, 1
    %p184 = scmp.ne.s32.totalorder %s179, %s181
    %p185 = scmp.eq.s32.totalorder %s19, 0
    %p186 = por %p184, %p185
    %p187 = scmp.ne.s32.totalorder %s179, %s181
    %p188 = scmp.eq.s32.totalorder %s24, 1
    %p189 = por %p187, %p188
    %p190 = scmp.ne.s32.totalorder %s181, %s182
    %p191 = scmp.eq.s32.totalorder %s24, 0
    %p192 = por %p190, %p191
    %p193 = scmp.ne.s32.totalorder %s181, %s182
    %p194 = scmp.eq.s32.totalorder %s25, 1
    %p195 = por %p193, %p194
    %p197 = scmp.ne.s32.totalorder %s182, %s196
    %p198 = scmp.eq.s32.totalorder %s25, 0
    %p199 = por %p197, %p198
    %s201 = sadd.s32 %s200, 1
    %p204 = scmp.eq.s32.totalorder %s19, 1
    %p205 = scmp.ne.s32.totalorder %s200, %s202
    %p206 = scmp.eq.s32.totalorder %s19, 0
    %p207 = por %p205, %p206
    %p208 = scmp.ne.s32.totalorder %s200, %s202
    %p209 = scmp.eq.s32.totalorder %s24, 1
    %p210 = por %p208, %p209
    %p211 = scmp.ne.s32.totalorder %s202, %s203
    %p212 = scmp.eq.s32.totalorder %s24, 0
    %p213 = por %p211, %p212
    %p214 = scmp.ne.s32.totalorder %s202, %s203
    %p215 = scmp.eq.s32.totalorder %s25, 1
    %p216 = por %p214, %p215
    %p218 = scmp.ne.s32.totalorder %s203, %s217
    %p219 = scmp.eq.s32.totalorder %s25, 0
    %p220 = por %p218, %p219
    %s222 = sadd.s32 %s221, 1
    %p225 = scmp.eq.s32.totalorder %s19, 1
    %p226 = scmp.ne.s32.totalorder %s221, %s223
    %p227 = scmp.eq.s32.totalorder %s19, 0
    %p228 = por %p226, %p227
    %p229 = scmp.ne.s32.totalorder %s221, %s223
    %p230 = scmp.eq.s32.totalorder %s24, 1
    %p231 = por %p229, %p230
    %p232 = scmp.ne.s32.totalorder %s223, %s224
    %p233 = scmp.eq.s32.totalorder %s24, 0
    %p234 = por %p232, %p233
    %p235 = scmp.ne.s32.totalorder %s223, %s224
    %p236 = scmp.eq.s32.totalorder %s25, 1
    %p237 = por %p235, %p236
    %p239 = scmp.ne.s32.totalorder %s224, %s238
    %p240 = scmp.eq.s32.totalorder %s25, 0
    %p241 = por %p239, %p240
    %s243 = sadd.s32 %s242, 1
    %p246 = scmp.eq.s32.totalorder %s19, 1
    %p247 = scmp.ne.s32.totalorder %s242, %s244
    %p248 = scmp.eq.s32.totalorder %s19, 0
    %p249 = por %p247, %p248
    %p250 = scmp.ne.s32.totalorder %s242, %s244
    %p251 = scmp.eq.s32.totalorder %s24, 1
    %p252 = por %p250, %p251
    %p253 = scmp.ne.s32.totalorder %s244, %s245
    %p254 = scmp.eq.s32.totalorder %s24, 0
    %p255 = por %p253, %p254
    %p256 = scmp.ne.s32.totalorder %s244, %s245
    %p257 = scmp.eq.s32.totalorder %s25, 1
    %p258 = por %p256, %p257
    %p260 = scmp.ne.s32.totalorder %s245, %s259
    %p261 = scmp.eq.s32.totalorder %s25, 0
    %p262 = por %p260, %p261
    %s264 = sadd.s32 %s263, 1
    %p267 = scmp.eq.s32.totalorder %s19, 1
    %p268 = scmp.ne.s32.totalorder %s263, %s265
    %p269 = scmp.eq.s32.totalorder %s19, 0
    %p270 = por %p268, %p269
    %p271 = scmp.ne.s32.totalorder %s263, %s265
    %p272 = scmp.eq.s32.totalorder %s24, 1
    %p273 = por %p271, %p272
    %p274 = scmp.ne.s32.totalorder %s265, %s266
    %p275 = scmp.eq.s32.totalorder %s24, 0
    %p276 = por %p274, %p275
    %p277 = scmp.ne.s32.totalorder %s265, %s266
    %p278 = scmp.eq.s32.totalorder %s25, 1
    %p279 = por %p277, %p278
    %p281 = scmp.ne.s32.totalorder %s266, %s280
    %p282 = scmp.eq.s32.totalorder %s25, 0
    %p283 = por %p281, %p282
    %s285 = sadd.s32 %s284, 1
    %p288 = scmp.eq.s32.totalorder %s19, 1
    %p289 = scmp.ne.s32.totalorder %s284, %s286
    %p290 = scmp.eq.s32.totalorder %s19, 0
    %p291 = por %p289, %p290
    %p292 = scmp.ne.s32.totalorder %s284, %s286
    %p293 = scmp.eq.s32.totalorder %s24, 1
    %p294 = por %p292, %p293
    %p295 = scmp.ne.s32.totalorder %s286, %s287
    %p296 = scmp.eq.s32.totalorder %s24, 0
    %p297 = por %p295, %p296
    %p298 = scmp.ne.s32.totalorder %s286, %s287
    %p299 = scmp.eq.s32.totalorder %s25, 1
    %p300 = por %p298, %p299
    %p302 = scmp.ne.s32.totalorder %s287, %s301
    %p303 = scmp.eq.s32.totalorder %s25, 0
    %p304 = por %p302, %p303
    %s305 = ssub.s32 %s19, %s26
    %p306 = scmp.eq.s32.totalorder %s305, 0
    %s308 = sadd.s32 %s307, 1
    %s309 = scalar_select %p306, %s307, %s308
    %p312 = pneg %p306
    %p313 = scmp.eq.s32.totalorder %s19, 1
    %p314 = por %p312, %p313
    %p315 = scmp.ne.s32.totalorder %s307, %s310
    %p316 = scmp.eq.s32.totalorder %s19, 0
    %p317 = por %p315, %p316
    %p318 = scmp.ne.s32.totalorder %s307, %s310
    %p319 = scmp.eq.s32.totalorder %s24, 1
    %p320 = por %p318, %p319
    %p321 = scmp.ne.s32.totalorder %s310, %s311
    %p322 = scmp.eq.s32.totalorder %s24, 0
    %p323 = por %p321, %p322
    %p324 = scmp.ne.s32.totalorder %s310, %s311
    %p325 = scmp.eq.s32.totalorder %s25, 1
    %p326 = por %p324, %p325
    %p328 = scmp.ne.s32.totalorder %s311, %s327
    %p329 = scmp.eq.s32.totalorder %s25, 0
    %p330 = por %p328, %p329
    %p331 = scmp.le.s32.totalorder 1, %s19
    %p332 = scmp.lt.s32.totalorder %s19, 3
    %p333 = pnand %p331, %p332
    %p334 = pneg %p333
    // Predicated region
    $region9: #{ccnn2_forward.1} parent=5 // pred_check
      _
    $region10: #{ccnn2_forward.1} parent=5 // pred_check_branch
      %336 = sbr.rel (%p333) target = $region12
    $region11: #{ccnn2_forward.1} parent=5 // pred_region
      %s337 = ssub.s32 %s19, 1
      // Predicated region
      $region13: #{ccnn2_forward.1} parent=11 // pred_check
        %p338 = pneg %p66
      $region14: #{ccnn2_forward.1} parent=11 // pred_check_branch
        %340 = sbr.rel (%p338) target = $region16
      $region15: #{ccnn2_forward.1} parent=11 // pred_region
        _
      $region16: #{ccnn2_forward.1} parent=11 // pred_fallthru
        _
      // Predicated region
      $region17: #{ccnn2_forward.1} parent=11 // pred_check
        %p341 = pneg %p87
      $region18: #{ccnn2_forward.1} parent=11 // pred_check_branch
        %343 = sbr.rel (%p341) target = $region20
      $region19: #{ccnn2_forward.1} parent=11 // pred_region
        _
      $region20: #{ccnn2_forward.1} parent=11 // pred_fallthru
        _
      // Predicated region
      $region21: #{ccnn2_forward.1} parent=11 // pred_check
        %p344 = pneg %p108
      $region22: #{ccnn2_forward.1} parent=11 // pred_check_branch
        %346 = sbr.rel (%p344) target = $region24
      $region23: #{ccnn2_forward.1} parent=11 // pred_region
        _
      $region24: #{ccnn2_forward.1} parent=11 // pred_fallthru
        _
      // Predicated region
      $region25: #{ccnn2_forward.1} parent=11 // pred_check
        %p347 = pneg %p129
      $region26: #{ccnn2_forward.1} parent=11 // pred_check_branch
        %349 = sbr.rel (%p347) target = $region28
      $region27: #{ccnn2_forward.1} parent=11 // pred_region
        _
      $region28: #{ccnn2_forward.1} parent=11 // pred_fallthru
        _
      // Predicated region
      $region29: #{ccnn2_forward.1} parent=11 // pred_check
        %p350 = pneg %p150
      $region30: #{ccnn2_forward.1} parent=11 // pred_check_branch
        %352 = sbr.rel (%p350) target = $region32
      $region31: #{ccnn2_forward.1} parent=11 // pred_region
        _
      $region32: #{ccnn2_forward.1} parent=11 // pred_fallthru
        _
      // Predicated region
      $region33: #{ccnn2_forward.1} parent=11 // pred_check
        %p353 = pneg %p171
      $region34: #{ccnn2_forward.1} parent=11 // pred_check_branch
        %355 = sbr.rel (%p353) target = $region36
      $region35: #{ccnn2_forward.1} parent=11 // pred_region
        _
      $region36: #{ccnn2_forward.1} parent=11 // pred_fallthru
        _
      // Predicated region
      $region37: #{ccnn2_forward.1} parent=11 // pred_check
        %p356 = pneg %p192
      $region38: #{ccnn2_forward.1} parent=11 // pred_check_branch
        %358 = sbr.rel (%p356) target = $region40
      $region39: #{ccnn2_forward.1} parent=11 // pred_region
        _
      $region40: #{ccnn2_forward.1} parent=11 // pred_fallthru
        _
      // Predicated region
      $region41: #{ccnn2_forward.1} parent=11 // pred_check
        %p359 = pneg %p213
      $region42: #{ccnn2_forward.1} parent=11 // pred_check_branch
        %361 = sbr.rel (%p359) target = $region44
      $region43: #{ccnn2_forward.1} parent=11 // pred_region
        _
      $region44: #{ccnn2_forward.1} parent=11 // pred_fallthru
        _
      // Predicated region
      $region45: #{ccnn2_forward.1} parent=11 // pred_check
        %p362 = pneg %p234
      $region46: #{ccnn2_forward.1} parent=11 // pred_check_branch
        %364 = sbr.rel (%p362) target = $region48
      $region47: #{ccnn2_forward.1} parent=11 // pred_region
        _
      $region48: #{ccnn2_forward.1} parent=11 // pred_fallthru
        _
      // Predicated region
      $region49: #{ccnn2_forward.1} parent=11 // pred_check
        %p365 = pneg %p255
      $region50: #{ccnn2_forward.1} parent=11 // pred_check_branch
        %367 = sbr.rel (%p365) target = $region52
      $region51: #{ccnn2_forward.1} parent=11 // pred_region
        _
      $region52: #{ccnn2_forward.1} parent=11 // pred_fallthru
        _
      // Predicated region
      $region53: #{ccnn2_forward.1} parent=11 // pred_check
        %p368 = pneg %p276
      $region54: #{ccnn2_forward.1} parent=11 // pred_check_branch
        %370 = sbr.rel (%p368) target = $region56
      $region55: #{ccnn2_forward.1} parent=11 // pred_region
        _
      $region56: #{ccnn2_forward.1} parent=11 // pred_fallthru
        _
      // Predicated region
      $region57: #{ccnn2_forward.1} parent=11 // pred_check
        %p371 = pneg %p297
      $region58: #{ccnn2_forward.1} parent=11 // pred_check_branch
        %373 = sbr.rel (%p371) target = $region60
      $region59: #{ccnn2_forward.1} parent=11 // pred_region
        _
      $region60: #{ccnn2_forward.1} parent=11 // pred_fallthru
        _
    $region12: #{ccnn2_forward.1} parent=5 // pred_fallthru
      _
    %p374 = scmp.lt.s32.totalorder %s19, 2
    // Predicated region
    $region61: #{ccnn2_forward.1} parent=5 // pred_check
      %p375 = pneg %p374
    $region62: #{ccnn2_forward.1} parent=5 // pred_check_branch
      %377 = sbr.rel (%p375) target = $region64
    $region63: #{ccnn2_forward.1} parent=5 // pred_region
      // Predicated region
      $region65: #{ccnn2_forward.1} parent=63 // pred_check
        %p378 = pneg %p39
      $region66: #{ccnn2_forward.1} parent=63 // pred_check_branch
        %380 = sbr.rel (%p378) target = $region68
      $region67: #{ccnn2_forward.1} parent=63 // pred_region
        %p381 = scmp.lt.s32.totalorder %s19, 1
        %s382 = scalar_select %p381, %s19, 1
        %s383 = smul.addr %s382, 4
        %s384 = smul.addr %s383, 4
        %s385 = scalar_lea.vmem %s0, %s384
      $region68: #{ccnn2_forward.1} parent=63 // pred_fallthru
        _
    $region64: #{ccnn2_forward.1} parent=5 // pred_fallthru
      _
    %p386 = scmp.le.s32.totalorder 1, %s19
    %p387 = scmp.lt.s32.totalorder %s19, 3
    %p388 = pnand %p386, %p387
    %p389 = pneg %p388
    // Predicated region
    $region69: #{ccnn2_forward.1} parent=5 // pred_check
      _
    $region70: #{ccnn2_forward.1} parent=5 // pred_check_branch
      %391 = sbr.rel (%p388) target = $region72
    $region71: #{ccnn2_forward.1} parent=5 // pred_region
      %s392 = ssub.s32 %s19, 1
      %p393 = scmp.lt.s32.totalorder %s24, 1
      %s394 = scalar_select %p393, %s24, 1
      %s395 = smul.addr %s394, 4
      %s396 = smul.addr %s395, 4
      %s397 = scalar_lea.vmem %s0, %s396
      %p398 = pneg %p45
      %p399 = pneg %p42
      %p400 = pneg %p66
      %p401 = pneg %p63
      %p402 = pneg %p87
      %p403 = pneg %p84
      %p404 = pneg %p108
      %p405 = pneg %p105
      %p406 = pneg %p129
      %p407 = pneg %p126
      %p408 = pneg %p150
      %p409 = pneg %p147
      %p410 = pneg %p171
      %p411 = pneg %p168
      %p412 = pneg %p192
      %p413 = pneg %p189
      %p414 = pneg %p213
      %p415 = pneg %p210
      %p416 = pneg %p234
      %p417 = pneg %p231
      %p418 = pneg %p255
      %p419 = pneg %p252
      %p420 = pneg %p276
      %p421 = pneg %p273
      %p422 = pneg %p297
      %p423 = pneg %p294
      %p424 = pneg %p323
      %p425 = pneg %p320
      %p426 = scmp.lt.s32.totalorder %s24, 1
      %s427 = scalar_select %p426, %s24, 1
      %s428 = smul.addr %s427, 2
      %s429 = smul.addr %s428, 8
      %s430 = scalar_lea.vmem %s13, %s429
      %p431 = scmp.lt.s32.totalorder %s24, 1
      %s432 = scalar_select %p431, %s24, 1
      %s433 = smul.addr %s432, 4
      %s434 = smul.addr %s433, 4
      %s435 = scalar_lea.vmem %s0, %s434
      %p436 = scmp.lt.s32.totalorder %s24, 1
      %s437 = scalar_select %p436, %s24, 1
      %s438 = smul.addr %s437, 2
      %s439 = smul.addr %s438, 8
      %s440 = scalar_lea.vmem %s13, %s439
      %v442 = vld [vmem:[%s435] sm:$0xff]
      %v443 = vld [vmem:[%s435 + $0x8] sm:$0xff]
      %v444 = vld [vmem:[%s1] sm:$0xff]
      %v445 = vld [vmem:[%s1 + $0x8] sm:$0xff]
      %v446 = vld [vmem:[%s1 + $0x10] sm:$0xff]
      %v447 = vld [vmem:[%s1 + $0x18] sm:$0xff]
      %v448 = vld [vmem:[%s1 + $0x20] sm:$0xff]
      %v449 = vld [vmem:[%s1 + $0x28] sm:$0xff]
      %v450 = vld [vmem:[%s1 + $0x30] sm:$0xff]
      %v451 = vld [vmem:[%s1 + $0x38] sm:$0xff]
      %v452 = vld [vmem:[%s1 + $0x40] sm:$0xff]
      %v453 = vld [vmem:[%s1 + $0x48] sm:$0xff]
      %v454 = vld [vmem:[%s1 + $0x50] sm:$0xff]
      %v455 = vld [vmem:[%s1 + $0x58] sm:$0xff]
      %v456 = vld [vmem:[%s1 + $0x60] sm:$0xff]
      %v457 = vld [vmem:[%s1 + $0x68] sm:$0xff]
      %v458 = vld [vmem:[%s1 + $0x70] sm:$0xff]
      %v459 = vld [vmem:[%s1 + $0x78] sm:$0xff]
      %v460 = vld [vmem:[%s1 + $0x80] sm:$0xff]
      %v461 = vld [vmem:[%s1 + $0x88] sm:$0xff]
      %v462 = vld [vmem:[%s1 + $0x90] sm:$0xff]
      %v463 = vld [vmem:[%s1 + $0x98] sm:$0xff]
      %v464 = vld [vmem:[%s1 + $0xa0] sm:$0xff]
      %v465 = vld [vmem:[%s1 + $0xa8] sm:$0xff]
      %v466 = vld [vmem:[%s1 + $0xb0] sm:$0xff]
      %v467 = vld [vmem:[%s1 + $0xb8] sm:$0xff]
      %v468 = vld [vmem:[%s1 + $0xc0] sm:$0xff]
      %v469 = vld [vmem:[%s1 + $0xc8] sm:$0xff]
      %v470 = vld [vmem:[%s1 + $0xd0] sm:$0xff]
      %v471 = vld [vmem:[%s1 + $0xd8] sm:$0xff]
      %v472 = vld [vmem:[%s1 + $0xe0] sm:$0xff]
      %v473 = vld [vmem:[%s1 + $0xe8] sm:$0xff]
      %v474 = vld [vmem:[%s1 + $0xf0] sm:$0xff]
      %v475 = vld [vmem:[%s1 + $0xf8] sm:$0xff]
      %v476 = vld [vmem:[%s1 + $0x100] sm:$0xff]
      %v477 = vld [vmem:[%s1 + $0x108] sm:$0xff]
      %v478 = vld [vmem:[%s1 + $0x110] sm:$0xff]
      %v479 = vld [vmem:[%s1 + $0x118] sm:$0xff]
      %v480 = vld [vmem:[%s1 + $0x120] sm:$0xff]
      %v481 = vld [vmem:[%s1 + $0x128] sm:$0xff]
      %v482 = vld [vmem:[%s1 + $0x130] sm:$0xff]
      %v483 = vld [vmem:[%s1 + $0x138] sm:$0xff]
      %v484 = vld [vmem:[%s1 + $0x140] sm:$0xff]
      %v485 = vld [vmem:[%s1 + $0x148] sm:$0xff]
      %v486 = vld [vmem:[%s1 + $0x150] sm:$0xff]
      %v487 = vld [vmem:[%s1 + $0x158] sm:$0xff]
      %v488 = vld [vmem:[%s1 + $0x160] sm:$0xff]
      %v489 = vld [vmem:[%s1 + $0x168] sm:$0xff]
      %v490 = vld [vmem:[%s1 + $0x170] sm:$0xff]
      %v491 = vld [vmem:[%s1 + $0x178] sm:$0xff]
      %v492 = vld [vmem:[%s1 + $0x180] sm:$0xff]
      %v493 = vld [vmem:[%s1 + $0x188] sm:$0xff]
      %v494 = vld [vmem:[%s1 + $0x190] sm:$0xff]
      %v495 = vld [vmem:[%s1 + $0x198] sm:$0xff]
      %v496 = vld [vmem:[%s1 + $0x1a0] sm:$0xff]
      %v497 = vld [vmem:[%s1 + $0x1a8] sm:$0xff]
      %v498 = vld [vmem:[%s1 + $0x1b0] sm:$0xff]
      %v499 = vld [vmem:[%s1 + $0x1b8] sm:$0xff]
      %v500 = vld [vmem:[%s1 + $0x1c0] sm:$0xff]
      %v501 = vld [vmem:[%s1 + $0x1c8] sm:$0xff]
      %v502 = vld [vmem:[%s1 + $0x1d0] sm:$0xff]
      %v503 = vld [vmem:[%s1 + $0x1d8] sm:$0xff]
      %v504 = vld [vmem:[%s1 + $0x1e0] sm:$0xff]
      %v505 = vld [vmem:[%s1 + $0x1e8] sm:$0xff]
      %v506 = vld [vmem:[%s1 + $0x1f0] sm:$0xff]
      %v507 = vld [vmem:[%s1 + $0x1f8] sm:$0xff]
      %v508 = vld [vmem:[%s1 + $0x200] sm:$0xff]
      %v509 = vld [vmem:[%s1 + $0x208] sm:$0xff]
      %v510 = vld [vmem:[%s1 + $0x210] sm:$0xff]
      %v511 = vld [vmem:[%s1 + $0x218] sm:$0xff]
      %v512 = vld [vmem:[%s1 + $0x220] sm:$0xff]
      %v513 = vld [vmem:[%s1 + $0x228] sm:$0xff]
      %v514 = vld [vmem:[%s1 + $0x230] sm:$0xff]
      %v515 = vld [vmem:[%s1 + $0x238] sm:$0xff]
      %v516 = vld [vmem:[%s1 + $0x240] sm:$0xff]
      %v517 = vld [vmem:[%s1 + $0x248] sm:$0xff]
      %v518 = vld [vmem:[%s1 + $0x250] sm:$0xff]
      %v519 = vld [vmem:[%s1 + $0x258] sm:$0xff]
      %v520 = vld [vmem:[%s1 + $0x260] sm:$0xff]
      %v521 = vld [vmem:[%s1 + $0x268] sm:$0xff]
      %v522 = vld [vmem:[%s1 + $0x270] sm:$0xff]
      %v523 = vld [vmem:[%s1 + $0x278] sm:$0xff]
      %v524 = vld [vmem:[%s1 + $0x280] sm:$0xff]
      %v525 = vld [vmem:[%s1 + $0x288] sm:$0xff]
      %v526 = vld [vmem:[%s1 + $0x290] sm:$0xff]
      %v527 = vld [vmem:[%s1 + $0x298] sm:$0xff]
      %v528 = vld [vmem:[%s1 + $0x2a0] sm:$0xff]
      %v529 = vld [vmem:[%s1 + $0x2a8] sm:$0xff]
      %v530 = vld [vmem:[%s1 + $0x2b0] sm:$0xff]
      %v531 = vld [vmem:[%s1 + $0x2b8] sm:$0xff]
      %v532 = vld [vmem:[%s1 + $0x2c0] sm:$0xff]
      %v533 = vld [vmem:[%s1 + $0x2c8] sm:$0xff]
      %v534 = vld [vmem:[%s1 + $0x2d0] sm:$0xff]
      %v535 = vld [vmem:[%s1 + $0x2d8] sm:$0xff]
      %v536 = vld [vmem:[%s1 + $0x2e0] sm:$0xff]
      %v537 = vld [vmem:[%s1 + $0x2e8] sm:$0xff]
      %v538 = vld [vmem:[%s1 + $0x2f0] sm:$0xff]
      %v539 = vld [vmem:[%s1 + $0x2f8] sm:$0xff]
      %v540 = vld [vmem:[%s1 + $0x300] sm:$0xff]
      %v541 = vld [vmem:[%s1 + $0x308] sm:$0xff]
      %v542 = vld [vmem:[%s1 + $0x310] sm:$0xff]
      %v543 = vld [vmem:[%s1 + $0x318] sm:$0xff]
      %v544 = vld [vmem:[%s1 + $0x320] sm:$0xff]
      %v545 = vld [vmem:[%s1 + $0x328] sm:$0xff]
      %v546 = vld [vmem:[%s1 + $0x330] sm:$0xff]
      %v547 = vld [vmem:[%s1 + $0x338] sm:$0xff]
      %v548 = vld [vmem:[%s1 + $0x340] sm:$0xff]
      %v549 = vld [vmem:[%s1 + $0x348] sm:$0xff]
      %v550 = vld [vmem:[%s1 + $0x350] sm:$0xff]
      %v551 = vld [vmem:[%s1 + $0x358] sm:$0xff]
      %v552 = vld [vmem:[%s1 + $0x360] sm:$0xff]
      %v553 = vld [vmem:[%s1 + $0x368] sm:$0xff]
      %v554 = vld [vmem:[%s1 + $0x370] sm:$0xff]
      %v555 = vld [vmem:[%s1 + $0x378] sm:$0xff]
      %v556 = vld [vmem:[%s1 + $0x380] sm:$0xff]
      %v557 = vld [vmem:[%s1 + $0x388] sm:$0xff]
      %v558 = vld [vmem:[%s1 + $0x390] sm:$0xff]
      %v559 = vld [vmem:[%s1 + $0x398] sm:$0xff]
      %v560 = vld [vmem:[%s1 + $0x3a0] sm:$0xff]
      %v561 = vld [vmem:[%s1 + $0x3a8] sm:$0xff]
      %v562 = vld [vmem:[%s1 + $0x3b0] sm:$0xff]
      %v563 = vld [vmem:[%s1 + $0x3b8] sm:$0xff]
      %v564 = vld [vmem:[%s1 + $0x3c0] sm:$0xff]
      %v565 = vld [vmem:[%s1 + $0x3c8] sm:$0xff]
      %v566 = vld [vmem:[%s1 + $0x3d0] sm:$0xff]
      %v567 = vld [vmem:[%s1 + $0x3d8] sm:$0xff]
      %v568 = vld [vmem:[%s1 + $0x3e0] sm:$0xff]
      %v569 = vld [vmem:[%s1 + $0x3e8] sm:$0xff]
      %v570 = vld [vmem:[%s1 + $0x3f0] sm:$0xff]
      %v571 = vld [vmem:[%s1 + $0x3f8] sm:$0xff]
      %v572 = vld [vmem:[%s2] sm:$0xf]
      %v574 = vlaneseq
      %v575 = vshrl.u32 %v574, 7
      %v576 = vsub.s32 0, %v575
      %v577 = vrot.slane %v572, %v576
      %v578 = vlaneseq
      %v579 = vshrl.u32 %v578, 7
      %v580 = vsub.s32 1, %v579
      %v581 = vrot.slane %v572, %v580
      %v582 = vlaneseq
      %v583 = vshrl.u32 %v582, 7
      %v584 = vsub.s32 2, %v583
      %v585 = vrot.slane %v572, %v584
      %v586 = vlaneseq
      %v587 = vshrl.u32 %v586, 7
      %v588 = vsub.s32 3, %v587
      %v589 = vrot.slane %v572, %v588
      %v596 = vunpack.c.l.b16 %v442
      %v597 = vunpack.c.h.b16 %v442
      %v598 = vunpack.c.l.b16 %v443
      %v599 = vunpack.c.h.b16 %v443
      %v600 = vpack.c.b16 %v596, %v596
      %v601 = vpack.c.b16 %v597, %v597
      %v602 = vpack.c.b16 %v598, %v598
      %v603 = vpack.c.b16 %v599, %v599
      %v736 = vunpack.c.l.b16 %v444
      %v737 = vunpack.c.h.b16 %v444
      %v738 = vunpack.c.l.b16 %v445
      %v739 = vunpack.c.h.b16 %v445
      %v740 = vunpack.c.l.b16 %v446
      %v741 = vunpack.c.h.b16 %v446
      %v742 = vunpack.c.l.b16 %v447
      %v743 = vunpack.c.h.b16 %v447
      %v744 = vunpack.c.l.b16 %v448
      %v745 = vunpack.c.h.b16 %v448
      %v746 = vunpack.c.l.b16 %v449
      %v747 = vunpack.c.h.b16 %v449
      %v748 = vunpack.c.l.b16 %v450
      %v749 = vunpack.c.h.b16 %v450
      %v750 = vunpack.c.l.b16 %v451
      %v751 = vunpack.c.h.b16 %v451
      %v752 = vunpack.c.l.b16 %v452
      %v753 = vunpack.c.h.b16 %v452
      %v754 = vunpack.c.l.b16 %v453
      %v755 = vunpack.c.h.b16 %v453
      %v756 = vunpack.c.l.b16 %v454
      %v757 = vunpack.c.h.b16 %v454
      %v758 = vunpack.c.l.b16 %v455
      %v759 = vunpack.c.h.b16 %v455
      %v760 = vunpack.c.l.b16 %v456
      %v761 = vunpack.c.h.b16 %v456
      %v762 = vunpack.c.l.b16 %v457
      %v763 = vunpack.c.h.b16 %v457
      %v764 = vunpack.c.l.b16 %v458
      %v765 = vunpack.c.h.b16 %v458
      %v766 = vunpack.c.l.b16 %v459
      %v767 = vunpack.c.h.b16 %v459
      %v768 = vunpack.c.l.b16 %v460
      %v769 = vunpack.c.h.b16 %v460
      %v770 = vunpack.c.l.b16 %v461
      %v771 = vunpack.c.h.b16 %v461
      %v772 = vunpack.c.l.b16 %v462
      %v773 = vunpack.c.h.b16 %v462
      %v774 = vunpack.c.l.b16 %v463
      %v775 = vunpack.c.h.b16 %v463
      %v776 = vunpack.c.l.b16 %v464
      %v777 = vunpack.c.h.b16 %v464
      %v778 = vunpack.c.l.b16 %v465
      %v779 = vunpack.c.h.b16 %v465
      %v780 = vunpack.c.l.b16 %v466
      %v781 = vunpack.c.h.b16 %v466
      %v782 = vunpack.c.l.b16 %v467
      %v783 = vunpack.c.h.b16 %v467
      %v784 = vunpack.c.l.b16 %v468
      %v785 = vunpack.c.h.b16 %v468
      %v786 = vunpack.c.l.b16 %v469
      %v787 = vunpack.c.h.b16 %v469
      %v788 = vunpack.c.l.b16 %v470
      %v789 = vunpack.c.h.b16 %v470
      %v790 = vunpack.c.l.b16 %v471
      %v791 = vunpack.c.h.b16 %v471
      %v792 = vunpack.c.l.b16 %v472
      %v793 = vunpack.c.h.b16 %v472
      %v794 = vunpack.c.l.b16 %v473
      %v795 = vunpack.c.h.b16 %v473
      %v796 = vunpack.c.l.b16 %v474
      %v797 = vunpack.c.h.b16 %v474
      %v798 = vunpack.c.l.b16 %v475
      %v799 = vunpack.c.h.b16 %v475
      %v800 = vunpack.c.l.b16 %v476
      %v801 = vunpack.c.h.b16 %v476
      %v802 = vunpack.c.l.b16 %v477
      %v803 = vunpack.c.h.b16 %v477
      %v804 = vunpack.c.l.b16 %v478
      %v805 = vunpack.c.h.b16 %v478
      %v806 = vunpack.c.l.b16 %v479
      %v807 = vunpack.c.h.b16 %v479
      %v808 = vunpack.c.l.b16 %v480
      %v809 = vunpack.c.h.b16 %v480
      %v810 = vunpack.c.l.b16 %v481
      %v811 = vunpack.c.h.b16 %v481
      %v812 = vunpack.c.l.b16 %v482
      %v813 = vunpack.c.h.b16 %v482
      %v814 = vunpack.c.l.b16 %v483
      %v815 = vunpack.c.h.b16 %v483
      %v816 = vunpack.c.l.b16 %v484
      %v817 = vunpack.c.h.b16 %v484
      %v818 = vunpack.c.l.b16 %v485
      %v819 = vunpack.c.h.b16 %v485
      %v820 = vunpack.c.l.b16 %v486
      %v821 = vunpack.c.h.b16 %v486
      %v822 = vunpack.c.l.b16 %v487
      %v823 = vunpack.c.h.b16 %v487
      %v824 = vunpack.c.l.b16 %v488
      %v825 = vunpack.c.h.b16 %v488
      %v826 = vunpack.c.l.b16 %v489
      %v827 = vunpack.c.h.b16 %v489
      %v828 = vunpack.c.l.b16 %v490
      %v829 = vunpack.c.h.b16 %v490
      %v830 = vunpack.c.l.b16 %v491
      %v831 = vunpack.c.h.b16 %v491
      %v832 = vunpack.c.l.b16 %v492
      %v833 = vunpack.c.h.b16 %v492
      %v834 = vunpack.c.l.b16 %v493
      %v835 = vunpack.c.h.b16 %v493
      %v836 = vunpack.c.l.b16 %v494
      %v837 = vunpack.c.h.b16 %v494
      %v838 = vunpack.c.l.b16 %v495
      %v839 = vunpack.c.h.b16 %v495
      %v840 = vunpack.c.l.b16 %v496
      %v841 = vunpack.c.h.b16 %v496
      %v842 = vunpack.c.l.b16 %v497
      %v843 = vunpack.c.h.b16 %v497
      %v844 = vunpack.c.l.b16 %v498
      %v845 = vunpack.c.h.b16 %v498
      %v846 = vunpack.c.l.b16 %v499
      %v847 = vunpack.c.h.b16 %v499
      %v848 = vunpack.c.l.b16 %v500
      %v849 = vunpack.c.h.b16 %v500
      %v850 = vunpack.c.l.b16 %v501
      %v851 = vunpack.c.h.b16 %v501
      %v852 = vunpack.c.l.b16 %v502
      %v853 = vunpack.c.h.b16 %v502
      %v854 = vunpack.c.l.b16 %v503
      %v855 = vunpack.c.h.b16 %v503
      %v856 = vunpack.c.l.b16 %v504
      %v857 = vunpack.c.h.b16 %v504
      %v858 = vunpack.c.l.b16 %v505
      %v859 = vunpack.c.h.b16 %v505
      %v860 = vunpack.c.l.b16 %v506
      %v861 = vunpack.c.h.b16 %v506
      %v862 = vunpack.c.l.b16 %v507
      %v863 = vunpack.c.h.b16 %v507
      %v864 = vunpack.c.l.b16 %v508
      %v865 = vunpack.c.h.b16 %v508
      %v866 = vunpack.c.l.b16 %v509
      %v867 = vunpack.c.h.b16 %v509
      %v868 = vunpack.c.l.b16 %v510
      %v869 = vunpack.c.h.b16 %v510
      %v870 = vunpack.c.l.b16 %v511
      %v871 = vunpack.c.h.b16 %v511
      %v872 = vunpack.c.l.b16 %v512
      %v873 = vunpack.c.h.b16 %v512
      %v874 = vunpack.c.l.b16 %v513
      %v875 = vunpack.c.h.b16 %v513
      %v876 = vunpack.c.l.b16 %v514
      %v877 = vunpack.c.h.b16 %v514
      %v878 = vunpack.c.l.b16 %v515
      %v879 = vunpack.c.h.b16 %v515
      %v880 = vunpack.c.l.b16 %v516
      %v881 = vunpack.c.h.b16 %v516
      %v882 = vunpack.c.l.b16 %v517
      %v883 = vunpack.c.h.b16 %v517
      %v884 = vunpack.c.l.b16 %v518
      %v885 = vunpack.c.h.b16 %v518
      %v886 = vunpack.c.l.b16 %v519
      %v887 = vunpack.c.h.b16 %v519
      %v888 = vunpack.c.l.b16 %v520
      %v889 = vunpack.c.h.b16 %v520
      %v890 = vunpack.c.l.b16 %v521
      %v891 = vunpack.c.h.b16 %v521
      %v892 = vunpack.c.l.b16 %v522
      %v893 = vunpack.c.h.b16 %v522
      %v894 = vunpack.c.l.b16 %v523
      %v895 = vunpack.c.h.b16 %v523
      %v896 = vunpack.c.l.b16 %v524
      %v897 = vunpack.c.h.b16 %v524
      %v898 = vunpack.c.l.b16 %v525
      %v899 = vunpack.c.h.b16 %v525
      %v900 = vunpack.c.l.b16 %v526
      %v901 = vunpack.c.h.b16 %v526
      %v902 = vunpack.c.l.b16 %v527
      %v903 = vunpack.c.h.b16 %v527
      %v904 = vunpack.c.l.b16 %v528
      %v905 = vunpack.c.h.b16 %v528
      %v906 = vunpack.c.l.b16 %v529
      %v907 = vunpack.c.h.b16 %v529
      %v908 = vunpack.c.l.b16 %v530
      %v909 = vunpack.c.h.b16 %v530
      %v910 = vunpack.c.l.b16 %v531
      %v911 = vunpack.c.h.b16 %v531
      %v912 = vunpack.c.l.b16 %v532
      %v913 = vunpack.c.h.b16 %v532
      %v914 = vunpack.c.l.b16 %v533
      %v915 = vunpack.c.h.b16 %v533
      %v916 = vunpack.c.l.b16 %v534
      %v917 = vunpack.c.h.b16 %v534
      %v918 = vunpack.c.l.b16 %v535
      %v919 = vunpack.c.h.b16 %v535
      %v920 = vunpack.c.l.b16 %v536
      %v921 = vunpack.c.h.b16 %v536
      %v922 = vunpack.c.l.b16 %v537
      %v923 = vunpack.c.h.b16 %v537
      %v924 = vunpack.c.l.b16 %v538
      %v925 = vunpack.c.h.b16 %v538
      %v926 = vunpack.c.l.b16 %v539
      %v927 = vunpack.c.h.b16 %v539
      %v928 = vunpack.c.l.b16 %v540
      %v929 = vunpack.c.h.b16 %v540
      %v930 = vunpack.c.l.b16 %v541
      %v931 = vunpack.c.h.b16 %v541
      %v932 = vunpack.c.l.b16 %v542
      %v933 = vunpack.c.h.b16 %v542
      %v934 = vunpack.c.l.b16 %v543
      %v935 = vunpack.c.h.b16 %v543
      %v936 = vunpack.c.l.b16 %v544
      %v937 = vunpack.c.h.b16 %v544
      %v938 = vunpack.c.l.b16 %v545
      %v939 = vunpack.c.h.b16 %v545
      %v940 = vunpack.c.l.b16 %v546
      %v941 = vunpack.c.h.b16 %v546
      %v942 = vunpack.c.l.b16 %v547
      %v943 = vunpack.c.h.b16 %v547
      %v944 = vunpack.c.l.b16 %v548
      %v945 = vunpack.c.h.b16 %v548
      %v946 = vunpack.c.l.b16 %v549
      %v947 = vunpack.c.h.b16 %v549
      %v948 = vunpack.c.l.b16 %v550
      %v949 = vunpack.c.h.b16 %v550
      %v950 = vunpack.c.l.b16 %v551
      %v951 = vunpack.c.h.b16 %v551
      %v952 = vunpack.c.l.b16 %v552
      %v953 = vunpack.c.h.b16 %v552
      %v954 = vunpack.c.l.b16 %v553
      %v955 = vunpack.c.h.b16 %v553
      %v956 = vunpack.c.l.b16 %v554
      %v957 = vunpack.c.h.b16 %v554
      %v958 = vunpack.c.l.b16 %v555
      %v959 = vunpack.c.h.b16 %v555
      %v960 = vunpack.c.l.b16 %v556
      %v961 = vunpack.c.h.b16 %v556
      %v962 = vunpack.c.l.b16 %v557
      %v963 = vunpack.c.h.b16 %v557
      %v964 = vunpack.c.l.b16 %v558
      %v965 = vunpack.c.h.b16 %v558
      %v966 = vunpack.c.l.b16 %v559
      %v967 = vunpack.c.h.b16 %v559
      %v968 = vunpack.c.l.b16 %v560
      %v969 = vunpack.c.h.b16 %v560
      %v970 = vunpack.c.l.b16 %v561
      %v971 = vunpack.c.h.b16 %v561
      %v972 = vunpack.c.l.b16 %v562
      %v973 = vunpack.c.h.b16 %v562
      %v974 = vunpack.c.l.b16 %v563
      %v975 = vunpack.c.h.b16 %v563
      %v976 = vunpack.c.l.b16 %v564
      %v977 = vunpack.c.h.b16 %v564
      %v978 = vunpack.c.l.b16 %v565
      %v979 = vunpack.c.h.b16 %v565
      %v980 = vunpack.c.l.b16 %v566
      %v981 = vunpack.c.h.b16 %v566
      %v982 = vunpack.c.l.b16 %v567
      %v983 = vunpack.c.h.b16 %v567
      %v984 = vunpack.c.l.b16 %v568
      %v985 = vunpack.c.h.b16 %v568
      %v986 = vunpack.c.l.b16 %v569
      %v987 = vunpack.c.h.b16 %v569
      %v988 = vunpack.c.l.b16 %v570
      %v989 = vunpack.c.h.b16 %v570
      %v990 = vunpack.c.l.b16 %v571
      %v991 = vunpack.c.h.b16 %v571
      %v992 = vpack.c.b16 %v740, %v736
      %v993 = vpack.c.b16 %v741, %v737
      %v994 = vpack.c.b16 %v742, %v738
      %v995 = vpack.c.b16 %v743, %v739
      %v996 = vpack.c.b16 %v748, %v744
      %v997 = vpack.c.b16 %v749, %v745
      %v998 = vpack.c.b16 %v750, %v746
      %v999 = vpack.c.b16 %v751, %v747
      %v1000 = vpack.c.b16 %v756, %v752
      %v1001 = vpack.c.b16 %v757, %v753
      %v1002 = vpack.c.b16 %v758, %v754
      %v1003 = vpack.c.b16 %v759, %v755
      %v1004 = vpack.c.b16 %v764, %v760
      %v1005 = vpack.c.b16 %v765, %v761
      %v1006 = vpack.c.b16 %v766, %v762
      %v1007 = vpack.c.b16 %v767, %v763
      %v1008 = vpack.c.b16 %v772, %v768
      %v1009 = vpack.c.b16 %v773, %v769
      %v1010 = vpack.c.b16 %v774, %v770
      %v1011 = vpack.c.b16 %v775, %v771
      %v1012 = vpack.c.b16 %v780, %v776
      %v1013 = vpack.c.b16 %v781, %v777
      %v1014 = vpack.c.b16 %v782, %v778
      %v1015 = vpack.c.b16 %v783, %v779
      %v1016 = vpack.c.b16 %v788, %v784
      %v1017 = vpack.c.b16 %v789, %v785
      %v1018 = vpack.c.b16 %v790, %v786
      %v1019 = vpack.c.b16 %v791, %v787
      %v1020 = vpack.c.b16 %v796, %v792
      %v1021 = vpack.c.b16 %v797, %v793
      %v1022 = vpack.c.b16 %v798, %v794
      %v1023 = vpack.c.b16 %v799, %v795
      %v1024 = vpack.c.b16 %v804, %v800
      %v1025 = vpack.c.b16 %v805, %v801
      %v1026 = vpack.c.b16 %v806, %v802
      %v1027 = vpack.c.b16 %v807, %v803
      %v1028 = vpack.c.b16 %v812, %v808
      %v1029 = vpack.c.b16 %v813, %v809
      %v1030 = vpack.c.b16 %v814, %v810
      %v1031 = vpack.c.b16 %v815, %v811
      %v1032 = vpack.c.b16 %v820, %v816
      %v1033 = vpack.c.b16 %v821, %v817
      %v1034 = vpack.c.b16 %v822, %v818
      %v1035 = vpack.c.b16 %v823, %v819
      %v1036 = vpack.c.b16 %v828, %v824
      %v1037 = vpack.c.b16 %v829, %v825
      %v1038 = vpack.c.b16 %v830, %v826
      %v1039 = vpack.c.b16 %v831, %v827
      %v1040 = vpack.c.b16 %v836, %v832
      %v1041 = vpack.c.b16 %v837, %v833
      %v1042 = vpack.c.b16 %v838, %v834
      %v1043 = vpack.c.b16 %v839, %v835
      %v1044 = vpack.c.b16 %v844, %v840
      %v1045 = vpack.c.b16 %v845, %v841
      %v1046 = vpack.c.b16 %v846, %v842
      %v1047 = vpack.c.b16 %v847, %v843
      %v1048 = vpack.c.b16 %v852, %v848
      %v1049 = vpack.c.b16 %v853, %v849
      %v1050 = vpack.c.b16 %v854, %v850
      %v1051 = vpack.c.b16 %v855, %v851
      %v1052 = vpack.c.b16 %v860, %v856
      %v1053 = vpack.c.b16 %v861, %v857
      %v1054 = vpack.c.b16 %v862, %v858
      %v1055 = vpack.c.b16 %v863, %v859
      %v1056 = vpack.c.b16 %v868, %v864
      %v1057 = vpack.c.b16 %v869, %v865
      %v1058 = vpack.c.b16 %v870, %v866
      %v1059 = vpack.c.b16 %v871, %v867
      %v1060 = vpack.c.b16 %v876, %v872
      %v1061 = vpack.c.b16 %v877, %v873
      %v1062 = vpack.c.b16 %v878, %v874
      %v1063 = vpack.c.b16 %v879, %v875
      %v1064 = vpack.c.b16 %v884, %v880
      %v1065 = vpack.c.b16 %v885, %v881
      %v1066 = vpack.c.b16 %v886, %v882
      %v1067 = vpack.c.b16 %v887, %v883
      %v1068 = vpack.c.b16 %v892, %v888
      %v1069 = vpack.c.b16 %v893, %v889
      %v1070 = vpack.c.b16 %v894, %v890
      %v1071 = vpack.c.b16 %v895, %v891
      %v1072 = vpack.c.b16 %v900, %v896
      %v1073 = vpack.c.b16 %v901, %v897
      %v1074 = vpack.c.b16 %v902, %v898
      %v1075 = vpack.c.b16 %v903, %v899
      %v1076 = vpack.c.b16 %v908, %v904
      %v1077 = vpack.c.b16 %v909, %v905
      %v1078 = vpack.c.b16 %v910, %v906
      %v1079 = vpack.c.b16 %v911, %v907
      %v1080 = vpack.c.b16 %v916, %v912
      %v1081 = vpack.c.b16 %v917, %v913
      %v1082 = vpack.c.b16 %v918, %v914
      %v1083 = vpack.c.b16 %v919, %v915
      %v1084 = vpack.c.b16 %v924, %v920
      %v1085 = vpack.c.b16 %v925, %v921
      %v1086 = vpack.c.b16 %v926, %v922
      %v1087 = vpack.c.b16 %v927, %v923
      %v1088 = vpack.c.b16 %v932, %v928
      %v1089 = vpack.c.b16 %v933, %v929
      %v1090 = vpack.c.b16 %v934, %v930
      %v1091 = vpack.c.b16 %v935, %v931
      %v1092 = vpack.c.b16 %v940, %v936
      %v1093 = vpack.c.b16 %v941, %v937
      %v1094 = vpack.c.b16 %v942, %v938
      %v1095 = vpack.c.b16 %v943, %v939
      %v1096 = vpack.c.b16 %v948, %v944
      %v1097 = vpack.c.b16 %v949, %v945
      %v1098 = vpack.c.b16 %v950, %v946
      %v1099 = vpack.c.b16 %v951, %v947
      %v1100 = vpack.c.b16 %v956, %v952
      %v1101 = vpack.c.b16 %v957, %v953
      %v1102 = vpack.c.b16 %v958, %v954
      %v1103 = vpack.c.b16 %v959, %v955
      %v1104 = vpack.c.b16 %v964, %v960
      %v1105 = vpack.c.b16 %v965, %v961
      %v1106 = vpack.c.b16 %v966, %v962
      %v1107 = vpack.c.b16 %v967, %v963
      %v1108 = vpack.c.b16 %v972, %v968
      %v1109 = vpack.c.b16 %v973, %v969
      %v1110 = vpack.c.b16 %v974, %v970
      %v1111 = vpack.c.b16 %v975, %v971
      %v1112 = vpack.c.b16 %v980, %v976
      %v1113 = vpack.c.b16 %v981, %v977
      %v1114 = vpack.c.b16 %v982, %v978
      %v1115 = vpack.c.b16 %v983, %v979
      %v1116 = vpack.c.b16 %v988, %v984
      %v1117 = vpack.c.b16 %v989, %v985
      %v1118 = vpack.c.b16 %v990, %v986
      %v1119 = vpack.c.b16 %v991, %v987
      %1248 = vmatprep.subr.bf16.mxu0 %v993
      %1249 = vmatpush1.bf16.msra.mxu0 %v992
      %1250 = vmatprep.subr.bf16.mxu0 %v997
      %1251 = vmatpush1.bf16.msra.mxu0 %v996
      %1252 = vmatprep.subr.bf16.mxu0 %v1001
      %1253 = vmatpush1.bf16.msra.mxu0 %v1000
      %1254 = vmatprep.subr.bf16.mxu0 %v1005
      %1255 = vmatpush1.bf16.msra.mxu0 %v1004
      %1256 = vmatprep.subr.bf16.mxu0 %v1009
      %1257 = vmatpush1.bf16.msra.mxu0 %v1008
      %1258 = vmatprep.subr.bf16.mxu0 %v1013
      %1259 = vmatpush1.bf16.msra.mxu0 %v1012
      %1260 = vmatprep.subr.bf16.mxu0 %v1017
      %1261 = vmatpush1.bf16.msra.mxu0 %v1016
      %1262 = vmatprep.subr.bf16.mxu0 %v1021
      %1263 = vmatpush1.bf16.msra.mxu0 %v1020
      %1264 = vmatprep.subr.bf16.mxu0 %v1025
      %1265 = vmatpush1.bf16.msra.mxu0 %v1024
      %1266 = vmatprep.subr.bf16.mxu0 %v1029
      %1267 = vmatpush1.bf16.msra.mxu0 %v1028
      %1268 = vmatprep.subr.bf16.mxu0 %v1033
      %1269 = vmatpush1.bf16.msra.mxu0 %v1032
      %1270 = vmatprep.subr.bf16.mxu0 %v1037
      %1271 = vmatpush1.bf16.msra.mxu0 %v1036
      %1272 = vmatprep.subr.bf16.mxu0 %v1041
      %1273 = vmatpush1.bf16.msra.mxu0 %v1040
      %1274 = vmatprep.subr.bf16.mxu0 %v1045
      %1275 = vmatpush1.bf16.msra.mxu0 %v1044
      %1276 = vmatprep.subr.bf16.mxu0 %v1049
      %1277 = vmatpush1.bf16.msra.mxu0 %v1048
      %1278 = vmatprep.subr.bf16.mxu0 %v1053
      %1279 = vmatpush1.bf16.msra.mxu0 %v1052
      %1280 = vmatprep.mubr.bf16.mxu0 %v601
      %1281 = vmatmul.mubr.bf16.gmra.mrb[0].mxu0 %v600
      %v1282 = vpop.f32.mrb[0].mxu0
      %v1283 = vadd.f32 %v577, %v1282
      %v1284 = vpop.f32.mrb[0].mxu0
      %v1285 = vadd.f32 %v581, %v1284
      %v1286 = vpop.f32.mrb[0].mxu0
      %v1287 = vpop.f32.mrb[0].mxu0
      %1288 = vdwg.mxu0
      %1289 = vmatprep.subr.bf16.mxu0 %v1057
      %1290 = vmatpush1.bf16.msra.mxu0 %v1056
      %1291 = vmatprep.subr.bf16.mxu0 %v1061
      %1292 = vmatpush1.bf16.msra.mxu0 %v1060
      %1293 = vmatprep.subr.bf16.mxu0 %v1065
      %1294 = vmatpush1.bf16.msra.mxu0 %v1064
      %1295 = vmatprep.subr.bf16.mxu0 %v1069
      %1296 = vmatpush1.bf16.msra.mxu0 %v1068
      %1297 = vmatprep.subr.bf16.mxu0 %v1073
      %1298 = vmatpush1.bf16.msra.mxu0 %v1072
      %1299 = vmatprep.subr.bf16.mxu0 %v1077
      %1300 = vmatpush1.bf16.msra.mxu0 %v1076
      %1301 = vmatprep.subr.bf16.mxu0 %v1081
      %1302 = vmatpush1.bf16.msra.mxu0 %v1080
      %1303 = vmatprep.subr.bf16.mxu0 %v1085
      %1304 = vmatpush1.bf16.msra.mxu0 %v1084
      %1305 = vmatprep.subr.bf16.mxu0 %v1089
      %1306 = vmatpush1.bf16.msra.mxu0 %v1088
      %1307 = vmatprep.subr.bf16.mxu0 %v1093
      %1308 = vmatpush1.bf16.msra.mxu0 %v1092
      %1309 = vmatprep.subr.bf16.mxu0 %v1097
      %1310 = vmatpush1.bf16.msra.mxu0 %v1096
      %1311 = vmatprep.subr.bf16.mxu0 %v1101
      %1312 = vmatpush1.bf16.msra.mxu0 %v1100
      %1313 = vmatprep.subr.bf16.mxu0 %v1105
      %1314 = vmatpush1.bf16.msra.mxu0 %v1104
      %1315 = vmatprep.subr.bf16.mxu0 %v1109
      %1316 = vmatpush1.bf16.msra.mxu0 %v1108
      %1317 = vmatprep.subr.bf16.mxu0 %v1113
      %1318 = vmatpush1.bf16.msra.mxu0 %v1112
      %1319 = vmatprep.subr.bf16.mxu0 %v1117
      %1320 = vmatpush1.bf16.msra.mxu0 %v1116
      %1321 = vmatprep.mubr.bf16.mxu0 %v603
      %1322 = vmatmul.mubr.bf16.gmra.mrb[0].mxu0 %v602
      %v1323 = vpop.f32.mrb[0].mxu0
      %v1324 = vadd.f32 %v1283, %v1323
      %v1325 = vpop.f32.mrb[0].mxu0
      %v1326 = vadd.f32 %v1285, %v1325
      %v1327 = vpop.f32.mrb[0].mxu0
      %v1328 = vpop.f32.mrb[0].mxu0
      %1329 = vdwg.mxu0
      %1330 = vmatprep.subr.bf16.mxu0 %v995
      %1331 = vmatpush1.bf16.msra.mxu0 %v994
      %1332 = vmatprep.subr.bf16.mxu0 %v999
      %1333 = vmatpush1.bf16.msra.mxu0 %v998
      %1334 = vmatprep.subr.bf16.mxu0 %v1003
      %1335 = vmatpush1.bf16.msra.mxu0 %v1002
      %1336 = vmatprep.subr.bf16.mxu0 %v1007
      %1337 = vmatpush1.bf16.msra.mxu0 %v1006
      %1338 = vmatprep.subr.bf16.mxu0 %v1011
      %1339 = vmatpush1.bf16.msra.mxu0 %v1010
      %1340 = vmatprep.subr.bf16.mxu0 %v1015
      %1341 = vmatpush1.bf16.msra.mxu0 %v1014
      %1342 = vmatprep.subr.bf16.mxu0 %v1019
      %1343 = vmatpush1.bf16.msra.mxu0 %v1018
      %1344 = vmatprep.subr.bf16.mxu0 %v1023
      %1345 = vmatpush1.bf16.msra.mxu0 %v1022
      %1346 = vmatprep.subr.bf16.mxu0 %v1027
      %1347 = vmatpush1.bf16.msra.mxu0 %v1026
      %1348 = vmatprep.subr.bf16.mxu0 %v1031
      %1349 = vmatpush1.bf16.msra.mxu0 %v1030
      %1350 = vmatprep.subr.bf16.mxu0 %v1035
      %1351 = vmatpush1.bf16.msra.mxu0 %v1034
      %1352 = vmatprep.subr.bf16.mxu0 %v1039
      %1353 = vmatpush1.bf16.msra.mxu0 %v1038
      %1354 = vmatprep.subr.bf16.mxu0 %v1043
      %1355 = vmatpush1.bf16.msra.mxu0 %v1042
      %1356 = vmatprep.subr.bf16.mxu0 %v1047
      %1357 = vmatpush1.bf16.msra.mxu0 %v1046
      %1358 = vmatprep.subr.bf16.mxu0 %v1051
      %1359 = vmatpush1.bf16.msra.mxu0 %v1050
      %1360 = vmatprep.subr.bf16.mxu0 %v1055
      %1361 = vmatpush1.bf16.msra.mxu0 %v1054
      %1362 = vmatprep.mubr.bf16.mxu0 %v601
      %1363 = vmatmul.mubr.bf16.gmra.mrb[0].mxu0 %v600
      %v1364 = vpop.f32.mrb[0].mxu0
      %v1365 = vadd.f32 %v585, %v1364
      %v1366 = vpop.f32.mrb[0].mxu0
      %v1367 = vadd.f32 %v589, %v1366
      %v1368 = vpop.f32.mrb[0].mxu0
      %v1369 = vpop.f32.mrb[0].mxu0
      %1370 = vdwg.mxu0
      %1371 = vmatprep.subr.bf16.mxu0 %v1059
      %1372 = vmatpush1.bf16.msra.mxu0 %v1058
      %1373 = vmatprep.subr.bf16.mxu0 %v1063
      %1374 = vmatpush1.bf16.msra.mxu0 %v1062
      %1375 = vmatprep.subr.bf16.mxu0 %v1067
      %1376 = vmatpush1.bf16.msra.mxu0 %v1066
      %1377 = vmatprep.subr.bf16.mxu0 %v1071
      %1378 = vmatpush1.bf16.msra.mxu0 %v1070
      %1379 = vmatprep.subr.bf16.mxu0 %v1075
      %1380 = vmatpush1.bf16.msra.mxu0 %v1074
      %1381 = vmatprep.subr.bf16.mxu0 %v1079
      %1382 = vmatpush1.bf16.msra.mxu0 %v1078
      %1383 = vmatprep.subr.bf16.mxu0 %v1083
      %1384 = vmatpush1.bf16.msra.mxu0 %v1082
      %1385 = vmatprep.subr.bf16.mxu0 %v1087
      %1386 = vmatpush1.bf16.msra.mxu0 %v1086
      %1387 = vmatprep.subr.bf16.mxu0 %v1091
      %1388 = vmatpush1.bf16.msra.mxu0 %v1090
      %1389 = vmatprep.subr.bf16.mxu0 %v1095
      %1390 = vmatpush1.bf16.msra.mxu0 %v1094
      %1391 = vmatprep.subr.bf16.mxu0 %v1099
      %1392 = vmatpush1.bf16.msra.mxu0 %v1098
      %1393 = vmatprep.subr.bf16.mxu0 %v1103
      %1394 = vmatpush1.bf16.msra.mxu0 %v1102
      %1395 = vmatprep.subr.bf16.mxu0 %v1107
      %1396 = vmatpush1.bf16.msra.mxu0 %v1106
      %1397 = vmatprep.subr.bf16.mxu0 %v1111
      %1398 = vmatpush1.bf16.msra.mxu0 %v1110
      %1399 = vmatprep.subr.bf16.mxu0 %v1115
      %1400 = vmatpush1.bf16.msra.mxu0 %v1114
      %1401 = vmatprep.subr.bf16.mxu0 %v1119
      %1402 = vmatpush1.bf16.msra.mxu0 %v1118
      %1403 = vmatprep.mubr.bf16.mxu0 %v603
      %1404 = vmatmul.mubr.bf16.gmra.mrb[0].mxu0 %v602
      %v1405 = vpop.f32.mrb[0].mxu0
      %v1406 = vadd.f32 %v1365, %v1405
      %v1407 = vpop.f32.mrb[0].mxu0
      %v1408 = vadd.f32 %v1367, %v1407
      %v1409 = vpop.f32.mrb[0].mxu0
      %v1410 = vpop.f32.mrb[0].mxu0
      %1411 = vdwg.mxu0
      %v1412 = vmax.f32 %v1324, 0.0
      %v1413 = vmax.f32 %v1326, 0.0
      %v1414 = vmax.f32 %v1406, 0.0
      %v1415 = vmax.f32 %v1408, 0.0
      %v1416 = vpack.c.bf16 %v1412, %v1412
      %v1417 = vpack.c.bf16 %v1413, %v1413
      %v1418 = vpack.c.bf16 %v1414, %v1414
      %v1419 = vpack.c.bf16 %v1415, %v1415
      %v1420 = vld [vmem:[%s3] sm:$0xff]
      %v1421 = vld [vmem:[%s3 + $0x8] sm:$0xff]
      %v1422 = vld [vmem:[%s3 + $0x10] sm:$0xff]
      %v1423 = vld [vmem:[%s3 + $0x18] sm:$0xff]
      %v1424 = vld [vmem:[%s3 + $0x20] sm:$0xff]
      %v1425 = vld [vmem:[%s3 + $0x28] sm:$0xff]
      %v1426 = vld [vmem:[%s3 + $0x30] sm:$0xff]
      %v1427 = vld [vmem:[%s3 + $0x38] sm:$0xff]
      %v1428 = vld [vmem:[%s3 + $0x40] sm:$0xff]
      %v1429 = vld [vmem:[%s3 + $0x48] sm:$0xff]
      %v1430 = vld [vmem:[%s3 + $0x50] sm:$0xff]
      %v1431 = vld [vmem:[%s3 + $0x58] sm:$0xff]
      %v1432 = vld [vmem:[%s3 + $0x60] sm:$0xff]
      %v1433 = vld [vmem:[%s3 + $0x68] sm:$0xff]
      %v1434 = vld [vmem:[%s3 + $0x70] sm:$0xff]
      %v1435 = vld [vmem:[%s3 + $0x78] sm:$0xff]
      %v1436 = vld [vmem:[%s3 + $0x80] sm:$0xff]
      %v1437 = vld [vmem:[%s3 + $0x88] sm:$0xff]
      %v1438 = vld [vmem:[%s3 + $0x90] sm:$0xff]
      %v1439 = vld [vmem:[%s3 + $0x98] sm:$0xff]
      %v1440 = vld [vmem:[%s3 + $0xa0] sm:$0xff]
      %v1441 = vld [vmem:[%s3 + $0xa8] sm:$0xff]
      %v1442 = vld [vmem:[%s3 + $0xb0] sm:$0xff]
      %v1443 = vld [vmem:[%s3 + $0xb8] sm:$0xff]
      %v1444 = vld [vmem:[%s3 + $0xc0] sm:$0xff]
      %v1445 = vld [vmem:[%s3 + $0xc8] sm:$0xff]
      %v1446 = vld [vmem:[%s3 + $0xd0] sm:$0xff]
      %v1447 = vld [vmem:[%s3 + $0xd8] sm:$0xff]
      %v1448 = vld [vmem:[%s3 + $0xe0] sm:$0xff]
      %v1449 = vld [vmem:[%s3 + $0xe8] sm:$0xff]
      %v1450 = vld [vmem:[%s3 + $0xf0] sm:$0xff]
      %v1451 = vld [vmem:[%s3 + $0xf8] sm:$0xff]
      %v1452 = vld [vmem:[%s3 + $0x100] sm:$0xff]
      %v1453 = vld [vmem:[%s3 + $0x108] sm:$0xff]
      %v1454 = vld [vmem:[%s3 + $0x110] sm:$0xff]
      %v1455 = vld [vmem:[%s3 + $0x118] sm:$0xff]
      %v1456 = vld [vmem:[%s3 + $0x120] sm:$0xff]
      %v1457 = vld [vmem:[%s3 + $0x128] sm:$0xff]
      %v1458 = vld [vmem:[%s3 + $0x130] sm:$0xff]
      %v1459 = vld [vmem:[%s3 + $0x138] sm:$0xff]
      %v1460 = vld [vmem:[%s3 + $0x140] sm:$0xff]
      %v1461 = vld [vmem:[%s3 + $0x148] sm:$0xff]
      %v1462 = vld [vmem:[%s3 + $0x150] sm:$0xff]
      %v1463 = vld [vmem:[%s3 + $0x158] sm:$0xff]
      %v1464 = vld [vmem:[%s3 + $0x160] sm:$0xff]
      %v1465 = vld [vmem:[%s3 + $0x168] sm:$0xff]
      %v1466 = vld [vmem:[%s3 + $0x170] sm:$0xff]
      %v1467 = vld [vmem:[%s3 + $0x178] sm:$0xff]
      %v1468 = vld [vmem:[%s3 + $0x180] sm:$0xff]
      %v1469 = vld [vmem:[%s3 + $0x188] sm:$0xff]
      %v1470 = vld [vmem:[%s3 + $0x190] sm:$0xff]
      %v1471 = vld [vmem:[%s3 + $0x198] sm:$0xff]
      %v1472 = vld [vmem:[%s3 + $0x1a0] sm:$0xff]
      %v1473 = vld [vmem:[%s3 + $0x1a8] sm:$0xff]
      %v1474 = vld [vmem:[%s3 + $0x1b0] sm:$0xff]
      %v1475 = vld [vmem:[%s3 + $0x1b8] sm:$0xff]
      %v1476 = vld [vmem:[%s3 + $0x1c0] sm:$0xff]
      %v1477 = vld [vmem:[%s3 + $0x1c8] sm:$0xff]
      %v1478 = vld [vmem:[%s3 + $0x1d0] sm:$0xff]
      %v1479 = vld [vmem:[%s3 + $0x1d8] sm:$0xff]
      %v1480 = vld [vmem:[%s3 + $0x1e0] sm:$0xff]
      %v1481 = vld [vmem:[%s3 + $0x1e8] sm:$0xff]
      %v1482 = vld [vmem:[%s3 + $0x1f0] sm:$0xff]
      %v1483 = vld [vmem:[%s3 + $0x1f8] sm:$0xff]
      %v1484 = vld [vmem:[%s4] sm:$0x3]
      %v1486 = vlaneseq
      %v1487 = vshrl.u32 %v1486, 7
      %v1488 = vsub.s32 0, %v1487
      %v1489 = vrot.slane %v1484, %v1488
      %v1490 = vlaneseq
      %v1491 = vshrl.u32 %v1490, 7
      %v1492 = vsub.s32 1, %v1491
      %v1493 = vrot.slane %v1484, %v1492
      %v1560 = vunpack.c.l.b16 %v1420
      %v1561 = vunpack.c.h.b16 %v1420
      %v1562 = vunpack.c.l.b16 %v1421
      %v1563 = vunpack.c.h.b16 %v1421
      %v1564 = vunpack.c.l.b16 %v1422
      %v1565 = vunpack.c.h.b16 %v1422
      %v1566 = vunpack.c.l.b16 %v1423
      %v1567 = vunpack.c.h.b16 %v1423
      %v1568 = vunpack.c.l.b16 %v1424
      %v1569 = vunpack.c.h.b16 %v1424
      %v1570 = vunpack.c.l.b16 %v1425
      %v1571 = vunpack.c.h.b16 %v1425
      %v1572 = vunpack.c.l.b16 %v1426
      %v1573 = vunpack.c.h.b16 %v1426
      %v1574 = vunpack.c.l.b16 %v1427
      %v1575 = vunpack.c.h.b16 %v1427
      %v1576 = vunpack.c.l.b16 %v1428
      %v1577 = vunpack.c.h.b16 %v1428
      %v1578 = vunpack.c.l.b16 %v1429
      %v1579 = vunpack.c.h.b16 %v1429
      %v1580 = vunpack.c.l.b16 %v1430
      %v1581 = vunpack.c.h.b16 %v1430
      %v1582 = vunpack.c.l.b16 %v1431
      %v1583 = vunpack.c.h.b16 %v1431
      %v1584 = vunpack.c.l.b16 %v1432
      %v1585 = vunpack.c.h.b16 %v1432
      %v1586 = vunpack.c.l.b16 %v1433
      %v1587 = vunpack.c.h.b16 %v1433
      %v1588 = vunpack.c.l.b16 %v1434
      %v1589 = vunpack.c.h.b16 %v1434
      %v1590 = vunpack.c.l.b16 %v1435
      %v1591 = vunpack.c.h.b16 %v1435
      %v1592 = vunpack.c.l.b16 %v1436
      %v1593 = vunpack.c.h.b16 %v1436
      %v1594 = vunpack.c.l.b16 %v1437
      %v1595 = vunpack.c.h.b16 %v1437
      %v1596 = vunpack.c.l.b16 %v1438
      %v1597 = vunpack.c.h.b16 %v1438
      %v1598 = vunpack.c.l.b16 %v1439
      %v1599 = vunpack.c.h.b16 %v1439
      %v1600 = vunpack.c.l.b16 %v1440
      %v1601 = vunpack.c.h.b16 %v1440
      %v1602 = vunpack.c.l.b16 %v1441
      %v1603 = vunpack.c.h.b16 %v1441
      %v1604 = vunpack.c.l.b16 %v1442
      %v1605 = vunpack.c.h.b16 %v1442
      %v1606 = vunpack.c.l.b16 %v1443
      %v1607 = vunpack.c.h.b16 %v1443
      %v1608 = vunpack.c.l.b16 %v1444
      %v1609 = vunpack.c.h.b16 %v1444
      %v1610 = vunpack.c.l.b16 %v1445
      %v1611 = vunpack.c.h.b16 %v1445
      %v1612 = vunpack.c.l.b16 %v1446
      %v1613 = vunpack.c.h.b16 %v1446
      %v1614 = vunpack.c.l.b16 %v1447
      %v1615 = vunpack.c.h.b16 %v1447
      %v1616 = vunpack.c.l.b16 %v1448
      %v1617 = vunpack.c.h.b16 %v1448
      %v1618 = vunpack.c.l.b16 %v1449
      %v1619 = vunpack.c.h.b16 %v1449
      %v1620 = vunpack.c.l.b16 %v1450
      %v1621 = vunpack.c.h.b16 %v1450
      %v1622 = vunpack.c.l.b16 %v1451
      %v1623 = vunpack.c.h.b16 %v1451
      %v1624 = vunpack.c.l.b16 %v1452
      %v1625 = vunpack.c.h.b16 %v1452
      %v1626 = vunpack.c.l.b16 %v1453
      %v1627 = vunpack.c.h.b16 %v1453
      %v1628 = vunpack.c.l.b16 %v1454
      %v1629 = vunpack.c.h.b16 %v1454
      %v1630 = vunpack.c.l.b16 %v1455
      %v1631 = vunpack.c.h.b16 %v1455
      %v1632 = vunpack.c.l.b16 %v1456
      %v1633 = vunpack.c.h.b16 %v1456
      %v1634 = vunpack.c.l.b16 %v1457
      %v1635 = vunpack.c.h.b16 %v1457
      %v1636 = vunpack.c.l.b16 %v1458
      %v1637 = vunpack.c.h.b16 %v1458
      %v1638 = vunpack.c.l.b16 %v1459
      %v1639 = vunpack.c.h.b16 %v1459
      %v1640 = vunpack.c.l.b16 %v1460
      %v1641 = vunpack.c.h.b16 %v1460
      %v1642 = vunpack.c.l.b16 %v1461
      %v1643 = vunpack.c.h.b16 %v1461
      %v1644 = vunpack.c.l.b16 %v1462
      %v1645 = vunpack.c.h.b16 %v1462
      %v1646 = vunpack.c.l.b16 %v1463
      %v1647 = vunpack.c.h.b16 %v1463
      %v1648 = vunpack.c.l.b16 %v1464
      %v1649 = vunpack.c.h.b16 %v1464
      %v1650 = vunpack.c.l.b16 %v1465
      %v1651 = vunpack.c.h.b16 %v1465
      %v1652 = vunpack.c.l.b16 %v1466
      %v1653 = vunpack.c.h.b16 %v1466
      %v1654 = vunpack.c.l.b16 %v1467
      %v1655 = vunpack.c.h.b16 %v1467
      %v1656 = vunpack.c.l.b16 %v1468
      %v1657 = vunpack.c.h.b16 %v1468
      %v1658 = vunpack.c.l.b16 %v1469
      %v1659 = vunpack.c.h.b16 %v1469
      %v1660 = vunpack.c.l.b16 %v1470
      %v1661 = vunpack.c.h.b16 %v1470
      %v1662 = vunpack.c.l.b16 %v1471
      %v1663 = vunpack.c.h.b16 %v1471
      %v1664 = vunpack.c.l.b16 %v1472
      %v1665 = vunpack.c.h.b16 %v1472
      %v1666 = vunpack.c.l.b16 %v1473
      %v1667 = vunpack.c.h.b16 %v1473
      %v1668 = vunpack.c.l.b16 %v1474
      %v1669 = vunpack.c.h.b16 %v1474
      %v1670 = vunpack.c.l.b16 %v1475
      %v1671 = vunpack.c.h.b16 %v1475
      %v1672 = vunpack.c.l.b16 %v1476
      %v1673 = vunpack.c.h.b16 %v1476
      %v1674 = vunpack.c.l.b16 %v1477
      %v1675 = vunpack.c.h.b16 %v1477
      %v1676 = vunpack.c.l.b16 %v1478
      %v1677 = vunpack.c.h.b16 %v1478
      %v1678 = vunpack.c.l.b16 %v1479
      %v1679 = vunpack.c.h.b16 %v1479
      %v1680 = vunpack.c.l.b16 %v1480
      %v1681 = vunpack.c.h.b16 %v1480
      %v1682 = vunpack.c.l.b16 %v1481
      %v1683 = vunpack.c.h.b16 %v1481
      %v1684 = vunpack.c.l.b16 %v1482
      %v1685 = vunpack.c.h.b16 %v1482
      %v1686 = vunpack.c.l.b16 %v1483
      %v1687 = vunpack.c.h.b16 %v1483
      %v1688 = vpack.c.b16 %v1562, %v1560
      %v1689 = vpack.c.b16 %v1563, %v1561
      %v1690 = vpack.c.b16 %v1566, %v1564
      %v1691 = vpack.c.b16 %v1567, %v1565
      %v1692 = vpack.c.b16 %v1570, %v1568
      %v1693 = vpack.c.b16 %v1571, %v1569
      %v1694 = vpack.c.b16 %v1574, %v1572
      %v1695 = vpack.c.b16 %v1575, %v1573
      %v1696 = vpack.c.b16 %v1578, %v1576
      %v1697 = vpack.c.b16 %v1579, %v1577
      %v1698 = vpack.c.b16 %v1582, %v1580
      %v1699 = vpack.c.b16 %v1583, %v1581
      %v1700 = vpack.c.b16 %v1586, %v1584
      %v1701 = vpack.c.b16 %v1587, %v1585
      %v1702 = vpack.c.b16 %v1590, %v1588
      %v1703 = vpack.c.b16 %v1591, %v1589
      %v1704 = vpack.c.b16 %v1594, %v1592
      %v1705 = vpack.c.b16 %v1595, %v1593
      %v1706 = vpack.c.b16 %v1598, %v1596
      %v1707 = vpack.c.b16 %v1599, %v1597
      %v1708 = vpack.c.b16 %v1602, %v1600
      %v1709 = vpack.c.b16 %v1603, %v1601
      %v1710 = vpack.c.b16 %v1606, %v1604
      %v1711 = vpack.c.b16 %v1607, %v1605
      %v1712 = vpack.c.b16 %v1610, %v1608
      %v1713 = vpack.c.b16 %v1611, %v1609
      %v1714 = vpack.c.b16 %v1614, %v1612
      %v1715 = vpack.c.b16 %v1615, %v1613
      %v1716 = vpack.c.b16 %v1618, %v1616
      %v1717 = vpack.c.b16 %v1619, %v1617
      %v1718 = vpack.c.b16 %v1622, %v1620
      %v1719 = vpack.c.b16 %v1623, %v1621
      %v1720 = vpack.c.b16 %v1626, %v1624
      %v1721 = vpack.c.b16 %v1627, %v1625
      %v1722 = vpack.c.b16 %v1630, %v1628
      %v1723 = vpack.c.b16 %v1631, %v1629
      %v1724 = vpack.c.b16 %v1634, %v1632
      %v1725 = vpack.c.b16 %v1635, %v1633
      %v1726 = vpack.c.b16 %v1638, %v1636
      %v1727 = vpack.c.b16 %v1639, %v1637
      %v1728 = vpack.c.b16 %v1642, %v1640
      %v1729 = vpack.c.b16 %v1643, %v1641
      %v1730 = vpack.c.b16 %v1646, %v1644
      %v1731 = vpack.c.b16 %v1647, %v1645
      %v1732 = vpack.c.b16 %v1650, %v1648
      %v1733 = vpack.c.b16 %v1651, %v1649
      %v1734 = vpack.c.b16 %v1654, %v1652
      %v1735 = vpack.c.b16 %v1655, %v1653
      %v1736 = vpack.c.b16 %v1658, %v1656
      %v1737 = vpack.c.b16 %v1659, %v1657
      %v1738 = vpack.c.b16 %v1662, %v1660
      %v1739 = vpack.c.b16 %v1663, %v1661
      %v1740 = vpack.c.b16 %v1666, %v1664
      %v1741 = vpack.c.b16 %v1667, %v1665
      %v1742 = vpack.c.b16 %v1670, %v1668
      %v1743 = vpack.c.b16 %v1671, %v1669
      %v1744 = vpack.c.b16 %v1674, %v1672
      %v1745 = vpack.c.b16 %v1675, %v1673
      %v1746 = vpack.c.b16 %v1678, %v1676
      %v1747 = vpack.c.b16 %v1679, %v1677
      %v1748 = vpack.c.b16 %v1682, %v1680
      %v1749 = vpack.c.b16 %v1683, %v1681
      %v1750 = vpack.c.b16 %v1686, %v1684
      %v1751 = vpack.c.b16 %v1687, %v1685
      %1816 = vmatprep.subr.bf16.mxu0 %v1689
      %1817 = vmatpush1.bf16.msra.mxu0 %v1688
      %1818 = vmatprep.subr.bf16.mxu0 %v1691
      %1819 = vmatpush1.bf16.msra.mxu0 %v1690
      %1820 = vmatprep.subr.bf16.mxu0 %v1693
      %1821 = vmatpush1.bf16.msra.mxu0 %v1692
      %1822 = vmatprep.subr.bf16.mxu0 %v1695
      %1823 = vmatpush1.bf16.msra.mxu0 %v1694
      %1824 = vmatprep.subr.bf16.mxu0 %v1697
      %1825 = vmatpush1.bf16.msra.mxu0 %v1696
      %1826 = vmatprep.subr.bf16.mxu0 %v1699
      %1827 = vmatpush1.bf16.msra.mxu0 %v1698
      %1828 = vmatprep.subr.bf16.mxu0 %v1701
      %1829 = vmatpush1.bf16.msra.mxu0 %v1700
      %1830 = vmatprep.subr.bf16.mxu0 %v1703
      %1831 = vmatpush1.bf16.msra.mxu0 %v1702
      %1832 = vmatprep.subr.bf16.mxu0 %v1705
      %1833 = vmatpush1.bf16.msra.mxu0 %v1704
      %1834 = vmatprep.subr.bf16.mxu0 %v1707
      %1835 = vmatpush1.bf16.msra.mxu0 %v1706
      %1836 = vmatprep.subr.bf16.mxu0 %v1709
      %1837 = vmatpush1.bf16.msra.mxu0 %v1708
      %1838 = vmatprep.subr.bf16.mxu0 %v1711
      %1839 = vmatpush1.bf16.msra.mxu0 %v1710
      %1840 = vmatprep.subr.bf16.mxu0 %v1713
      %1841 = vmatpush1.bf16.msra.mxu0 %v1712
      %1842 = vmatprep.subr.bf16.mxu0 %v1715
      %1843 = vmatpush1.bf16.msra.mxu0 %v1714
      %1844 = vmatprep.subr.bf16.mxu0 %v1717
      %1845 = vmatpush1.bf16.msra.mxu0 %v1716
      %1846 = vmatprep.subr.bf16.mxu0 %v1719
      %1847 = vmatpush1.bf16.msra.mxu0 %v1718
      %1848 = vmatprep.mubr.bf16.mxu0 %v1417
      %1849 = vmatmul.mubr.bf16.gmra.mrb[0].mxu0 %v1416
      %v1850 = vpop.f32.mrb[0].mxu0
      %v1851 = vadd.f32 %v1489, %v1850
      %v1852 = vpop.f32.mrb[0].mxu0
      %v1853 = vadd.f32 %v1493, %v1852
      %v1854 = vpop.f32.mrb[0].mxu0
      %v1855 = vpop.f32.mrb[0].mxu0
      %1856 = vdwg.mxu0
      %1857 = vmatprep.subr.bf16.mxu0 %v1721
      %1858 = vmatpush1.bf16.msra.mxu0 %v1720
      %1859 = vmatprep.subr.bf16.mxu0 %v1723
      %1860 = vmatpush1.bf16.msra.mxu0 %v1722
      %1861 = vmatprep.subr.bf16.mxu0 %v1725
      %1862 = vmatpush1.bf16.msra.mxu0 %v1724
      %1863 = vmatprep.subr.bf16.mxu0 %v1727
      %1864 = vmatpush1.bf16.msra.mxu0 %v1726
      %1865 = vmatprep.subr.bf16.mxu0 %v1729
      %1866 = vmatpush1.bf16.msra.mxu0 %v1728
      %1867 = vmatprep.subr.bf16.mxu0 %v1731
      %1868 = vmatpush1.bf16.msra.mxu0 %v1730
      %1869 = vmatprep.subr.bf16.mxu0 %v1733
      %1870 = vmatpush1.bf16.msra.mxu0 %v1732
      %1871 = vmatprep.subr.bf16.mxu0 %v1735
      %1872 = vmatpush1.bf16.msra.mxu0 %v1734
      %1873 = vmatprep.subr.bf16.mxu0 %v1737
      %1874 = vmatpush1.bf16.msra.mxu0 %v1736
      %1875 = vmatprep.subr.bf16.mxu0 %v1739
      %1876 = vmatpush1.bf16.msra.mxu0 %v1738
      %1877 = vmatprep.subr.bf16.mxu0 %v1741
      %1878 = vmatpush1.bf16.msra.mxu0 %v1740
      %1879 = vmatprep.subr.bf16.mxu0 %v1743
      %1880 = vmatpush1.bf16.msra.mxu0 %v1742
      %1881 = vmatprep.subr.bf16.mxu0 %v1745
      %1882 = vmatpush1.bf16.msra.mxu0 %v1744
      %1883 = vmatprep.subr.bf16.mxu0 %v1747
      %1884 = vmatpush1.bf16.msra.mxu0 %v1746
      %1885 = vmatprep.subr.bf16.mxu0 %v1749
      %1886 = vmatpush1.bf16.msra.mxu0 %v1748
      %1887 = vmatprep.subr.bf16.mxu0 %v1751
      %1888 = vmatpush1.bf16.msra.mxu0 %v1750
      %1889 = vmatprep.mubr.bf16.mxu0 %v1419
      %1890 = vmatmul.mubr.bf16.gmra.mrb[0].mxu0 %v1418
      %v1891 = vpop.f32.mrb[0].mxu0
      %v1892 = vadd.f32 %v1851, %v1891
      %v1893 = vpop.f32.mrb[0].mxu0
      %v1894 = vadd.f32 %v1853, %v1893
      %v1895 = vpop.f32.mrb[0].mxu0
      %v1896 = vpop.f32.mrb[0].mxu0
      %1897 = vdwg.mxu0
      %v1898 = vmax.f32 %v1892, 0.0
      %v1899 = vmax.f32 %v1894, 0.0
      %v1900 = vpack.c.bf16 %v1898, %v1898
      %v1901 = vpack.c.bf16 %v1899, %v1899
      %v1902 = vld [vmem:[%s5] sm:$0xf]
      %v1903 = vld [vmem:[%s5 + $0x4] sm:$0xf]
      %v1904 = vld [vmem:[%s5 + $0x8] sm:$0xf]
      %v1905 = vld [vmem:[%s5 + $0xc] sm:$0xf]
      %v1906 = vld [vmem:[%s5 + $0x10] sm:$0xf]
      %v1907 = vld [vmem:[%s5 + $0x14] sm:$0xf]
      %v1908 = vld [vmem:[%s5 + $0x18] sm:$0xf]
      %v1909 = vld [vmem:[%s5 + $0x1c] sm:$0xf]
      %v1910 = vld [vmem:[%s5 + $0x20] sm:$0xf]
      %v1911 = vld [vmem:[%s5 + $0x24] sm:$0xf]
      %v1912 = vld [vmem:[%s5 + $0x28] sm:$0xf]
      %v1913 = vld [vmem:[%s5 + $0x2c] sm:$0xf]
      %v1914 = vld [vmem:[%s5 + $0x30] sm:$0xf]
      %v1915 = vld [vmem:[%s5 + $0x34] sm:$0xf]
      %v1916 = vld [vmem:[%s5 + $0x38] sm:$0xf]
      %v1917 = vld [vmem:[%s5 + $0x3c] sm:$0xf]
      %v1918 = vld [vmem:[%s5 + $0x40] sm:$0xf]
      %v1919 = vld [vmem:[%s5 + $0x44] sm:$0xf]
      %v1920 = vld [vmem:[%s5 + $0x48] sm:$0xf]
      %v1921 = vld [vmem:[%s5 + $0x4c] sm:$0xf]
      %v1922 = vld [vmem:[%s5 + $0x50] sm:$0xf]
      %v1923 = vld [vmem:[%s5 + $0x54] sm:$0xf]
      %v1924 = vld [vmem:[%s5 + $0x58] sm:$0xf]
      %v1925 = vld [vmem:[%s5 + $0x5c] sm:$0xf]
      %v1926 = vld [vmem:[%s5 + $0x60] sm:$0xf]
      %v1927 = vld [vmem:[%s5 + $0x64] sm:$0xf]
      %v1928 = vld [vmem:[%s5 + $0x68] sm:$0xf]
      %v1929 = vld [vmem:[%s5 + $0x6c] sm:$0xf]
      %v1930 = vld [vmem:[%s5 + $0x70] sm:$0xf]
      %v1931 = vld [vmem:[%s5 + $0x74] sm:$0xf]
      %v1932 = vld [vmem:[%s5 + $0x78] sm:$0xf]
      %v1933 = vld [vmem:[%s5 + $0x7c] sm:$0xf]
      %v1934 = vld [vmem:[%s6] sm:$0x1]
      %v1936 = vlaneseq
      %v1937 = vshrl.u32 %v1936, 7
      %v1938 = vsub.s32 0, %v1937
      %v1939 = vrot.slane %v1934, %v1938
      %v1973 = vunpack.c.l.b16 %v1902
      %v1974 = vunpack.c.l.b16 %v1903
      %v1975 = vunpack.c.l.b16 %v1904
      %v1976 = vunpack.c.l.b16 %v1905
      %v1977 = vunpack.c.l.b16 %v1906
      %v1978 = vunpack.c.l.b16 %v1907
      %v1979 = vunpack.c.l.b16 %v1908
      %v1980 = vunpack.c.l.b16 %v1909
      %v1981 = vunpack.c.l.b16 %v1910
      %v1982 = vunpack.c.l.b16 %v1911
      %v1983 = vunpack.c.l.b16 %v1912
      %v1984 = vunpack.c.l.b16 %v1913
      %v1985 = vunpack.c.l.b16 %v1914
      %v1986 = vunpack.c.l.b16 %v1915
      %v1987 = vunpack.c.l.b16 %v1916
      %v1988 = vunpack.c.l.b16 %v1917
      %v1989 = vunpack.c.l.b16 %v1918
      %v1990 = vunpack.c.l.b16 %v1919
      %v1991 = vunpack.c.l.b16 %v1920
      %v1992 = vunpack.c.l.b16 %v1921
      %v1993 = vunpack.c.l.b16 %v1922
      %v1994 = vunpack.c.l.b16 %v1923
      %v1995 = vunpack.c.l.b16 %v1924
      %v1996 = vunpack.c.l.b16 %v1925
      %v1997 = vunpack.c.l.b16 %v1926
      %v1998 = vunpack.c.l.b16 %v1927
      %v1999 = vunpack.c.l.b16 %v1928
      %v2000 = vunpack.c.l.b16 %v1929
      %v2001 = vunpack.c.l.b16 %v1930
      %v2002 = vunpack.c.l.b16 %v1931
      %v2003 = vunpack.c.l.b16 %v1932
      %v2004 = vunpack.c.l.b16 %v1933
      %v2005 = vpack.c.b16 %v1974, %v1973
      %v2006 = vpack.c.b16 %v1976, %v1975
      %v2007 = vpack.c.b16 %v1978, %v1977
      %v2008 = vpack.c.b16 %v1980, %v1979
      %v2009 = vpack.c.b16 %v1982, %v1981
      %v2010 = vpack.c.b16 %v1984, %v1983
      %v2011 = vpack.c.b16 %v1986, %v1985
      %v2012 = vpack.c.b16 %v1988, %v1987
      %v2013 = vpack.c.b16 %v1990, %v1989
      %v2014 = vpack.c.b16 %v1992, %v1991
      %v2015 = vpack.c.b16 %v1994, %v1993
      %v2016 = vpack.c.b16 %v1996, %v1995
      %v2017 = vpack.c.b16 %v1998, %v1997
      %v2018 = vpack.c.b16 %v2000, %v1999
      %v2019 = vpack.c.b16 %v2002, %v2001
      %v2020 = vpack.c.b16 %v2004, %v2003
      %2037 = vmatprep.subr.bf16.mxu0 0
      %2038 = vmatpush1.bf16.msra.mxu0 %v2005
      %2039 = vmatprep.subr.bf16.mxu0 0
      %2040 = vmatpush1.bf16.msra.mxu0 %v2006
      %2041 = vmatprep.subr.bf16.mxu0 0
      %2042 = vmatpush1.bf16.msra.mxu0 %v2007
      %2043 = vmatprep.subr.bf16.mxu0 0
      %2044 = vmatpush1.bf16.msra.mxu0 %v2008
      %2045 = vmatprep.subr.bf16.mxu0 0
      %2046 = vmatpush1.bf16.msra.mxu0 %v2009
      %2047 = vmatprep.subr.bf16.mxu0 0
      %2048 = vmatpush1.bf16.msra.mxu0 %v2010
      %2049 = vmatprep.subr.bf16.mxu0 0
      %2050 = vmatpush1.bf16.msra.mxu0 %v2011
      %2051 = vmatprep.subr.bf16.mxu0 0
      %2052 = vmatpush1.bf16.msra.mxu0 %v2012
      %2053 = vmatprep.subr.bf16.mxu0 0
      %2054 = vmatpush1.bf16.msra.mxu0 %v2013
      %2055 = vmatprep.subr.bf16.mxu0 0
      %2056 = vmatpush1.bf16.msra.mxu0 %v2014
      %2057 = vmatprep.subr.bf16.mxu0 0
      %2058 = vmatpush1.bf16.msra.mxu0 %v2015
      %2059 = vmatprep.subr.bf16.mxu0 0
      %2060 = vmatpush1.bf16.msra.mxu0 %v2016
      %2061 = vmatprep.subr.bf16.mxu0 0
      %2062 = vmatpush1.bf16.msra.mxu0 %v2017
      %2063 = vmatprep.subr.bf16.mxu0 0
      %2064 = vmatpush1.bf16.msra.mxu0 %v2018
      %2065 = vmatprep.subr.bf16.mxu0 0
      %2066 = vmatpush1.bf16.msra.mxu0 %v2019
      %2067 = vmatprep.subr.bf16.mxu0 0
      %2068 = vmatpush1.bf16.msra.mxu0 %v2020
      %2069 = vmatprep.mubr.bf16.mxu0 %v1901
      %2070 = vmatmul.mubr.bf16.gmra.mrb[0].mxu0 %v1900
      %v2071 = vpop.f32.mrb[0].mxu0
      %v2072 = vadd.f32 %v1939, %v2071
      %v2073 = vpop.f32.mrb[0].mxu0
      %v2074 = vpop.f32.mrb[0].mxu0
      %v2075 = vpop.f32.mrb[0].mxu0
      %2076 = vdwg.mxu0
      %v2077 = vmax.f32 %v2072, 0.0
      %v2078 = vpack.c.bf16 %v2077, %v2077
      %v2079 = vld [vmem:[%s7] sm:$0xff]
      %v2080 = vld [vmem:[%s7 + $0x8] sm:$0xff]
      %v2081 = vld [vmem:[%s7 + $0x10] sm:$0xff]
      %v2082 = vld [vmem:[%s7 + $0x18] sm:$0xff]
      %v2083 = vld [vmem:[%s7 + $0x20] sm:$0xff]
      %v2084 = vld [vmem:[%s7 + $0x28] sm:$0xff]
      %v2085 = vld [vmem:[%s7 + $0x30] sm:$0xff]
      %v2086 = vld [vmem:[%s7 + $0x38] sm:$0xff]
      %v2087 = vld [vmem:[%s7 + $0x40] sm:$0xff]
      %v2088 = vld [vmem:[%s7 + $0x48] sm:$0xff]
      %v2089 = vld [vmem:[%s7 + $0x50] sm:$0xff]
      %v2090 = vld [vmem:[%s7 + $0x58] sm:$0xff]
      %v2091 = vld [vmem:[%s7 + $0x60] sm:$0xff]
      %v2092 = vld [vmem:[%s7 + $0x68] sm:$0xff]
      %v2093 = vld [vmem:[%s7 + $0x70] sm:$0xff]
      %v2094 = vld [vmem:[%s7 + $0x78] sm:$0xff]
      %v2095 = vld [vmem:[%s8] sm:$0x3]
      %v2097 = vlaneseq
      %v2098 = vshrl.u32 %v2097, 7
      %v2099 = vsub.s32 0, %v2098
      %v2100 = vrot.slane %v2095, %v2099
      %v2101 = vlaneseq
      %v2102 = vshrl.u32 %v2101, 7
      %v2103 = vsub.s32 1, %v2102
      %v2104 = vrot.slane %v2095, %v2103
      %v2123 = vunpack.c.l.b16 %v2079
      %v2124 = vunpack.c.h.b16 %v2079
      %v2125 = vunpack.c.l.b16 %v2080
      %v2126 = vunpack.c.h.b16 %v2080
      %v2127 = vunpack.c.l.b16 %v2081
      %v2128 = vunpack.c.h.b16 %v2081
      %v2129 = vunpack.c.l.b16 %v2082
      %v2130 = vunpack.c.h.b16 %v2082
      %v2131 = vunpack.c.l.b16 %v2083
      %v2132 = vunpack.c.h.b16 %v2083
      %v2133 = vunpack.c.l.b16 %v2084
      %v2134 = vunpack.c.h.b16 %v2084
      %v2135 = vunpack.c.l.b16 %v2085
      %v2136 = vunpack.c.h.b16 %v2085
      %v2137 = vunpack.c.l.b16 %v2086
      %v2138 = vunpack.c.h.b16 %v2086
      %v2139 = vunpack.c.l.b16 %v2087
      %v2140 = vunpack.c.h.b16 %v2087
      %v2141 = vunpack.c.l.b16 %v2088
      %v2142 = vunpack.c.h.b16 %v2088
      %v2143 = vunpack.c.l.b16 %v2089
      %v2144 = vunpack.c.h.b16 %v2089
      %v2145 = vunpack.c.l.b16 %v2090
      %v2146 = vunpack.c.h.b16 %v2090
      %v2147 = vunpack.c.l.b16 %v2091
      %v2148 = vunpack.c.h.b16 %v2091
      %v2149 = vunpack.c.l.b16 %v2092
      %v2150 = vunpack.c.h.b16 %v2092
      %v2151 = vunpack.c.l.b16 %v2093
      %v2152 = vunpack.c.h.b16 %v2093
      %v2153 = vunpack.c.l.b16 %v2094
      %v2154 = vunpack.c.h.b16 %v2094
      %v2155 = vpack.c.b16 %v2125, %v2123
      %v2156 = vpack.c.b16 %v2126, %v2124
      %v2157 = vpack.c.b16 %v2129, %v2127
      %v2158 = vpack.c.b16 %v2130, %v2128
      %v2159 = vpack.c.b16 %v2133, %v2131
      %v2160 = vpack.c.b16 %v2134, %v2132
      %v2161 = vpack.c.b16 %v2137, %v2135
      %v2162 = vpack.c.b16 %v2138, %v2136
      %v2163 = vpack.c.b16 %v2141, %v2139
      %v2164 = vpack.c.b16 %v2142, %v2140
      %v2165 = vpack.c.b16 %v2145, %v2143
      %v2166 = vpack.c.b16 %v2146, %v2144
      %v2167 = vpack.c.b16 %v2149, %v2147
      %v2168 = vpack.c.b16 %v2150, %v2148
      %v2169 = vpack.c.b16 %v2153, %v2151
      %v2170 = vpack.c.b16 %v2154, %v2152
      %2187 = vmatprep.subr.bf16.mxu0 %v2156
      %2188 = vmatpush1.bf16.msra.mxu0 %v2155
      %2189 = vmatprep.subr.bf16.mxu0 %v2158
      %2190 = vmatpush1.bf16.msra.mxu0 %v2157
      %2191 = vmatprep.subr.bf16.mxu0 %v2160
      %2192 = vmatpush1.bf16.msra.mxu0 %v2159
      %2193 = vmatprep.subr.bf16.mxu0 %v2162
      %2194 = vmatpush1.bf16.msra.mxu0 %v2161
      %2195 = vmatprep.subr.bf16.mxu0 %v2164
      %2196 = vmatpush1.bf16.msra.mxu0 %v2163
      %2197 = vmatprep.subr.bf16.mxu0 %v2166
      %2198 = vmatpush1.bf16.msra.mxu0 %v2165
      %2199 = vmatprep.subr.bf16.mxu0 %v2168
      %2200 = vmatpush1.bf16.msra.mxu0 %v2167
      %2201 = vmatprep.subr.bf16.mxu0 %v2170
      %2202 = vmatpush1.bf16.msra.mxu0 %v2169
      %2203 = vmatprep.subr.bf16.mxu0 0
      %2204 = vmatpush1.bf16.msra.mxu0 0
      %2205 = vmatprep.subr.bf16.mxu0 0
      %2206 = vmatpush1.bf16.msra.mxu0 0
      %2207 = vmatprep.subr.bf16.mxu0 0
      %2208 = vmatpush1.bf16.msra.mxu0 0
      %2209 = vmatprep.subr.bf16.mxu0 0
      %2210 = vmatpush1.bf16.msra.mxu0 0
      %2211 = vmatprep.subr.bf16.mxu0 0
      %2212 = vmatpush1.bf16.msra.mxu0 0
      %2213 = vmatprep.subr.bf16.mxu0 0
      %2214 = vmatpush1.bf16.msra.mxu0 0
      %2215 = vmatprep.subr.bf16.mxu0 0
      %2216 = vmatpush1.bf16.msra.mxu0 0
      %2217 = vmatprep.subr.bf16.mxu0 0
      %2218 = vmatpush1.bf16.msra.mxu0 0
      %2219 = vmatprep.mubr.bf16.mxu0 0
      %2220 = vmatmul.mubr.bf16.gmra.mrb[0].mxu0 %v2078
      %v2221 = vpop.f32.mrb[0].mxu0
      %v2222 = vadd.f32 %v2100, %v2221
      %v2223 = vpop.f32.mrb[0].mxu0
      %v2224 = vadd.f32 %v2104, %v2223
      %v2225 = vpop.f32.mrb[0].mxu0
      %v2226 = vpop.f32.mrb[0].mxu0
      %2227 = vdwg.mxu0
      %v2228 = vmax.f32 %v2222, 0.0
      %v2229 = vmax.f32 %v2224, 0.0
      %v2230 = vadd.f32 %v2228, %v1898
      %v2231 = vadd.f32 %v2229, %v1899
      %v2232 = vpack.c.bf16 %v2230, %v2230
      %v2233 = vpack.c.bf16 %v2231, %v2231
      %v2234 = vld [vmem:[%s9] sm:$0xff]
      %v2235 = vld [vmem:[%s9 + $0x8] sm:$0xff]
      %v2236 = vld [vmem:[%s9 + $0x10] sm:$0xff]
      %v2237 = vld [vmem:[%s9 + $0x18] sm:$0xff]
      %v2238 = vld [vmem:[%s9 + $0x20] sm:$0xff]
      %v2239 = vld [vmem:[%s9 + $0x28] sm:$0xff]
      %v2240 = vld [vmem:[%s9 + $0x30] sm:$0xff]
      %v2241 = vld [vmem:[%s9 + $0x38] sm:$0xff]
      %v2242 = vld [vmem:[%s9 + $0x40] sm:$0xff]
      %v2243 = vld [vmem:[%s9 + $0x48] sm:$0xff]
      %v2244 = vld [vmem:[%s9 + $0x50] sm:$0xff]
      %v2245 = vld [vmem:[%s9 + $0x58] sm:$0xff]
      %v2246 = vld [vmem:[%s9 + $0x60] sm:$0xff]
      %v2247 = vld [vmem:[%s9 + $0x68] sm:$0xff]
      %v2248 = vld [vmem:[%s9 + $0x70] sm:$0xff]
      %v2249 = vld [vmem:[%s9 + $0x78] sm:$0xff]
      %v2250 = vld [vmem:[%s9 + $0x80] sm:$0xff]
      %v2251 = vld [vmem:[%s9 + $0x88] sm:$0xff]
      %v2252 = vld [vmem:[%s9 + $0x90] sm:$0xff]
      %v2253 = vld [vmem:[%s9 + $0x98] sm:$0xff]
      %v2254 = vld [vmem:[%s9 + $0xa0] sm:$0xff]
      %v2255 = vld [vmem:[%s9 + $0xa8] sm:$0xff]
      %v2256 = vld [vmem:[%s9 + $0xb0] sm:$0xff]
      %v2257 = vld [vmem:[%s9 + $0xb8] sm:$0xff]
      %v2258 = vld [vmem:[%s9 + $0xc0] sm:$0xff]
      %v2259 = vld [vmem:[%s9 + $0xc8] sm:$0xff]
      %v2260 = vld [vmem:[%s9 + $0xd0] sm:$0xff]
      %v2261 = vld [vmem:[%s9 + $0xd8] sm:$0xff]
      %v2262 = vld [vmem:[%s9 + $0xe0] sm:$0xff]
      %v2263 = vld [vmem:[%s9 + $0xe8] sm:$0xff]
      %v2264 = vld [vmem:[%s9 + $0xf0] sm:$0xff]
      %v2265 = vld [vmem:[%s9 + $0xf8] sm:$0xff]
      %v2266 = vld [vmem:[%s9 + $0x100] sm:$0xff]
      %v2267 = vld [vmem:[%s9 + $0x108] sm:$0xff]
      %v2268 = vld [vmem:[%s9 + $0x110] sm:$0xff]
      %v2269 = vld [vmem:[%s9 + $0x118] sm:$0xff]
      %v2270 = vld [vmem:[%s9 + $0x120] sm:$0xff]
      %v2271 = vld [vmem:[%s9 + $0x128] sm:$0xff]
      %v2272 = vld [vmem:[%s9 + $0x130] sm:$0xff]
      %v2273 = vld [vmem:[%s9 + $0x138] sm:$0xff]
      %v2274 = vld [vmem:[%s9 + $0x140] sm:$0xff]
      %v2275 = vld [vmem:[%s9 + $0x148] sm:$0xff]
      %v2276 = vld [vmem:[%s9 + $0x150] sm:$0xff]
      %v2277 = vld [vmem:[%s9 + $0x158] sm:$0xff]
      %v2278 = vld [vmem:[%s9 + $0x160] sm:$0xff]
      %v2279 = vld [vmem:[%s9 + $0x168] sm:$0xff]
      %v2280 = vld [vmem:[%s9 + $0x170] sm:$0xff]
      %v2281 = vld [vmem:[%s9 + $0x178] sm:$0xff]
      %v2282 = vld [vmem:[%s9 + $0x180] sm:$0xff]
      %v2283 = vld [vmem:[%s9 + $0x188] sm:$0xff]
      %v2284 = vld [vmem:[%s9 + $0x190] sm:$0xff]
      %v2285 = vld [vmem:[%s9 + $0x198] sm:$0xff]
      %v2286 = vld [vmem:[%s9 + $0x1a0] sm:$0xff]
      %v2287 = vld [vmem:[%s9 + $0x1a8] sm:$0xff]
      %v2288 = vld [vmem:[%s9 + $0x1b0] sm:$0xff]
      %v2289 = vld [vmem:[%s9 + $0x1b8] sm:$0xff]
      %v2290 = vld [vmem:[%s9 + $0x1c0] sm:$0xff]
      %v2291 = vld [vmem:[%s9 + $0x1c8] sm:$0xff]
      %v2292 = vld [vmem:[%s9 + $0x1d0] sm:$0xff]
      %v2293 = vld [vmem:[%s9 + $0x1d8] sm:$0xff]
      %v2294 = vld [vmem:[%s9 + $0x1e0] sm:$0xff]
      %v2295 = vld [vmem:[%s9 + $0x1e8] sm:$0xff]
      %v2296 = vld [vmem:[%s9 + $0x1f0] sm:$0xff]
      %v2297 = vld [vmem:[%s9 + $0x1f8] sm:$0xff]
      %v2298 = vld [vmem:[%s10] sm:$0xf]
      %v2300 = vlaneseq
      %v2301 = vshrl.u32 %v2300, 7
      %v2302 = vsub.s32 0, %v2301
      %v2303 = vrot.slane %v2298, %v2302
      %v2304 = vlaneseq
      %v2305 = vshrl.u32 %v2304, 7
      %v2306 = vsub.s32 1, %v2305
      %v2307 = vrot.slane %v2298, %v2306
      %v2308 = vlaneseq
      %v2309 = vshrl.u32 %v2308, 7
      %v2310 = vsub.s32 2, %v2309
      %v2311 = vrot.slane %v2298, %v2310
      %v2312 = vlaneseq
      %v2313 = vshrl.u32 %v2312, 7
      %v2314 = vsub.s32 3, %v2313
      %v2315 = vrot.slane %v2298, %v2314
      %v2384 = vunpack.c.l.b16 %v2234
      %v2385 = vunpack.c.h.b16 %v2234
      %v2386 = vunpack.c.l.b16 %v2235
      %v2387 = vunpack.c.h.b16 %v2235
      %v2388 = vunpack.c.l.b16 %v2236
      %v2389 = vunpack.c.h.b16 %v2236
      %v2390 = vunpack.c.l.b16 %v2237
      %v2391 = vunpack.c.h.b16 %v2237
      %v2392 = vunpack.c.l.b16 %v2238
      %v2393 = vunpack.c.h.b16 %v2238
      %v2394 = vunpack.c.l.b16 %v2239
      %v2395 = vunpack.c.h.b16 %v2239
      %v2396 = vunpack.c.l.b16 %v2240
      %v2397 = vunpack.c.h.b16 %v2240
      %v2398 = vunpack.c.l.b16 %v2241
      %v2399 = vunpack.c.h.b16 %v2241
      %v2400 = vunpack.c.l.b16 %v2242
      %v2401 = vunpack.c.h.b16 %v2242
      %v2402 = vunpack.c.l.b16 %v2243
      %v2403 = vunpack.c.h.b16 %v2243
      %v2404 = vunpack.c.l.b16 %v2244
      %v2405 = vunpack.c.h.b16 %v2244
      %v2406 = vunpack.c.l.b16 %v2245
      %v2407 = vunpack.c.h.b16 %v2245
      %v2408 = vunpack.c.l.b16 %v2246
      %v2409 = vunpack.c.h.b16 %v2246
      %v2410 = vunpack.c.l.b16 %v2247
      %v2411 = vunpack.c.h.b16 %v2247
      %v2412 = vunpack.c.l.b16 %v2248
      %v2413 = vunpack.c.h.b16 %v2248
      %v2414 = vunpack.c.l.b16 %v2249
      %v2415 = vunpack.c.h.b16 %v2249
      %v2416 = vunpack.c.l.b16 %v2250
      %v2417 = vunpack.c.h.b16 %v2250
      %v2418 = vunpack.c.l.b16 %v2251
      %v2419 = vunpack.c.h.b16 %v2251
      %v2420 = vunpack.c.l.b16 %v2252
      %v2421 = vunpack.c.h.b16 %v2252
      %v2422 = vunpack.c.l.b16 %v2253
      %v2423 = vunpack.c.h.b16 %v2253
      %v2424 = vunpack.c.l.b16 %v2254
      %v2425 = vunpack.c.h.b16 %v2254
      %v2426 = vunpack.c.l.b16 %v2255
      %v2427 = vunpack.c.h.b16 %v2255
      %v2428 = vunpack.c.l.b16 %v2256
      %v2429 = vunpack.c.h.b16 %v2256
      %v2430 = vunpack.c.l.b16 %v2257
      %v2431 = vunpack.c.h.b16 %v2257
      %v2432 = vunpack.c.l.b16 %v2258
      %v2433 = vunpack.c.h.b16 %v2258
      %v2434 = vunpack.c.l.b16 %v2259
      %v2435 = vunpack.c.h.b16 %v2259
      %v2436 = vunpack.c.l.b16 %v2260
      %v2437 = vunpack.c.h.b16 %v2260
      %v2438 = vunpack.c.l.b16 %v2261
      %v2439 = vunpack.c.h.b16 %v2261
      %v2440 = vunpack.c.l.b16 %v2262
      %v2441 = vunpack.c.h.b16 %v2262
      %v2442 = vunpack.c.l.b16 %v2263
      %v2443 = vunpack.c.h.b16 %v2263
      %v2444 = vunpack.c.l.b16 %v2264
      %v2445 = vunpack.c.h.b16 %v2264
      %v2446 = vunpack.c.l.b16 %v2265
      %v2447 = vunpack.c.h.b16 %v2265
      %v2448 = vunpack.c.l.b16 %v2266
      %v2449 = vunpack.c.h.b16 %v2266
      %v2450 = vunpack.c.l.b16 %v2267
      %v2451 = vunpack.c.h.b16 %v2267
      %v2452 = vunpack.c.l.b16 %v2268
      %v2453 = vunpack.c.h.b16 %v2268
      %v2454 = vunpack.c.l.b16 %v2269
      %v2455 = vunpack.c.h.b16 %v2269
      %v2456 = vunpack.c.l.b16 %v2270
      %v2457 = vunpack.c.h.b16 %v2270
      %v2458 = vunpack.c.l.b16 %v2271
      %v2459 = vunpack.c.h.b16 %v2271
      %v2460 = vunpack.c.l.b16 %v2272
      %v2461 = vunpack.c.h.b16 %v2272
      %v2462 = vunpack.c.l.b16 %v2273
      %v2463 = vunpack.c.h.b16 %v2273
      %v2464 = vunpack.c.l.b16 %v2274
      %v2465 = vunpack.c.h.b16 %v2274
      %v2466 = vunpack.c.l.b16 %v2275
      %v2467 = vunpack.c.h.b16 %v2275
      %v2468 = vunpack.c.l.b16 %v2276
      %v2469 = vunpack.c.h.b16 %v2276
      %v2470 = vunpack.c.l.b16 %v2277
      %v2471 = vunpack.c.h.b16 %v2277
      %v2472 = vunpack.c.l.b16 %v2278
      %v2473 = vunpack.c.h.b16 %v2278
      %v2474 = vunpack.c.l.b16 %v2279
      %v2475 = vunpack.c.h.b16 %v2279
      %v2476 = vunpack.c.l.b16 %v2280
      %v2477 = vunpack.c.h.b16 %v2280
      %v2478 = vunpack.c.l.b16 %v2281
      %v2479 = vunpack.c.h.b16 %v2281
      %v2480 = vunpack.c.l.b16 %v2282
      %v2481 = vunpack.c.h.b16 %v2282
      %v2482 = vunpack.c.l.b16 %v2283
      %v2483 = vunpack.c.h.b16 %v2283
      %v2484 = vunpack.c.l.b16 %v2284
      %v2485 = vunpack.c.h.b16 %v2284
      %v2486 = vunpack.c.l.b16 %v2285
      %v2487 = vunpack.c.h.b16 %v2285
      %v2488 = vunpack.c.l.b16 %v2286
      %v2489 = vunpack.c.h.b16 %v2286
      %v2490 = vunpack.c.l.b16 %v2287
      %v2491 = vunpack.c.h.b16 %v2287
      %v2492 = vunpack.c.l.b16 %v2288
      %v2493 = vunpack.c.h.b16 %v2288
      %v2494 = vunpack.c.l.b16 %v2289
      %v2495 = vunpack.c.h.b16 %v2289
      %v2496 = vunpack.c.l.b16 %v2290
      %v2497 = vunpack.c.h.b16 %v2290
      %v2498 = vunpack.c.l.b16 %v2291
      %v2499 = vunpack.c.h.b16 %v2291
      %v2500 = vunpack.c.l.b16 %v2292
      %v2501 = vunpack.c.h.b16 %v2292
      %v2502 = vunpack.c.l.b16 %v2293
      %v2503 = vunpack.c.h.b16 %v2293
      %v2504 = vunpack.c.l.b16 %v2294
      %v2505 = vunpack.c.h.b16 %v2294
      %v2506 = vunpack.c.l.b16 %v2295
      %v2507 = vunpack.c.h.b16 %v2295
      %v2508 = vunpack.c.l.b16 %v2296
      %v2509 = vunpack.c.h.b16 %v2296
      %v2510 = vunpack.c.l.b16 %v2297
      %v2511 = vunpack.c.h.b16 %v2297
      %v2512 = vpack.c.b16 %v2388, %v2384
      %v2513 = vpack.c.b16 %v2389, %v2385
      %v2514 = vpack.c.b16 %v2390, %v2386
      %v2515 = vpack.c.b16 %v2391, %v2387
      %v2516 = vpack.c.b16 %v2396, %v2392
      %v2517 = vpack.c.b16 %v2397, %v2393
      %v2518 = vpack.c.b16 %v2398, %v2394
      %v2519 = vpack.c.b16 %v2399, %v2395
      %v2520 = vpack.c.b16 %v2404, %v2400
      %v2521 = vpack.c.b16 %v2405, %v2401
      %v2522 = vpack.c.b16 %v2406, %v2402
      %v2523 = vpack.c.b16 %v2407, %v2403
      %v2524 = vpack.c.b16 %v2412, %v2408
      %v2525 = vpack.c.b16 %v2413, %v2409
      %v2526 = vpack.c.b16 %v2414, %v2410
      %v2527 = vpack.c.b16 %v2415, %v2411
      %v2528 = vpack.c.b16 %v2420, %v2416
      %v2529 = vpack.c.b16 %v2421, %v2417
      %v2530 = vpack.c.b16 %v2422, %v2418
      %v2531 = vpack.c.b16 %v2423, %v2419
      %v2532 = vpack.c.b16 %v2428, %v2424
      %v2533 = vpack.c.b16 %v2429, %v2425
      %v2534 = vpack.c.b16 %v2430, %v2426
      %v2535 = vpack.c.b16 %v2431, %v2427
      %v2536 = vpack.c.b16 %v2436, %v2432
      %v2537 = vpack.c.b16 %v2437, %v2433
      %v2538 = vpack.c.b16 %v2438, %v2434
      %v2539 = vpack.c.b16 %v2439, %v2435
      %v2540 = vpack.c.b16 %v2444, %v2440
      %v2541 = vpack.c.b16 %v2445, %v2441
      %v2542 = vpack.c.b16 %v2446, %v2442
      %v2543 = vpack.c.b16 %v2447, %v2443
      %v2544 = vpack.c.b16 %v2452, %v2448
      %v2545 = vpack.c.b16 %v2453, %v2449
      %v2546 = vpack.c.b16 %v2454, %v2450
      %v2547 = vpack.c.b16 %v2455, %v2451
      %v2548 = vpack.c.b16 %v2460, %v2456
      %v2549 = vpack.c.b16 %v2461, %v2457
      %v2550 = vpack.c.b16 %v2462, %v2458
      %v2551 = vpack.c.b16 %v2463, %v2459
      %v2552 = vpack.c.b16 %v2468, %v2464
      %v2553 = vpack.c.b16 %v2469, %v2465
      %v2554 = vpack.c.b16 %v2470, %v2466
      %v2555 = vpack.c.b16 %v2471, %v2467
      %v2556 = vpack.c.b16 %v2476, %v2472
      %v2557 = vpack.c.b16 %v2477, %v2473
      %v2558 = vpack.c.b16 %v2478, %v2474
      %v2559 = vpack.c.b16 %v2479, %v2475
      %v2560 = vpack.c.b16 %v2484, %v2480
      %v2561 = vpack.c.b16 %v2485, %v2481
      %v2562 = vpack.c.b16 %v2486, %v2482
      %v2563 = vpack.c.b16 %v2487, %v2483
      %v2564 = vpack.c.b16 %v2492, %v2488
      %v2565 = vpack.c.b16 %v2493, %v2489
      %v2566 = vpack.c.b16 %v2494, %v2490
      %v2567 = vpack.c.b16 %v2495, %v2491
      %v2568 = vpack.c.b16 %v2500, %v2496
      %v2569 = vpack.c.b16 %v2501, %v2497
      %v2570 = vpack.c.b16 %v2502, %v2498
      %v2571 = vpack.c.b16 %v2503, %v2499
      %v2572 = vpack.c.b16 %v2508, %v2504
      %v2573 = vpack.c.b16 %v2509, %v2505
      %v2574 = vpack.c.b16 %v2510, %v2506
      %v2575 = vpack.c.b16 %v2511, %v2507
      %2640 = vmatprep.subr.bf16.mxu0 %v2513
      %2641 = vmatpush1.bf16.msra.mxu0 %v2512
      %2642 = vmatprep.subr.bf16.mxu0 %v2517
      %2643 = vmatpush1.bf16.msra.mxu0 %v2516
      %2644 = vmatprep.subr.bf16.mxu0 %v2521
      %2645 = vmatpush1.bf16.msra.mxu0 %v2520
      %2646 = vmatprep.subr.bf16.mxu0 %v2525
      %2647 = vmatpush1.bf16.msra.mxu0 %v2524
      %2648 = vmatprep.subr.bf16.mxu0 %v2529
      %2649 = vmatpush1.bf16.msra.mxu0 %v2528
      %2650 = vmatprep.subr.bf16.mxu0 %v2533
      %2651 = vmatpush1.bf16.msra.mxu0 %v2532
      %2652 = vmatprep.subr.bf16.mxu0 %v2537
      %2653 = vmatpush1.bf16.msra.mxu0 %v2536
      %2654 = vmatprep.subr.bf16.mxu0 %v2541
      %2655 = vmatpush1.bf16.msra.mxu0 %v2540
      %2656 = vmatprep.subr.bf16.mxu0 %v2545
      %2657 = vmatpush1.bf16.msra.mxu0 %v2544
      %2658 = vmatprep.subr.bf16.mxu0 %v2549
      %2659 = vmatpush1.bf16.msra.mxu0 %v2548
      %2660 = vmatprep.subr.bf16.mxu0 %v2553
      %2661 = vmatpush1.bf16.msra.mxu0 %v2552
      %2662 = vmatprep.subr.bf16.mxu0 %v2557
      %2663 = vmatpush1.bf16.msra.mxu0 %v2556
      %2664 = vmatprep.subr.bf16.mxu0 %v2561
      %2665 = vmatpush1.bf16.msra.mxu0 %v2560
      %2666 = vmatprep.subr.bf16.mxu0 %v2565
      %2667 = vmatpush1.bf16.msra.mxu0 %v2564
      %2668 = vmatprep.subr.bf16.mxu0 %v2569
      %2669 = vmatpush1.bf16.msra.mxu0 %v2568
      %2670 = vmatprep.subr.bf16.mxu0 %v2573
      %2671 = vmatpush1.bf16.msra.mxu0 %v2572
      %2672 = vmatprep.mubr.bf16.mxu0 %v2233
      %2673 = vmatmul.mubr.bf16.gmra.mrb[0].mxu0 %v2232
      %v2674 = vpop.f32.mrb[0].mxu0
      %v2675 = vadd.f32 %v2303, %v2674
      %v2676 = vpop.f32.mrb[0].mxu0
      %v2677 = vadd.f32 %v2307, %v2676
      %v2678 = vpop.f32.mrb[0].mxu0
      %v2679 = vpop.f32.mrb[0].mxu0
      %2680 = vdwg.mxu0
      %2681 = vmatprep.subr.bf16.mxu0 %v2515
      %2682 = vmatpush1.bf16.msra.mxu0 %v2514
      %2683 = vmatprep.subr.bf16.mxu0 %v2519
      %2684 = vmatpush1.bf16.msra.mxu0 %v2518
      %2685 = vmatprep.subr.bf16.mxu0 %v2523
      %2686 = vmatpush1.bf16.msra.mxu0 %v2522
      %2687 = vmatprep.subr.bf16.mxu0 %v2527
      %2688 = vmatpush1.bf16.msra.mxu0 %v2526
      %2689 = vmatprep.subr.bf16.mxu0 %v2531
      %2690 = vmatpush1.bf16.msra.mxu0 %v2530
      %2691 = vmatprep.subr.bf16.mxu0 %v2535
      %2692 = vmatpush1.bf16.msra.mxu0 %v2534
      %2693 = vmatprep.subr.bf16.mxu0 %v2539
      %2694 = vmatpush1.bf16.msra.mxu0 %v2538
      %2695 = vmatprep.subr.bf16.mxu0 %v2543
      %2696 = vmatpush1.bf16.msra.mxu0 %v2542
      %2697 = vmatprep.subr.bf16.mxu0 %v2547
      %2698 = vmatpush1.bf16.msra.mxu0 %v2546
      %2699 = vmatprep.subr.bf16.mxu0 %v2551
      %2700 = vmatpush1.bf16.msra.mxu0 %v2550
      %2701 = vmatprep.subr.bf16.mxu0 %v2555
      %2702 = vmatpush1.bf16.msra.mxu0 %v2554
      %2703 = vmatprep.subr.bf16.mxu0 %v2559
      %2704 = vmatpush1.bf16.msra.mxu0 %v2558
      %2705 = vmatprep.subr.bf16.mxu0 %v2563
      %2706 = vmatpush1.bf16.msra.mxu0 %v2562
      %2707 = vmatprep.subr.bf16.mxu0 %v2567
      %2708 = vmatpush1.bf16.msra.mxu0 %v2566
      %2709 = vmatprep.subr.bf16.mxu0 %v2571
      %2710 = vmatpush1.bf16.msra.mxu0 %v2570
      %2711 = vmatprep.subr.bf16.mxu0 %v2575
      %2712 = vmatpush1.bf16.msra.mxu0 %v2574
      %2713 = vmatprep.mubr.bf16.mxu0 %v2233
      %2714 = vmatmul.mubr.bf16.gmra.mrb[0].mxu0 %v2232
      %v2715 = vpop.f32.mrb[0].mxu0
      %v2716 = vadd.f32 %v2311, %v2715
      %v2717 = vpop.f32.mrb[0].mxu0
      %v2718 = vadd.f32 %v2315, %v2717
      %v2719 = vpop.f32.mrb[0].mxu0
      %v2720 = vpop.f32.mrb[0].mxu0
      %2721 = vdwg.mxu0
      %v2722 = vmax.f32 %v2675, 0.0
      %v2723 = vmax.f32 %v2677, 0.0
      %v2724 = vmax.f32 %v2716, 0.0
      %v2725 = vmax.f32 %v2718, 0.0
      %v2726 = vadd.f32 %v2722, %v1412
      %v2727 = vadd.f32 %v2723, %v1413
      %v2728 = vadd.f32 %v2724, %v1414
      %v2729 = vadd.f32 %v2725, %v1415
      %v2730 = vpack.c.bf16 %v2726, %v2726
      %v2731 = vpack.c.bf16 %v2727, %v2727
      %v2732 = vpack.c.bf16 %v2728, %v2728
      %v2733 = vpack.c.bf16 %v2729, %v2729
      %v2734 = vld [vmem:[%s11] sm:$0xff]
      %v2735 = vld [vmem:[%s11 + $0x8] sm:$0xff]
      %v2736 = vld [vmem:[%s11 + $0x10] sm:$0xff]
      %v2737 = vld [vmem:[%s11 + $0x18] sm:$0xff]
      %v2738 = vld [vmem:[%s11 + $0x20] sm:$0xff]
      %v2739 = vld [vmem:[%s11 + $0x28] sm:$0xff]
      %v2740 = vld [vmem:[%s11 + $0x30] sm:$0xff]
      %v2741 = vld [vmem:[%s11 + $0x38] sm:$0xff]
      %v2742 = vld [vmem:[%s11 + $0x40] sm:$0xff]
      %v2743 = vld [vmem:[%s11 + $0x48] sm:$0xff]
      %v2744 = vld [vmem:[%s11 + $0x50] sm:$0xff]
      %v2745 = vld [vmem:[%s11 + $0x58] sm:$0xff]
      %v2746 = vld [vmem:[%s11 + $0x60] sm:$0xff]
      %v2747 = vld [vmem:[%s11 + $0x68] sm:$0xff]
      %v2748 = vld [vmem:[%s11 + $0x70] sm:$0xff]
      %v2749 = vld [vmem:[%s11 + $0x78] sm:$0xff]
      %v2750 = vld [vmem:[%s11 + $0x80] sm:$0xff]
      %v2751 = vld [vmem:[%s11 + $0x88] sm:$0xff]
      %v2752 = vld [vmem:[%s11 + $0x90] sm:$0xff]
      %v2753 = vld [vmem:[%s11 + $0x98] sm:$0xff]
      %v2754 = vld [vmem:[%s11 + $0xa0] sm:$0xff]
      %v2755 = vld [vmem:[%s11 + $0xa8] sm:$0xff]
      %v2756 = vld [vmem:[%s11 + $0xb0] sm:$0xff]
      %v2757 = vld [vmem:[%s11 + $0xb8] sm:$0xff]
      %v2758 = vld [vmem:[%s11 + $0xc0] sm:$0xff]
      %v2759 = vld [vmem:[%s11 + $0xc8] sm:$0xff]
      %v2760 = vld [vmem:[%s11 + $0xd0] sm:$0xff]
      %v2761 = vld [vmem:[%s11 + $0xd8] sm:$0xff]
      %v2762 = vld [vmem:[%s11 + $0xe0] sm:$0xff]
      %v2763 = vld [vmem:[%s11 + $0xe8] sm:$0xff]
      %v2764 = vld [vmem:[%s11 + $0xf0] sm:$0xff]
      %v2765 = vld [vmem:[%s11 + $0xf8] sm:$0xff]
      %v2766 = vld [vmem:[%s11 + $0x100] sm:$0xff]
      %v2767 = vld [vmem:[%s11 + $0x108] sm:$0xff]
      %v2768 = vld [vmem:[%s11 + $0x110] sm:$0xff]
      %v2769 = vld [vmem:[%s11 + $0x118] sm:$0xff]
      %v2770 = vld [vmem:[%s11 + $0x120] sm:$0xff]
      %v2771 = vld [vmem:[%s11 + $0x128] sm:$0xff]
      %v2772 = vld [vmem:[%s11 + $0x130] sm:$0xff]
      %v2773 = vld [vmem:[%s11 + $0x138] sm:$0xff]
      %v2774 = vld [vmem:[%s11 + $0x140] sm:$0xff]
      %v2775 = vld [vmem:[%s11 + $0x148] sm:$0xff]
      %v2776 = vld [vmem:[%s11 + $0x150] sm:$0xff]
      %v2777 = vld [vmem:[%s11 + $0x158] sm:$0xff]
      %v2778 = vld [vmem:[%s11 + $0x160] sm:$0xff]
      %v2779 = vld [vmem:[%s11 + $0x168] sm:$0xff]
      %v2780 = vld [vmem:[%s11 + $0x170] sm:$0xff]
      %v2781 = vld [vmem:[%s11 + $0x178] sm:$0xff]
      %v2782 = vld [vmem:[%s11 + $0x180] sm:$0xff]
      %v2783 = vld [vmem:[%s11 + $0x188] sm:$0xff]
      %v2784 = vld [vmem:[%s11 + $0x190] sm:$0xff]
      %v2785 = vld [vmem:[%s11 + $0x198] sm:$0xff]
      %v2786 = vld [vmem:[%s11 + $0x1a0] sm:$0xff]
      %v2787 = vld [vmem:[%s11 + $0x1a8] sm:$0xff]
      %v2788 = vld [vmem:[%s11 + $0x1b0] sm:$0xff]
      %v2789 = vld [vmem:[%s11 + $0x1b8] sm:$0xff]
      %v2790 = vld [vmem:[%s11 + $0x1c0] sm:$0xff]
      %v2791 = vld [vmem:[%s11 + $0x1c8] sm:$0xff]
      %v2792 = vld [vmem:[%s11 + $0x1d0] sm:$0xff]
      %v2793 = vld [vmem:[%s11 + $0x1d8] sm:$0xff]
      %v2794 = vld [vmem:[%s11 + $0x1e0] sm:$0xff]
      %v2795 = vld [vmem:[%s11 + $0x1e8] sm:$0xff]
      %v2796 = vld [vmem:[%s11 + $0x1f0] sm:$0xff]
      %v2797 = vld [vmem:[%s11 + $0x1f8] sm:$0xff]
      %v2798 = vld [vmem:[%s11 + $0x200] sm:$0xff]
      %v2799 = vld [vmem:[%s11 + $0x208] sm:$0xff]
      %v2800 = vld [vmem:[%s11 + $0x210] sm:$0xff]
      %v2801 = vld [vmem:[%s11 + $0x218] sm:$0xff]
      %v2802 = vld [vmem:[%s11 + $0x220] sm:$0xff]
      %v2803 = vld [vmem:[%s11 + $0x228] sm:$0xff]
      %v2804 = vld [vmem:[%s11 + $0x230] sm:$0xff]
      %v2805 = vld [vmem:[%s11 + $0x238] sm:$0xff]
      %v2806 = vld [vmem:[%s11 + $0x240] sm:$0xff]
      %v2807 = vld [vmem:[%s11 + $0x248] sm:$0xff]
      %v2808 = vld [vmem:[%s11 + $0x250] sm:$0xff]
      %v2809 = vld [vmem:[%s11 + $0x258] sm:$0xff]
      %v2810 = vld [vmem:[%s11 + $0x260] sm:$0xff]
      %v2811 = vld [vmem:[%s11 + $0x268] sm:$0xff]
      %v2812 = vld [vmem:[%s11 + $0x270] sm:$0xff]
      %v2813 = vld [vmem:[%s11 + $0x278] sm:$0xff]
      %v2814 = vld [vmem:[%s11 + $0x280] sm:$0xff]
      %v2815 = vld [vmem:[%s11 + $0x288] sm:$0xff]
      %v2816 = vld [vmem:[%s11 + $0x290] sm:$0xff]
      %v2817 = vld [vmem:[%s11 + $0x298] sm:$0xff]
      %v2818 = vld [vmem:[%s11 + $0x2a0] sm:$0xff]
      %v2819 = vld [vmem:[%s11 + $0x2a8] sm:$0xff]
      %v2820 = vld [vmem:[%s11 + $0x2b0] sm:$0xff]
      %v2821 = vld [vmem:[%s11 + $0x2b8] sm:$0xff]
      %v2822 = vld [vmem:[%s11 + $0x2c0] sm:$0xff]
      %v2823 = vld [vmem:[%s11 + $0x2c8] sm:$0xff]
      %v2824 = vld [vmem:[%s11 + $0x2d0] sm:$0xff]
      %v2825 = vld [vmem:[%s11 + $0x2d8] sm:$0xff]
      %v2826 = vld [vmem:[%s11 + $0x2e0] sm:$0xff]
      %v2827 = vld [vmem:[%s11 + $0x2e8] sm:$0xff]
      %v2828 = vld [vmem:[%s11 + $0x2f0] sm:$0xff]
      %v2829 = vld [vmem:[%s11 + $0x2f8] sm:$0xff]
      %v2830 = vld [vmem:[%s11 + $0x300] sm:$0xff]
      %v2831 = vld [vmem:[%s11 + $0x308] sm:$0xff]
      %v2832 = vld [vmem:[%s11 + $0x310] sm:$0xff]
      %v2833 = vld [vmem:[%s11 + $0x318] sm:$0xff]
      %v2834 = vld [vmem:[%s11 + $0x320] sm:$0xff]
      %v2835 = vld [vmem:[%s11 + $0x328] sm:$0xff]
      %v2836 = vld [vmem:[%s11 + $0x330] sm:$0xff]
      %v2837 = vld [vmem:[%s11 + $0x338] sm:$0xff]
      %v2838 = vld [vmem:[%s11 + $0x340] sm:$0xff]
      %v2839 = vld [vmem:[%s11 + $0x348] sm:$0xff]
      %v2840 = vld [vmem:[%s11 + $0x350] sm:$0xff]
      %v2841 = vld [vmem:[%s11 + $0x358] sm:$0xff]
      %v2842 = vld [vmem:[%s11 + $0x360] sm:$0xff]
      %v2843 = vld [vmem:[%s11 + $0x368] sm:$0xff]
      %v2844 = vld [vmem:[%s11 + $0x370] sm:$0xff]
      %v2845 = vld [vmem:[%s11 + $0x378] sm:$0xff]
      %v2846 = vld [vmem:[%s11 + $0x380] sm:$0xff]
      %v2847 = vld [vmem:[%s11 + $0x388] sm:$0xff]
      %v2848 = vld [vmem:[%s11 + $0x390] sm:$0xff]
      %v2849 = vld [vmem:[%s11 + $0x398] sm:$0xff]
      %v2850 = vld [vmem:[%s11 + $0x3a0] sm:$0xff]
      %v2851 = vld [vmem:[%s11 + $0x3a8] sm:$0xff]
      %v2852 = vld [vmem:[%s11 + $0x3b0] sm:$0xff]
      %v2853 = vld [vmem:[%s11 + $0x3b8] sm:$0xff]
      %v2854 = vld [vmem:[%s11 + $0x3c0] sm:$0xff]
      %v2855 = vld [vmem:[%s11 + $0x3c8] sm:$0xff]
      %v2856 = vld [vmem:[%s11 + $0x3d0] sm:$0xff]
      %v2857 = vld [vmem:[%s11 + $0x3d8] sm:$0xff]
      %v2858 = vld [vmem:[%s11 + $0x3e0] sm:$0xff]
      %v2859 = vld [vmem:[%s11 + $0x3e8] sm:$0xff]
      %v2860 = vld [vmem:[%s11 + $0x3f0] sm:$0xff]
      %v2861 = vld [vmem:[%s11 + $0x3f8] sm:$0xff]
      %v2862 = vld [vmem:[%s12] sm:$0xf]
      %v2864 = vlaneseq
      %v2865 = vshrl.u32 %v2864, 7
      %v2866 = vsub.s32 0, %v2865
      %v2867 = vrot.slane %v2862, %v2866
      %v2868 = vlaneseq
      %v2869 = vshrl.u32 %v2868, 7
      %v2870 = vsub.s32 1, %v2869
      %v2871 = vrot.slane %v2862, %v2870
      %v2872 = vlaneseq
      %v2873 = vshrl.u32 %v2872, 7
      %v2874 = vsub.s32 2, %v2873
      %v2875 = vrot.slane %v2862, %v2874
      %v2876 = vlaneseq
      %v2877 = vshrl.u32 %v2876, 7
      %v2878 = vsub.s32 3, %v2877
      %v2879 = vrot.slane %v2862, %v2878
      %v3012 = vunpack.c.l.b16 %v2734
      %v3013 = vunpack.c.h.b16 %v2734
      %v3014 = vunpack.c.l.b16 %v2735
      %v3015 = vunpack.c.h.b16 %v2735
      %v3016 = vunpack.c.l.b16 %v2736
      %v3017 = vunpack.c.h.b16 %v2736
      %v3018 = vunpack.c.l.b16 %v2737
      %v3019 = vunpack.c.h.b16 %v2737
      %v3020 = vunpack.c.l.b16 %v2738
      %v3021 = vunpack.c.h.b16 %v2738
      %v3022 = vunpack.c.l.b16 %v2739
      %v3023 = vunpack.c.h.b16 %v2739
      %v3024 = vunpack.c.l.b16 %v2740
      %v3025 = vunpack.c.h.b16 %v2740
      %v3026 = vunpack.c.l.b16 %v2741
      %v3027 = vunpack.c.h.b16 %v2741
      %v3028 = vunpack.c.l.b16 %v2742
      %v3029 = vunpack.c.h.b16 %v2742
      %v3030 = vunpack.c.l.b16 %v2743
      %v3031 = vunpack.c.h.b16 %v2743
      %v3032 = vunpack.c.l.b16 %v2744
      %v3033 = vunpack.c.h.b16 %v2744
      %v3034 = vunpack.c.l.b16 %v2745
      %v3035 = vunpack.c.h.b16 %v2745
      %v3036 = vunpack.c.l.b16 %v2746
      %v3037 = vunpack.c.h.b16 %v2746
      %v3038 = vunpack.c.l.b16 %v2747
      %v3039 = vunpack.c.h.b16 %v2747
      %v3040 = vunpack.c.l.b16 %v2748
      %v3041 = vunpack.c.h.b16 %v2748
      %v3042 = vunpack.c.l.b16 %v2749
      %v3043 = vunpack.c.h.b16 %v2749
      %v3044 = vunpack.c.l.b16 %v2750
      %v3045 = vunpack.c.h.b16 %v2750
      %v3046 = vunpack.c.l.b16 %v2751
      %v3047 = vunpack.c.h.b16 %v2751
      %v3048 = vunpack.c.l.b16 %v2752
      %v3049 = vunpack.c.h.b16 %v2752
      %v3050 = vunpack.c.l.b16 %v2753
      %v3051 = vunpack.c.h.b16 %v2753
      %v3052 = vunpack.c.l.b16 %v2754
      %v3053 = vunpack.c.h.b16 %v2754
      %v3054 = vunpack.c.l.b16 %v2755
      %v3055 = vunpack.c.h.b16 %v2755
      %v3056 = vunpack.c.l.b16 %v2756
      %v3057 = vunpack.c.h.b16 %v2756
      %v3058 = vunpack.c.l.b16 %v2757
      %v3059 = vunpack.c.h.b16 %v2757
      %v3060 = vunpack.c.l.b16 %v2758
      %v3061 = vunpack.c.h.b16 %v2758
      %v3062 = vunpack.c.l.b16 %v2759
      %v3063 = vunpack.c.h.b16 %v2759
      %v3064 = vunpack.c.l.b16 %v2760
      %v3065 = vunpack.c.h.b16 %v2760
      %v3066 = vunpack.c.l.b16 %v2761
      %v3067 = vunpack.c.h.b16 %v2761
      %v3068 = vunpack.c.l.b16 %v2762
      %v3069 = vunpack.c.h.b16 %v2762
      %v3070 = vunpack.c.l.b16 %v2763
      %v3071 = vunpack.c.h.b16 %v2763
      %v3072 = vunpack.c.l.b16 %v2764
      %v3073 = vunpack.c.h.b16 %v2764
      %v3074 = vunpack.c.l.b16 %v2765
      %v3075 = vunpack.c.h.b16 %v2765
      %v3076 = vunpack.c.l.b16 %v2766
      %v3077 = vunpack.c.h.b16 %v2766
      %v3078 = vunpack.c.l.b16 %v2767
      %v3079 = vunpack.c.h.b16 %v2767
      %v3080 = vunpack.c.l.b16 %v2768
      %v3081 = vunpack.c.h.b16 %v2768
      %v3082 = vunpack.c.l.b16 %v2769
      %v3083 = vunpack.c.h.b16 %v2769
      %v3084 = vunpack.c.l.b16 %v2770
      %v3085 = vunpack.c.h.b16 %v2770
      %v3086 = vunpack.c.l.b16 %v2771
      %v3087 = vunpack.c.h.b16 %v2771
      %v3088 = vunpack.c.l.b16 %v2772
      %v3089 = vunpack.c.h.b16 %v2772
      %v3090 = vunpack.c.l.b16 %v2773
      %v3091 = vunpack.c.h.b16 %v2773
      %v3092 = vunpack.c.l.b16 %v2774
      %v3093 = vunpack.c.h.b16 %v2774
      %v3094 = vunpack.c.l.b16 %v2775
      %v3095 = vunpack.c.h.b16 %v2775
      %v3096 = vunpack.c.l.b16 %v2776
      %v3097 = vunpack.c.h.b16 %v2776
      %v3098 = vunpack.c.l.b16 %v2777
      %v3099 = vunpack.c.h.b16 %v2777
      %v3100 = vunpack.c.l.b16 %v2778
      %v3101 = vunpack.c.h.b16 %v2778
      %v3102 = vunpack.c.l.b16 %v2779
      %v3103 = vunpack.c.h.b16 %v2779
      %v3104 = vunpack.c.l.b16 %v2780
      %v3105 = vunpack.c.h.b16 %v2780
      %v3106 = vunpack.c.l.b16 %v2781
      %v3107 = vunpack.c.h.b16 %v2781
      %v3108 = vunpack.c.l.b16 %v2782
      %v3109 = vunpack.c.h.b16 %v2782
      %v3110 = vunpack.c.l.b16 %v2783
      %v3111 = vunpack.c.h.b16 %v2783
      %v3112 = vunpack.c.l.b16 %v2784
      %v3113 = vunpack.c.h.b16 %v2784
      %v3114 = vunpack.c.l.b16 %v2785
      %v3115 = vunpack.c.h.b16 %v2785
      %v3116 = vunpack.c.l.b16 %v2786
      %v3117 = vunpack.c.h.b16 %v2786
      %v3118 = vunpack.c.l.b16 %v2787
      %v3119 = vunpack.c.h.b16 %v2787
      %v3120 = vunpack.c.l.b16 %v2788
      %v3121 = vunpack.c.h.b16 %v2788
      %v3122 = vunpack.c.l.b16 %v2789
      %v3123 = vunpack.c.h.b16 %v2789
      %v3124 = vunpack.c.l.b16 %v2790
      %v3125 = vunpack.c.h.b16 %v2790
      %v3126 = vunpack.c.l.b16 %v2791
      %v3127 = vunpack.c.h.b16 %v2791
      %v3128 = vunpack.c.l.b16 %v2792
      %v3129 = vunpack.c.h.b16 %v2792
      %v3130 = vunpack.c.l.b16 %v2793
      %v3131 = vunpack.c.h.b16 %v2793
      %v3132 = vunpack.c.l.b16 %v2794
      %v3133 = vunpack.c.h.b16 %v2794
      %v3134 = vunpack.c.l.b16 %v2795
      %v3135 = vunpack.c.h.b16 %v2795
      %v3136 = vunpack.c.l.b16 %v2796
      %v3137 = vunpack.c.h.b16 %v2796
      %v3138 = vunpack.c.l.b16 %v2797
      %v3139 = vunpack.c.h.b16 %v2797
      %v3140 = vunpack.c.l.b16 %v2798
      %v3141 = vunpack.c.h.b16 %v2798
      %v3142 = vunpack.c.l.b16 %v2799
      %v3143 = vunpack.c.h.b16 %v2799
      %v3144 = vunpack.c.l.b16 %v2800
      %v3145 = vunpack.c.h.b16 %v2800
      %v3146 = vunpack.c.l.b16 %v2801
      %v3147 = vunpack.c.h.b16 %v2801
      %v3148 = vunpack.c.l.b16 %v2802
      %v3149 = vunpack.c.h.b16 %v2802
      %v3150 = vunpack.c.l.b16 %v2803
      %v3151 = vunpack.c.h.b16 %v2803
      %v3152 = vunpack.c.l.b16 %v2804
      %v3153 = vunpack.c.h.b16 %v2804
      %v3154 = vunpack.c.l.b16 %v2805
      %v3155 = vunpack.c.h.b16 %v2805
      %v3156 = vunpack.c.l.b16 %v2806
      %v3157 = vunpack.c.h.b16 %v2806
      %v3158 = vunpack.c.l.b16 %v2807
      %v3159 = vunpack.c.h.b16 %v2807
      %v3160 = vunpack.c.l.b16 %v2808
      %v3161 = vunpack.c.h.b16 %v2808
      %v3162 = vunpack.c.l.b16 %v2809
      %v3163 = vunpack.c.h.b16 %v2809
      %v3164 = vunpack.c.l.b16 %v2810
      %v3165 = vunpack.c.h.b16 %v2810
      %v3166 = vunpack.c.l.b16 %v2811
      %v3167 = vunpack.c.h.b16 %v2811
      %v3168 = vunpack.c.l.b16 %v2812
      %v3169 = vunpack.c.h.b16 %v2812
      %v3170 = vunpack.c.l.b16 %v2813
      %v3171 = vunpack.c.h.b16 %v2813
      %v3172 = vunpack.c.l.b16 %v2814
      %v3173 = vunpack.c.h.b16 %v2814
      %v3174 = vunpack.c.l.b16 %v2815
      %v3175 = vunpack.c.h.b16 %v2815
      %v3176 = vunpack.c.l.b16 %v2816
      %v3177 = vunpack.c.h.b16 %v2816
      %v3178 = vunpack.c.l.b16 %v2817
      %v3179 = vunpack.c.h.b16 %v2817
      %v3180 = vunpack.c.l.b16 %v2818
      %v3181 = vunpack.c.h.b16 %v2818
      %v3182 = vunpack.c.l.b16 %v2819
      %v3183 = vunpack.c.h.b16 %v2819
      %v3184 = vunpack.c.l.b16 %v2820
      %v3185 = vunpack.c.h.b16 %v2820
      %v3186 = vunpack.c.l.b16 %v2821
      %v3187 = vunpack.c.h.b16 %v2821
      %v3188 = vunpack.c.l.b16 %v2822
      %v3189 = vunpack.c.h.b16 %v2822
      %v3190 = vunpack.c.l.b16 %v2823
      %v3191 = vunpack.c.h.b16 %v2823
      %v3192 = vunpack.c.l.b16 %v2824
      %v3193 = vunpack.c.h.b16 %v2824
      %v3194 = vunpack.c.l.b16 %v2825
      %v3195 = vunpack.c.h.b16 %v2825
      %v3196 = vunpack.c.l.b16 %v2826
      %v3197 = vunpack.c.h.b16 %v2826
      %v3198 = vunpack.c.l.b16 %v2827
      %v3199 = vunpack.c.h.b16 %v2827
      %v3200 = vunpack.c.l.b16 %v2828
      %v3201 = vunpack.c.h.b16 %v2828
      %v3202 = vunpack.c.l.b16 %v2829
      %v3203 = vunpack.c.h.b16 %v2829
      %v3204 = vunpack.c.l.b16 %v2830
      %v3205 = vunpack.c.h.b16 %v2830
      %v3206 = vunpack.c.l.b16 %v2831
      %v3207 = vunpack.c.h.b16 %v2831
      %v3208 = vunpack.c.l.b16 %v2832
      %v3209 = vunpack.c.h.b16 %v2832
      %v3210 = vunpack.c.l.b16 %v2833
      %v3211 = vunpack.c.h.b16 %v2833
      %v3212 = vunpack.c.l.b16 %v2834
      %v3213 = vunpack.c.h.b16 %v2834
      %v3214 = vunpack.c.l.b16 %v2835
      %v3215 = vunpack.c.h.b16 %v2835
      %v3216 = vunpack.c.l.b16 %v2836
      %v3217 = vunpack.c.h.b16 %v2836
      %v3218 = vunpack.c.l.b16 %v2837
      %v3219 = vunpack.c.h.b16 %v2837
      %v3220 = vunpack.c.l.b16 %v2838
      %v3221 = vunpack.c.h.b16 %v2838
      %v3222 = vunpack.c.l.b16 %v2839
      %v3223 = vunpack.c.h.b16 %v2839
      %v3224 = vunpack.c.l.b16 %v2840
      %v3225 = vunpack.c.h.b16 %v2840
      %v3226 = vunpack.c.l.b16 %v2841
      %v3227 = vunpack.c.h.b16 %v2841
      %v3228 = vunpack.c.l.b16 %v2842
      %v3229 = vunpack.c.h.b16 %v2842
      %v3230 = vunpack.c.l.b16 %v2843
      %v3231 = vunpack.c.h.b16 %v2843
      %v3232 = vunpack.c.l.b16 %v2844
      %v3233 = vunpack.c.h.b16 %v2844
      %v3234 = vunpack.c.l.b16 %v2845
      %v3235 = vunpack.c.h.b16 %v2845
      %v3236 = vunpack.c.l.b16 %v2846
      %v3237 = vunpack.c.h.b16 %v2846
      %v3238 = vunpack.c.l.b16 %v2847
      %v3239 = vunpack.c.h.b16 %v2847
      %v3240 = vunpack.c.l.b16 %v2848
      %v3241 = vunpack.c.h.b16 %v2848
      %v3242 = vunpack.c.l.b16 %v2849
      %v3243 = vunpack.c.h.b16 %v2849
      %v3244 = vunpack.c.l.b16 %v2850
      %v3245 = vunpack.c.h.b16 %v2850
      %v3246 = vunpack.c.l.b16 %v2851
      %v3247 = vunpack.c.h.b16 %v2851
      %v3248 = vunpack.c.l.b16 %v2852
      %v3249 = vunpack.c.h.b16 %v2852
      %v3250 = vunpack.c.l.b16 %v2853
      %v3251 = vunpack.c.h.b16 %v2853
      %v3252 = vunpack.c.l.b16 %v2854
      %v3253 = vunpack.c.h.b16 %v2854
      %v3254 = vunpack.c.l.b16 %v2855
      %v3255 = vunpack.c.h.b16 %v2855
      %v3256 = vunpack.c.l.b16 %v2856
      %v3257 = vunpack.c.h.b16 %v2856
      %v3258 = vunpack.c.l.b16 %v2857
      %v3259 = vunpack.c.h.b16 %v2857
      %v3260 = vunpack.c.l.b16 %v2858
      %v3261 = vunpack.c.h.b16 %v2858
      %v3262 = vunpack.c.l.b16 %v2859
      %v3263 = vunpack.c.h.b16 %v2859
      %v3264 = vunpack.c.l.b16 %v2860
      %v3265 = vunpack.c.h.b16 %v2860
      %v3266 = vunpack.c.l.b16 %v2861
      %v3267 = vunpack.c.h.b16 %v2861
      %v3268 = vpack.c.b16 %v3016, %v3012
      %v3269 = vpack.c.b16 %v3017, %v3013
      %v3270 = vpack.c.b16 %v3018, %v3014
      %v3271 = vpack.c.b16 %v3019, %v3015
      %v3272 = vpack.c.b16 %v3024, %v3020
      %v3273 = vpack.c.b16 %v3025, %v3021
      %v3274 = vpack.c.b16 %v3026, %v3022
      %v3275 = vpack.c.b16 %v3027, %v3023
      %v3276 = vpack.c.b16 %v3032, %v3028
      %v3277 = vpack.c.b16 %v3033, %v3029
      %v3278 = vpack.c.b16 %v3034, %v3030
      %v3279 = vpack.c.b16 %v3035, %v3031
      %v3280 = vpack.c.b16 %v3040, %v3036
      %v3281 = vpack.c.b16 %v3041, %v3037
      %v3282 = vpack.c.b16 %v3042, %v3038
      %v3283 = vpack.c.b16 %v3043, %v3039
      %v3284 = vpack.c.b16 %v3048, %v3044
      %v3285 = vpack.c.b16 %v3049, %v3045
      %v3286 = vpack.c.b16 %v3050, %v3046
      %v3287 = vpack.c.b16 %v3051, %v3047
      %v3288 = vpack.c.b16 %v3056, %v3052
      %v3289 = vpack.c.b16 %v3057, %v3053
      %v3290 = vpack.c.b16 %v3058, %v3054
      %v3291 = vpack.c.b16 %v3059, %v3055
      %v3292 = vpack.c.b16 %v3064, %v3060
      %v3293 = vpack.c.b16 %v3065, %v3061
      %v3294 = vpack.c.b16 %v3066, %v3062
      %v3295 = vpack.c.b16 %v3067, %v3063
      %v3296 = vpack.c.b16 %v3072, %v3068
      %v3297 = vpack.c.b16 %v3073, %v3069
      %v3298 = vpack.c.b16 %v3074, %v3070
      %v3299 = vpack.c.b16 %v3075, %v3071
      %v3300 = vpack.c.b16 %v3080, %v3076
      %v3301 = vpack.c.b16 %v3081, %v3077
      %v3302 = vpack.c.b16 %v3082, %v3078
      %v3303 = vpack.c.b16 %v3083, %v3079
      %v3304 = vpack.c.b16 %v3088, %v3084
      %v3305 = vpack.c.b16 %v3089, %v3085
      %v3306 = vpack.c.b16 %v3090, %v3086
      %v3307 = vpack.c.b16 %v3091, %v3087
      %v3308 = vpack.c.b16 %v3096, %v3092
      %v3309 = vpack.c.b16 %v3097, %v3093
      %v3310 = vpack.c.b16 %v3098, %v3094
      %v3311 = vpack.c.b16 %v3099, %v3095
      %v3312 = vpack.c.b16 %v3104, %v3100
      %v3313 = vpack.c.b16 %v3105, %v3101
      %v3314 = vpack.c.b16 %v3106, %v3102
      %v3315 = vpack.c.b16 %v3107, %v3103
      %v3316 = vpack.c.b16 %v3112, %v3108
      %v3317 = vpack.c.b16 %v3113, %v3109
      %v3318 = vpack.c.b16 %v3114, %v3110
      %v3319 = vpack.c.b16 %v3115, %v3111
      %v3320 = vpack.c.b16 %v3120, %v3116
      %v3321 = vpack.c.b16 %v3121, %v3117
      %v3322 = vpack.c.b16 %v3122, %v3118
      %v3323 = vpack.c.b16 %v3123, %v3119
      %v3324 = vpack.c.b16 %v3128, %v3124
      %v3325 = vpack.c.b16 %v3129, %v3125
      %v3326 = vpack.c.b16 %v3130, %v3126
      %v3327 = vpack.c.b16 %v3131, %v3127
      %v3328 = vpack.c.b16 %v3136, %v3132
      %v3329 = vpack.c.b16 %v3137, %v3133
      %v3330 = vpack.c.b16 %v3138, %v3134
      %v3331 = vpack.c.b16 %v3139, %v3135
      %v3332 = vpack.c.b16 %v3144, %v3140
      %v3333 = vpack.c.b16 %v3145, %v3141
      %v3334 = vpack.c.b16 %v3146, %v3142
      %v3335 = vpack.c.b16 %v3147, %v3143
      %v3336 = vpack.c.b16 %v3152, %v3148
      %v3337 = vpack.c.b16 %v3153, %v3149
      %v3338 = vpack.c.b16 %v3154, %v3150
      %v3339 = vpack.c.b16 %v3155, %v3151
      %v3340 = vpack.c.b16 %v3160, %v3156
      %v3341 = vpack.c.b16 %v3161, %v3157
      %v3342 = vpack.c.b16 %v3162, %v3158
      %v3343 = vpack.c.b16 %v3163, %v3159
      %v3344 = vpack.c.b16 %v3168, %v3164
      %v3345 = vpack.c.b16 %v3169, %v3165
      %v3346 = vpack.c.b16 %v3170, %v3166
      %v3347 = vpack.c.b16 %v3171, %v3167
      %v3348 = vpack.c.b16 %v3176, %v3172
      %v3349 = vpack.c.b16 %v3177, %v3173
      %v3350 = vpack.c.b16 %v3178, %v3174
      %v3351 = vpack.c.b16 %v3179, %v3175
      %v3352 = vpack.c.b16 %v3184, %v3180
      %v3353 = vpack.c.b16 %v3185, %v3181
      %v3354 = vpack.c.b16 %v3186, %v3182
      %v3355 = vpack.c.b16 %v3187, %v3183
      %v3356 = vpack.c.b16 %v3192, %v3188
      %v3357 = vpack.c.b16 %v3193, %v3189
      %v3358 = vpack.c.b16 %v3194, %v3190
      %v3359 = vpack.c.b16 %v3195, %v3191
      %v3360 = vpack.c.b16 %v3200, %v3196
      %v3361 = vpack.c.b16 %v3201, %v3197
      %v3362 = vpack.c.b16 %v3202, %v3198
      %v3363 = vpack.c.b16 %v3203, %v3199
      %v3364 = vpack.c.b16 %v3208, %v3204
      %v3365 = vpack.c.b16 %v3209, %v3205
      %v3366 = vpack.c.b16 %v3210, %v3206
      %v3367 = vpack.c.b16 %v3211, %v3207
      %v3368 = vpack.c.b16 %v3216, %v3212
      %v3369 = vpack.c.b16 %v3217, %v3213
      %v3370 = vpack.c.b16 %v3218, %v3214
      %v3371 = vpack.c.b16 %v3219, %v3215
      %v3372 = vpack.c.b16 %v3224, %v3220
      %v3373 = vpack.c.b16 %v3225, %v3221
      %v3374 = vpack.c.b16 %v3226, %v3222
      %v3375 = vpack.c.b16 %v3227, %v3223
      %v3376 = vpack.c.b16 %v3232, %v3228
      %v3377 = vpack.c.b16 %v3233, %v3229
      %v3378 = vpack.c.b16 %v3234, %v3230
      %v3379 = vpack.c.b16 %v3235, %v3231
      %v3380 = vpack.c.b16 %v3240, %v3236
      %v3381 = vpack.c.b16 %v3241, %v3237
      %v3382 = vpack.c.b16 %v3242, %v3238
      %v3383 = vpack.c.b16 %v3243, %v3239
      %v3384 = vpack.c.b16 %v3248, %v3244
      %v3385 = vpack.c.b16 %v3249, %v3245
      %v3386 = vpack.c.b16 %v3250, %v3246
      %v3387 = vpack.c.b16 %v3251, %v3247
      %v3388 = vpack.c.b16 %v3256, %v3252
      %v3389 = vpack.c.b16 %v3257, %v3253
      %v3390 = vpack.c.b16 %v3258, %v3254
      %v3391 = vpack.c.b16 %v3259, %v3255
      %v3392 = vpack.c.b16 %v3264, %v3260
      %v3393 = vpack.c.b16 %v3265, %v3261
      %v3394 = vpack.c.b16 %v3266, %v3262
      %v3395 = vpack.c.b16 %v3267, %v3263
      %3524 = vmatprep.subr.bf16.mxu0 %v3269
      %3525 = vmatpush1.bf16.msra.mxu0 %v3268
      %3526 = vmatprep.subr.bf16.mxu0 %v3273
      %3527 = vmatpush1.bf16.msra.mxu0 %v3272
      %3528 = vmatprep.subr.bf16.mxu0 %v3277
      %3529 = vmatpush1.bf16.msra.mxu0 %v3276
      %3530 = vmatprep.subr.bf16.mxu0 %v3281
      %3531 = vmatpush1.bf16.msra.mxu0 %v3280
      %3532 = vmatprep.subr.bf16.mxu0 %v3285
      %3533 = vmatpush1.bf16.msra.mxu0 %v3284
      %3534 = vmatprep.subr.bf16.mxu0 %v3289
      %3535 = vmatpush1.bf16.msra.mxu0 %v3288
      %3536 = vmatprep.subr.bf16.mxu0 %v3293
      %3537 = vmatpush1.bf16.msra.mxu0 %v3292
      %3538 = vmatprep.subr.bf16.mxu0 %v3297
      %3539 = vmatpush1.bf16.msra.mxu0 %v3296
      %3540 = vmatprep.subr.bf16.mxu0 %v3301
      %3541 = vmatpush1.bf16.msra.mxu0 %v3300
      %3542 = vmatprep.subr.bf16.mxu0 %v3305
      %3543 = vmatpush1.bf16.msra.mxu0 %v3304
      %3544 = vmatprep.subr.bf16.mxu0 %v3309
      %3545 = vmatpush1.bf16.msra.mxu0 %v3308
      %3546 = vmatprep.subr.bf16.mxu0 %v3313
      %3547 = vmatpush1.bf16.msra.mxu0 %v3312
      %3548 = vmatprep.subr.bf16.mxu0 %v3317
      %3549 = vmatpush1.bf16.msra.mxu0 %v3316
      %3550 = vmatprep.subr.bf16.mxu0 %v3321
      %3551 = vmatpush1.bf16.msra.mxu0 %v3320
      %3552 = vmatprep.subr.bf16.mxu0 %v3325
      %3553 = vmatpush1.bf16.msra.mxu0 %v3324
      %3554 = vmatprep.subr.bf16.mxu0 %v3329
      %3555 = vmatpush1.bf16.msra.mxu0 %v3328
      %3556 = vmatprep.mubr.bf16.mxu0 %v2731
      %3557 = vmatmul.mubr.bf16.gmra.mrb[0].mxu0 %v2730
      %v3558 = vpop.f32.mrb[0].mxu0
      %v3559 = vadd.f32 %v2867, %v3558
      %v3560 = vpop.f32.mrb[0].mxu0
      %v3561 = vadd.f32 %v2871, %v3560
      %v3562 = vpop.f32.mrb[0].mxu0
      %v3563 = vpop.f32.mrb[0].mxu0
      %3564 = vdwg.mxu0
      %3565 = vmatprep.subr.bf16.mxu0 %v3333
      %3566 = vmatpush1.bf16.msra.mxu0 %v3332
      %3567 = vmatprep.subr.bf16.mxu0 %v3337
      %3568 = vmatpush1.bf16.msra.mxu0 %v3336
      %3569 = vmatprep.subr.bf16.mxu0 %v3341
      %3570 = vmatpush1.bf16.msra.mxu0 %v3340
      %3571 = vmatprep.subr.bf16.mxu0 %v3345
      %3572 = vmatpush1.bf16.msra.mxu0 %v3344
      %3573 = vmatprep.subr.bf16.mxu0 %v3349
      %3574 = vmatpush1.bf16.msra.mxu0 %v3348
      %3575 = vmatprep.subr.bf16.mxu0 %v3353
      %3576 = vmatpush1.bf16.msra.mxu0 %v3352
      %3577 = vmatprep.subr.bf16.mxu0 %v3357
      %3578 = vmatpush1.bf16.msra.mxu0 %v3356
      %3579 = vmatprep.subr.bf16.mxu0 %v3361
      %3580 = vmatpush1.bf16.msra.mxu0 %v3360
      %3581 = vmatprep.subr.bf16.mxu0 %v3365
      %3582 = vmatpush1.bf16.msra.mxu0 %v3364
      %3583 = vmatprep.subr.bf16.mxu0 %v3369
      %3584 = vmatpush1.bf16.msra.mxu0 %v3368
      %3585 = vmatprep.subr.bf16.mxu0 %v3373
      %3586 = vmatpush1.bf16.msra.mxu0 %v3372
      %3587 = vmatprep.subr.bf16.mxu0 %v3377
      %3588 = vmatpush1.bf16.msra.mxu0 %v3376
      %3589 = vmatprep.subr.bf16.mxu0 %v3381
      %3590 = vmatpush1.bf16.msra.mxu0 %v3380
      %3591 = vmatprep.subr.bf16.mxu0 %v3385
      %3592 = vmatpush1.bf16.msra.mxu0 %v3384
      %3593 = vmatprep.subr.bf16.mxu0 %v3389
      %3594 = vmatpush1.bf16.msra.mxu0 %v3388
      %3595 = vmatprep.subr.bf16.mxu0 %v3393
      %3596 = vmatpush1.bf16.msra.mxu0 %v3392
      %3597 = vmatprep.mubr.bf16.mxu0 %v2733
      %3598 = vmatmul.mubr.bf16.gmra.mrb[0].mxu0 %v2732
      %v3599 = vpop.f32.mrb[0].mxu0
      %v3600 = vadd.f32 %v3559, %v3599
      %v3601 = vpop.f32.mrb[0].mxu0
      %v3602 = vadd.f32 %v3561, %v3601
      %v3603 = vpop.f32.mrb[0].mxu0
      %v3604 = vpop.f32.mrb[0].mxu0
      %3605 = vdwg.mxu0
      %3606 = vmatprep.subr.bf16.mxu0 %v3271
      %3607 = vmatpush1.bf16.msra.mxu0 %v3270
      %3608 = vmatprep.subr.bf16.mxu0 %v3275
      %3609 = vmatpush1.bf16.msra.mxu0 %v3274
      %3610 = vmatprep.subr.bf16.mxu0 %v3279
      %3611 = vmatpush1.bf16.msra.mxu0 %v3278
      %3612 = vmatprep.subr.bf16.mxu0 %v3283
      %3613 = vmatpush1.bf16.msra.mxu0 %v3282
      %3614 = vmatprep.subr.bf16.mxu0 %v3287
      %3615 = vmatpush1.bf16.msra.mxu0 %v3286
      %3616 = vmatprep.subr.bf16.mxu0 %v3291
      %3617 = vmatpush1.bf16.msra.mxu0 %v3290
      %3618 = vmatprep.subr.bf16.mxu0 %v3295
      %3619 = vmatpush1.bf16.msra.mxu0 %v3294
      %3620 = vmatprep.subr.bf16.mxu0 %v3299
      %3621 = vmatpush1.bf16.msra.mxu0 %v3298
      %3622 = vmatprep.subr.bf16.mxu0 %v3303
      %3623 = vmatpush1.bf16.msra.mxu0 %v3302
      %3624 = vmatprep.subr.bf16.mxu0 %v3307
      %3625 = vmatpush1.bf16.msra.mxu0 %v3306
      %3626 = vmatprep.subr.bf16.mxu0 %v3311
      %3627 = vmatpush1.bf16.msra.mxu0 %v3310
      %3628 = vmatprep.subr.bf16.mxu0 %v3315
      %3629 = vmatpush1.bf16.msra.mxu0 %v3314
      %3630 = vmatprep.subr.bf16.mxu0 %v3319
      %3631 = vmatpush1.bf16.msra.mxu0 %v3318
      %3632 = vmatprep.subr.bf16.mxu0 %v3323
      %3633 = vmatpush1.bf16.msra.mxu0 %v3322
      %3634 = vmatprep.subr.bf16.mxu0 %v3327
      %3635 = vmatpush1.bf16.msra.mxu0 %v3326
      %3636 = vmatprep.subr.bf16.mxu0 %v3331
      %3637 = vmatpush1.bf16.msra.mxu0 %v3330
      %3638 = vmatprep.mubr.bf16.mxu0 %v2731
      %3639 = vmatmul.mubr.bf16.gmra.mrb[0].mxu0 %v2730
      %v3640 = vpop.f32.mrb[0].mxu0
      %v3641 = vadd.f32 %v2875, %v3640
      %v3642 = vpop.f32.mrb[0].mxu0
      %v3643 = vadd.f32 %v2879, %v3642
      %v3644 = vpop.f32.mrb[0].mxu0
      %v3645 = vpop.f32.mrb[0].mxu0
      %3646 = vdwg.mxu0
      %3647 = vmatprep.subr.bf16.mxu0 %v3335
      %3648 = vmatpush1.bf16.msra.mxu0 %v3334
      %3649 = vmatprep.subr.bf16.mxu0 %v3339
      %3650 = vmatpush1.bf16.msra.mxu0 %v3338
      %3651 = vmatprep.subr.bf16.mxu0 %v3343
      %3652 = vmatpush1.bf16.msra.mxu0 %v3342
      %3653 = vmatprep.subr.bf16.mxu0 %v3347
      %3654 = vmatpush1.bf16.msra.mxu0 %v3346
      %3655 = vmatprep.subr.bf16.mxu0 %v3351
      %3656 = vmatpush1.bf16.msra.mxu0 %v3350
      %3657 = vmatprep.subr.bf16.mxu0 %v3355
      %3658 = vmatpush1.bf16.msra.mxu0 %v3354
      %3659 = vmatprep.subr.bf16.mxu0 %v3359
      %3660 = vmatpush1.bf16.msra.mxu0 %v3358
      %3661 = vmatprep.subr.bf16.mxu0 %v3363
      %3662 = vmatpush1.bf16.msra.mxu0 %v3362
      %3663 = vmatprep.subr.bf16.mxu0 %v3367
      %3664 = vmatpush1.bf16.msra.mxu0 %v3366
      %3665 = vmatprep.subr.bf16.mxu0 %v3371
      %3666 = vmatpush1.bf16.msra.mxu0 %v3370
      %3667 = vmatprep.subr.bf16.mxu0 %v3375
      %3668 = vmatpush1.bf16.msra.mxu0 %v3374
      %3669 = vmatprep.subr.bf16.mxu0 %v3379
      %3670 = vmatpush1.bf16.msra.mxu0 %v3378
      %3671 = vmatprep.subr.bf16.mxu0 %v3383
      %3672 = vmatpush1.bf16.msra.mxu0 %v3382
      %3673 = vmatprep.subr.bf16.mxu0 %v3387
      %3674 = vmatpush1.bf16.msra.mxu0 %v3386
      %3675 = vmatprep.subr.bf16.mxu0 %v3391
      %3676 = vmatpush1.bf16.msra.mxu0 %v3390
      %3677 = vmatprep.subr.bf16.mxu0 %v3395
      %3678 = vmatpush1.bf16.msra.mxu0 %v3394
      %3679 = vmatprep.mubr.bf16.mxu0 %v2733
      %3680 = vmatmul.mubr.bf16.gmra.mrb[0].mxu0 %v2732
      %v3681 = vpop.f32.mrb[0].mxu0
      %v3682 = vadd.f32 %v3641, %v3681
      %v3683 = vpop.f32.mrb[0].mxu0
      %v3684 = vadd.f32 %v3643, %v3683
      %v3685 = vpop.f32.mrb[0].mxu0
      %v3686 = vpop.f32.mrb[0].mxu0
      %3687 = vdwg.mxu0
      %v3688 = vand.u32 2147483647, %v3600
      %v3689 = vand.u32 2147483647, %v3682
      %v3690 = vmin.f32 %v3688, %v3689
      %v3691 = vmax.f32 %v3688, %v3689
      %v3692 = vrcp.pop %v3691
      %v3693 = vmul.f32 %v3690, %v3692
      %v3694 = vmul.f32 %v3693, %v3693
      %v3695 = vmul.f32 0.002785687, %v3694
      %v3696 = vadd.f32 %v3695, -0.015866
      %v3697 = vmul.f32 %v3696, %v3694
      %v3698 = vadd.f32 %v3697, 0.04247222
      %v3699 = vmul.f32 %v3698, %v3694
      %v3700 = vadd.f32 %v3699, -0.074975304
      %v3701 = vmul.f32 %v3700, %v3694
      %v3702 = vadd.f32 %v3701, 0.1064488
      %v3703 = vmul.f32 %v3702, %v3694
      %v3704 = vadd.f32 %v3703, -0.14207031
      %v3705 = vmul.f32 %v3704, %v3694
      %v3706 = vadd.f32 %v3705, 0.19993454
      %v3707 = vmul.f32 %v3706, %v3694
      %v3708 = vadd.f32 %v3707, -0.33333147
      %v3709 = vmul.f32 %v3708, %v3694
      %v3710 = vmul.f32 %v3709, %v3693
      %v3711 = vadd.f32 %v3710, %v3693
      %vm3712 = vcmp.gt.f32.partialorder %v3689, %v3688
      %v3713 = vsub.f32 1.5707964, %v3711
      %v3714 = vsel %vm3712, %v3713, %v3711
      %vm3715 = vcmp.lt.f32.partialorder %v3600, 0.0
      %v3716 = vsub.f32 3.1415927, %v3714
      %v3717 = vsel %vm3715, %v3716, %v3714
      %vm3718 = vcmp.lt.s32.totalorder %v3600, 0
      %v3719 = vsel %vm3718, 3.1415927, 0.0
      %vm3720 = vcmp.eq.f32.partialorder %v3682, 0.0
      %v3721 = vsel %vm3720, %v3719, %v3717
      %vm3722 = vcmp.ne.f32.partialorder %v3600, %v3600
      %vm3723 = vcmp.ne.f32.partialorder %v3682, %v3682
      %vm3724 = vmor %vm3722, %vm3723
      %v3725 = vsel %vm3724, nan, %v3721
      %vm3726 = vcmp.lt.f32.partialorder %v3600, 0.0
      %v3727 = vsel %vm3726, 2.3561945, 0.7853982
      %vm3728 = vcmp.eq.s32.totalorder %v3688, inf
      %vm3729 = vcmp.eq.s32.totalorder %v3689, inf
      %vm3730 = vmand %vm3728, %vm3729
      %v3731 = vsel %vm3730, %v3727, %v3725
      %v3732 = vand.u32 2147483647, %v3731
      %v3733 = vand.u32 %v3682, 2147483648
      %v3734 = vor.u32 %v3732, %v3733
      %v3735 = vand.u32 2147483647, %v3602
      %v3736 = vand.u32 2147483647, %v3684
      %v3737 = vmin.f32 %v3735, %v3736
      %v3738 = vmax.f32 %v3735, %v3736
      %v3739 = vrcp.pop %v3738
      %v3740 = vmul.f32 %v3737, %v3739
      %v3741 = vmul.f32 %v3740, %v3740
      %v3742 = vmul.f32 0.002785687, %v3741
      %v3743 = vadd.f32 %v3742, -0.015866
      %v3744 = vmul.f32 %v3743, %v3741
      %v3745 = vadd.f32 %v3744, 0.04247222
      %v3746 = vmul.f32 %v3745, %v3741
      %v3747 = vadd.f32 %v3746, -0.074975304
      %v3748 = vmul.f32 %v3747, %v3741
      %v3749 = vadd.f32 %v3748, 0.1064488
      %v3750 = vmul.f32 %v3749, %v3741
      %v3751 = vadd.f32 %v3750, -0.14207031
      %v3752 = vmul.f32 %v3751, %v3741
      %v3753 = vadd.f32 %v3752, 0.19993454
      %v3754 = vmul.f32 %v3753, %v3741
      %v3755 = vadd.f32 %v3754, -0.33333147
      %v3756 = vmul.f32 %v3755, %v3741
      %v3757 = vmul.f32 %v3756, %v3740
      %v3758 = vadd.f32 %v3757, %v3740
      %vm3759 = vcmp.gt.f32.partialorder %v3736, %v3735
      %v3760 = vsub.f32 1.5707964, %v3758
      %v3761 = vsel %vm3759, %v3760, %v3758
      %vm3762 = vcmp.lt.f32.partialorder %v3602, 0.0
      %v3763 = vsub.f32 3.1415927, %v3761
      %v3764 = vsel %vm3762, %v3763, %v3761
      %vm3765 = vcmp.lt.s32.totalorder %v3602, 0
      %v3766 = vsel %vm3765, 3.1415927, 0.0
      %vm3767 = vcmp.eq.f32.partialorder %v3684, 0.0
      %v3768 = vsel %vm3767, %v3766, %v3764
      %vm3769 = vcmp.ne.f32.partialorder %v3602, %v3602
      %vm3770 = vcmp.ne.f32.partialorder %v3684, %v3684
      %vm3771 = vmor %vm3769, %vm3770
      %v3772 = vsel %vm3771, nan, %v3768
      %vm3773 = vcmp.lt.f32.partialorder %v3602, 0.0
      %v3774 = vsel %vm3773, 2.3561945, 0.7853982
      %vm3775 = vcmp.eq.s32.totalorder %v3735, inf
      %vm3776 = vcmp.eq.s32.totalorder %v3736, inf
      %vm3777 = vmand %vm3775, %vm3776
      %v3778 = vsel %vm3777, %v3774, %v3772
      %v3779 = vand.u32 2147483647, %v3778
      %v3780 = vand.u32 %v3684, 2147483648
      %v3781 = vor.u32 %v3779, %v3780
      %3782 = vst [vmem:[%s440] sm:$0xff] %v3734
      %3783 = vst [vmem:[%s440 + $0x8] sm:$0xff] %v3781
      %p3784 = scmp.lt.s32.totalorder %s24, 1
      %s3785 = scalar_select %p3784, %s24, 1
      %s3786 = smul.addr %s3785, 2
      %s3787 = smul.addr %s3786, 8
      %s3788 = scalar_lea.vmem %s13, %s3787
      // Predicated region
      $region73: #{ccnn2_forward.1} parent=71 // pred_check
        %p3789 = pneg %p320
      $region74: #{ccnn2_forward.1} parent=71 // pred_check_branch
        %3791 = sbr.rel (%p3789) target = $region76
      $region75: #{ccnn2_forward.1} parent=71 // pred_region
        _
      $region76: #{ccnn2_forward.1} parent=71 // pred_fallthru
        _
    $region72: #{ccnn2_forward.1} parent=5 // pred_fallthru
      _
    %p3792 = scmp.le.s32.totalorder 2, %s19
    // Predicated region
    $region77: #{ccnn2_forward.1} parent=5 // pred_check
      %p3793 = pneg %p3792
    $region78: #{ccnn2_forward.1} parent=5 // pred_check_branch
      %3795 = sbr.rel (%p3793) target = $region80
    $region79: #{ccnn2_forward.1} parent=5 // pred_region
      %s3796 = ssub.s32 %s19, 2
      // Predicated region
      $region81: #{ccnn2_forward.1} parent=79 // pred_check
        %p3797 = pneg %p326
      $region82: #{ccnn2_forward.1} parent=79 // pred_check_branch
        %3799 = sbr.rel (%p3797) target = $region84
      $region83: #{ccnn2_forward.1} parent=79 // pred_region
        %p3800 = scmp.lt.s32.totalorder %s25, 1
        %s3801 = scalar_select %p3800, %s25, 1
        %s3802 = smul.addr %s3801, 2
        %s3803 = smul.addr %s3802, 8
        %s3804 = scalar_lea.vmem %s13, %s3803
      $region84: #{ccnn2_forward.1} parent=79 // pred_fallthru
        _
    $region80: #{ccnn2_forward.1} parent=5 // pred_fallthru
      _
  $region6: #{ccnn2_forward.1} parent=0 // loop_footer
    %s23 = sadd.s32 1, %s19
  $region7: #{ccnn2_forward.1} parent=0 // loop_footer_branch
    %18 = sbr.rel target = $region3
  $region8: #{ccnn2_forward.1} parent=0 // loop_exit
    _

</llo_original>
